<compile_context>
chip_gen: v7x
topology: tpu7x:2x2x1
jax: 0.10.0
libtpu: 0.0.40
codegen_flags: <defaults>
</compile_context>

<pallas_src>
import functools

import numpy as np
import jax
import jax.numpy as jnp
from jax.experimental import pallas as pl
from jax.experimental.pallas import tpu as pltpu

DEPTH = 2
_GUARD = 128  # aligned lane offset for the conv scratch buffer (>= max tap shift W+1)

_PARALLEL = pltpu.CompilerParams(dimension_semantics=("parallel",))


# ---------------------------------------------------------------------------
# Host-side (trace-time) constant builders.
# ---------------------------------------------------------------------------
def _cubic_weights(t, A=-0.75):
    # PyTorch bicubic coefficients, A = -0.75
    def c1(x):      # |x| in [0, 1]
        return ((A + 2.0) * x - (A + 3.0)) * x * x + 1.0

    def c2(x):      # |x| in [1, 2]
        return ((A * x - 5.0 * A) * x + 8.0 * A) * x - 4.0 * A

    return np.array([c2(t + 1.0), c1(t), c1(1.0 - t), c2(2.0 - t)], dtype=np.float64)


@functools.lru_cache(maxsize=None)
def _bicubic_matrix(in_size: int, out_size: int):
    """M with out = M @ in (1-D bicubic, align_corners=True, clamped borders)."""
    M = np.zeros((out_size, in_size), dtype=np.float64)
    for i in range(out_size):
        x = 0.0 if out_size == 1 else i * (in_size - 1) / (out_size - 1)
        x0 = int(np.floor(x))
        w = _cubic_weights(x - x0)
        for k in range(4):
            idx = min(max(x0 - 1 + k, 0), in_size - 1)
            M[i, idx] += w[k]
    return M


@functools.lru_cache(maxsize=None)
def _resize_mat_T(hin, win, hout, wout):
    """(hin*win, hout*wout) matrix T such that out_flat = x_flat @ T (separable bicubic)."""
    m = np.kron(_bicubic_matrix(hin, hout), _bicubic_matrix(win, wout))
    return np.ascontiguousarray(m.T).astype(np.float32)


@functools.lru_cache(maxsize=None)
def _tap_masks(h, w):
    """(9, 1, h*w) validity masks for the 3x3 taps on a zero-padded image."""
    masks = np.zeros((9, 1, h * w), np.float32)
    k = 0
    for dh in (-1, 0, 1):
        for dw in (-1, 0, 1):
            vh = (np.arange(h) + dh >= 0) & (np.arange(h) + dh < h)
            vw = (np.arange(w) + dw >= 0) & (np.arange(w) + dw < w)
            masks[k, 0] = (vh[:, None] & vw[None, :]).astype(np.float32).reshape(-1)
            k += 1
    return masks


# ---------------------------------------------------------------------------
# Kernel bodies.
# ---------------------------------------------------------------------------
def _conv_block_body(x, wtap_ref, bias_ref, mask_ref, buf_ref, *, img_w):
    """y = relu(conv3x3(x) + b) + x on a flattened (C, H*W) image via 9 tap matmuls."""
    C, P = x.shape
    buf_ref[...] = jnp.zeros_like(buf_ref)        # zero guard bands
    buf_ref[:, _GUARD:_GUARD + P] = x             # aligned store of the image
    acc = jnp.zeros((C, P), jnp.float32)
    k = 0
    for dh in (-1, 0, 1):
        for dw in (-1, 0, 1):
            s = dh * img_w + dw
            if s == 0:
                xs = x
            else:
                xs = buf_ref[:, _GUARD + s:_GUARD + s + P] * mask_ref[k]
            acc = acc + jnp.dot(wtap_ref[k], xs, preferred_element_type=jnp.float32)
            k += 1
    return jnp.maximum(acc + bias_ref[...], 0.0) + x


def _decompose_kernel(x_ref, dT_ref, uT_ref, res_ref, blur_ref):
    # Fused: blurred = down(x); residual = x - up(blurred)
    x = x_ref[0]                                                       # (C, Pin)
    blur = jnp.dot(x, dT_ref[...], preferred_element_type=jnp.float32)  # (C, Pout)
    res_ref[0] = x - jnp.dot(blur, uT_ref[...], preferred_element_type=jnp.float32)
    blur_ref[0] = blur


def _conv_kernel(x_ref, wtap_ref, bias_ref, mask_ref, o_ref, buf_ref, *, img_w):
    o_ref[0] = _conv_block_body(x_ref[0], wtap_ref, bias_ref, mask_ref, buf_ref,
                                img_w=img_w)


def _recon_kernel(cur_ref, uT_ref, res_ref, wtap_ref, bias_ref, mask_ref, o_ref, buf_ref,
                  *, img_w):
    # Fused: x = up(current) + residual ; out = conv_block(x)
    x = jnp.dot(cur_ref[0], uT_ref[...], preferred_element_type=jnp.float32) + res_ref[0]
    o_ref[0] = _conv_block_body(x, wtap_ref, bias_ref, mask_ref, buf_ref, img_w=img_w)


# ---------------------------------------------------------------------------
# Pallas-call wrappers.
# ---------------------------------------------------------------------------
def pyramid_decompose_level(x_flat, hw_in, hw_out):
    N, C, Pin = x_flat.shape
    Hout, Wout = hw_out
    Pout = Hout * Wout
    dT = jnp.asarray(_resize_mat_T(hw_in[0], hw_in[1], Hout, Wout))   # (Pin, Pout)
    uT = jnp.asarray(_resize_mat_T(Hout, Wout, hw_in[0], hw_in[1]))   # (Pout, Pin)
    return pl.pallas_call(
        _decompose_kernel,
        grid=(N,),
        in_specs=[
            pl.BlockSpec((1, C, Pin), lambda n: (n, 0, 0)),
            pl.BlockSpec((Pin, Pout), lambda n: (0, 0)),
            pl.BlockSpec((Pout, Pin), lambda n: (0, 0)),
        ],
        out_specs=(
            pl.BlockSpec((1, C, Pin), lambda n: (n, 0, 0)),
            pl.BlockSpec((1, C, Pout), lambda n: (n, 0, 0)),
        ),
        out_shape=(
            jax.ShapeDtypeStruct((N, C, Pin), jnp.float32),
            jax.ShapeDtypeStruct((N, C, Pout), jnp.float32),
        ),
        compiler_params=_PARALLEL,
    )(x_flat, dT, uT)


def _conv_constants(w, b, hw):
    C = w.shape[0]
    # wtap[k, o, c] = w[o, c, kh, kw] with k = kh*3 + kw  (matches kernel tap order)
    wtap = jnp.transpose(w.astype(jnp.float32), (2, 3, 0, 1)).reshape(9, C, C)
    bias = b.astype(jnp.float32).reshape(C, 1)
    masks = jnp.asarray(_tap_masks(hw[0], hw[1]))
    return wtap, bias, masks


def conv_block(x_flat, w, b, hw):
    N, C, P = x_flat.shape
    _, W = hw
    wtap, bias, masks = _conv_constants(w, b, hw)
    kernel = functools.partial(_conv_kernel, img_w=W)
    return pl.pallas_call(
        kernel,
        grid=(N,),
        in_specs=[
            pl.BlockSpec((1, C, P), lambda n: (n, 0, 0)),
            pl.BlockSpec((9, C, C), lambda n: (0, 0, 0)),
            pl.BlockSpec((C, 1), lambda n: (0, 0)),
            pl.BlockSpec((9, 1, P), lambda n: (0, 0, 0)),
        ],
        out_specs=pl.BlockSpec((1, C, P), lambda n: (n, 0, 0)),
        out_shape=jax.ShapeDtypeStruct((N, C, P), jnp.float32),
        scratch_shapes=[pltpu.VMEM((C, P + 2 * _GUARD), jnp.float32)],
        compiler_params=_PARALLEL,
    )(x_flat, wtap, bias, masks)


def recon_block(cur_flat, res_flat, w, b, hw_small, hw_big):
    N, C, Ps = cur_flat.shape
    P = res_flat.shape[2]
    _, W = hw_big
    uT = jnp.asarray(_resize_mat_T(hw_small[0], hw_small[1], hw_big[0], hw_big[1]))
    wtap, bias, masks = _conv_constants(w, b, hw_big)
    kernel = functools.partial(_recon_kernel, img_w=W)
    return pl.pallas_call(
        kernel,
        grid=(N,),
        in_specs=[
            pl.BlockSpec((1, C, Ps), lambda n: (n, 0, 0)),
            pl.BlockSpec((Ps, P), lambda n: (0, 0)),
            pl.BlockSpec((1, C, P), lambda n: (n, 0, 0)),
            pl.BlockSpec((9, C, C), lambda n: (0, 0, 0)),
            pl.BlockSpec((C, 1), lambda n: (0, 0)),
            pl.BlockSpec((9, 1, P), lambda n: (0, 0, 0)),
        ],
        out_specs=pl.BlockSpec((1, C, P), lambda n: (n, 0, 0)),
        out_shape=jax.ShapeDtypeStruct((N, C, P), jnp.float32),
        scratch_shapes=[pltpu.VMEM((C, P + 2 * _GUARD), jnp.float32)],
        compiler_params=_PARALLEL,
    )(cur_flat, uT, res_flat, wtap, bias, masks)


# ---------------------------------------------------------------------------
# Full model forward (mirrors Model.forward of the PyTorch reference).
# ---------------------------------------------------------------------------
@functools.partial(jax.jit, static_argnames=("depth",))
def model_forward(x, params, depth=DEPTH):
    N, C, H, W = x.shape
    cur = x.astype(jnp.float32).reshape(N, C, H * W)

    # Laplacian pyramid decomposition (down + up + subtract fused per level).
    sizes = [(H, W)]
    residuals = []
    h, w = H, W
    for _ in range(depth):
        hd, wd = h // 2, w // 2                        # floor(size * 0.5)
        res, cur = pyramid_decompose_level(cur, (h, w), (hd, wd))
        residuals.append(res)
        sizes.append((hd, wd))
        h, w = hd, wd

    # Low-frequency branch on the coarsest level.
    cur = conv_block(cur, params["low_w"], params["low_b"], (h, w))

    # Reconstruction: fused upsample + residual add + high-frequency block per level.
    for i in reversed(range(depth)):
        cur = recon_block(cur, residuals[i], params["high_w"][i], params["high_b"][i],
                          sizes[i + 1], sizes[i])
    return cur.reshape(N, C, H, W)


def init_params(key, channels, depth=DEPTH):
    keys = jax.random.split(key, 2 * (depth + 1))
    params = {
        "low_w": 0.1 * jax.random.normal(keys[0], (channels, channels, 3, 3), jnp.float32),
        "low_b": 0.05 * jax.random.normal(keys[1], (channels,), jnp.float32),
        "high_w": [],
        "high_b": [],
    }
    for i in range(depth):
        params["high_w"].append(
            0.1 * jax.random.normal(keys[2 + 2 * i], (channels, channels, 3, 3), jnp.float32))
        params["high_b"].append(
            0.05 * jax.random.normal(keys[3 + 2 * i], (channels,), jnp.float32))
    return params


if __name__ == "__main__":
    key = jax.random.PRNGKey(0)
    k_x, k_p = jax.random.split(key)

    N, C, H, W = 2, 3, 16, 16          # small NCHW input, divisible by 2**DEPTH
    x = jax.random.normal(k_x, (N, C, H, W), jnp.float32)
    params = init_params(k_p, C, DEPTH)

    out = model_forward(x, params, depth=DEPTH)
    out = jax.block_until_ready(out)
    assert out.shape == (N, C, H, W), out.shape
    assert bool(jnp.all(jnp.isfinite(out)))
    print("KERNEL_OK")
</pallas_src>

<mosaic_0001>
module attributes {stable_mosaic.version = 11 : i64} {
  func.func @_recon_kernel(%arg0: i32, %arg1: memref<1x3x16xf32, #tpu.memory_space<vmem>>, %arg2: memref<16x64xf32, #tpu.memory_space<vmem>>, %arg3: memref<1x3x64xf32, #tpu.memory_space<vmem>>, %arg4: memref<9x3x3xf32, #tpu.memory_space<vmem>>, %arg5: memref<3x1xf32, #tpu.memory_space<vmem>>, %arg6: memref<9x1x64xf32, #tpu.memory_space<vmem>>, %arg7: memref<1x3x64xf32, #tpu.memory_space<vmem>>, %arg8: memref<3x320xf32, #tpu.memory_space<vmem>>) attributes {dimension_semantics = [#tpu.dimension_semantics<parallel>], iteration_bounds = array<i64: 2>, scalar_prefetch = 0 : i64, scratch_operands = 1 : i64, tpu.core_type = #tpu.core_type<tc>, window_params = [{transform_indices = @transform_0, window_bounds = array<i64: 1, 3, 16>}, {pipeline_mode = #tpu.pipeline_mode<synchronous>, transform_indices = @transform_1, window_bounds = array<i64: 16, 64>}, {transform_indices = @transform_2, window_bounds = array<i64: 1, 3, 64>}, {pipeline_mode = #tpu.pipeline_mode<synchronous>, transform_indices = @transform_3, window_bounds = array<i64: 9, 3, 3>}, {pipeline_mode = #tpu.pipeline_mode<synchronous>, transform_indices = @transform_4, window_bounds = array<i64: 3, 1>}, {pipeline_mode = #tpu.pipeline_mode<synchronous>, transform_indices = @transform_5, window_bounds = array<i64: 9, 1, 64>}, {transform_indices = @transform_6, window_bounds = array<i64: 1, 3, 64>}]} {
    %c0 = arith.constant 0 : index
    %c0_0 = arith.constant 0 : index
    %c0_1 = arith.constant 0 : index
    %0 = vector.load %arg1[%c0, %c0_0, %c0_1] : memref<1x3x16xf32, #tpu.memory_space<vmem>>, vector<1x3x16xf32>
    %1 = vector.shape_cast %0 : vector<1x3x16xf32> to vector<3x16xf32>
    %c0_2 = arith.constant 0 : index
    %c0_3 = arith.constant 0 : index
    %2 = vector.load %arg2[%c0_2, %c0_3] : memref<16x64xf32, #tpu.memory_space<vmem>>, vector<16x64xf32>
    %cst = arith.constant dense<0.000000e+00> : vector<3x64xf32>
    %3 = tpu.matmul %1, %2, %cst {dimension_numbers = #tpu.dot_dimension_numbers<[1], [0], [0], [1], [0, 0, 1, 1], [], []>} : vector<3x16xf32>, vector<16x64xf32>, vector<3x64xf32> -> vector<3x64xf32>
    %c0_4 = arith.constant 0 : index
    %c0_5 = arith.constant 0 : index
    %c0_6 = arith.constant 0 : index
    %4 = vector.load %arg3[%c0_4, %c0_5, %c0_6] : memref<1x3x64xf32, #tpu.memory_space<vmem>>, vector<1x3x64xf32>
    %5 = vector.shape_cast %4 : vector<1x3x64xf32> to vector<3x64xf32>
    %6 = arith.addf %3, %5 : vector<3x64xf32>
    %cst_7 = arith.constant 0.000000e+00 : f32
    %7 = vector.broadcast %cst_7 : f32 to vector<3x320xf32>
    %c0_8 = arith.constant 0 : index
    %c0_9 = arith.constant 0 : index
    %8 = vector.load %arg8[%c0_8, %c0_9] : memref<3x320xf32, #tpu.memory_space<vmem>>, vector<3x320xf32>
    tpu.vector_store %arg8[%c0_8, %c0_9], %7 {strides = array<i32>} : memref<3x320xf32, #tpu.memory_space<vmem>>, vector<3x320xf32>,
    %c0_10 = arith.constant 0 : index
    %c128 = arith.constant 128 : index
    %9 = vector.load %arg8[%c0_10, %c128] : memref<3x320xf32, #tpu.memory_space<vmem>>, vector<3x64xf32>
    tpu.vector_store %arg8[%c0_10, %c128], %6 {strides = array<i32>} : memref<3x320xf32, #tpu.memory_space<vmem>>, vector<3x64xf32>,
    %cst_11 = arith.constant 0.000000e+00 : f32
    %10 = vector.broadcast %cst_11 : f32 to vector<3x64xf32>
    %c0_12 = arith.constant 0 : index
    %c119 = arith.constant 119 : index
    %11 = vector.load %arg8[%c0_12, %c119] : memref<3x320xf32, #tpu.memory_space<vmem>>, vector<3x64xf32>
    %c0_13 = arith.constant 0 : index
    %c0_14 = arith.constant 0 : index
    %c0_15 = arith.constant 0 : index
    %12 = vector.load %arg6[%c0_13, %c0_14, %c0_15] : memref<9x1x64xf32, #tpu.memory_space<vmem>>, vector<1x1x64xf32>
    %13 = vector.shape_cast %12 : vector<1x1x64xf32> to vector<1x64xf32>
    %14 = vector.broadcast %13 : vector<1x64xf32> to vector<3x64xf32>
    %15 = arith.mulf %11, %14 : vector<3x64xf32>
    %c0_16 = arith.constant 0 : index
    %c0_17 = arith.constant 0 : index
    %c0_18 = arith.constant 0 : index
    %16 = vector.load %arg4[%c0_16, %c0_17, %c0_18] : memref<9x3x3xf32, #tpu.memory_space<vmem>>, vector<1x3x3xf32>
    %17 = vector.shape_cast %16 : vector<1x3x3xf32> to vector<3x3xf32>
    %cst_19 = arith.constant dense<0.000000e+00> : vector<3x64xf32>
    %18 = tpu.matmul %17, %15, %cst_19 {dimension_numbers = #tpu.dot_dimension_numbers<[1], [0], [0], [1], [0, 0, 1, 1], [], []>} : vector<3x3xf32>, vector<3x64xf32>, vector<3x64xf32> -> vector<3x64xf32>
    %19 = arith.addf %10, %18 : vector<3x64xf32>
    %c0_20 = arith.constant 0 : index
    %c120 = arith.constant 120 : index
    %20 = vector.load %arg8[%c0_20, %c120] : memref<3x320xf32, #tpu.memory_space<vmem>>, vector<3x64xf32>
    %c1 = arith.constant 1 : index
    %c0_21 = arith.constant 0 : index
    %c0_22 = arith.constant 0 : index
    %21 = vector.load %arg6[%c1, %c0_21, %c0_22] : memref<9x1x64xf32, #tpu.memory_space<vmem>>, vector<1x1x64xf32>
    %22 = vector.shape_cast %21 : vector<1x1x64xf32> to vector<1x64xf32>
    %23 = vector.broadcast %22 : vector<1x64xf32> to vector<3x64xf32>
    %24 = arith.mulf %20, %23 : vector<3x64xf32>
    %c1_23 = arith.constant 1 : index
    %c0_24 = arith.constant 0 : index
    %c0_25 = arith.constant 0 : index
    %25 = vector.load %arg4[%c1_23, %c0_24, %c0_25] : memref<9x3x3xf32, #tpu.memory_space<vmem>>, vector<1x3x3xf32>
    %26 = vector.shape_cast %25 : vector<1x3x3xf32> to vector<3x3xf32>
    %cst_26 = arith.constant dense<0.000000e+00> : vector<3x64xf32>
    %27 = tpu.matmul %26, %24, %cst_26 {dimension_numbers = #tpu.dot_dimension_numbers<[1], [0], [0], [1], [0, 0, 1, 1], [], []>} : vector<3x3xf32>, vector<3x64xf32>, vector<3x64xf32> -> vector<3x64xf32>
    %28 = arith.addf %19, %27 : vector<3x64xf32>
    %c0_27 = arith.constant 0 : index
    %c121 = arith.constant 121 : index
    %29 = vector.load %arg8[%c0_27, %c121] : memref<3x320xf32, #tpu.memory_space<vmem>>, vector<3x64xf32>
    %c2 = arith.constant 2 : index
    %c0_28 = arith.constant 0 : index
    %c0_29 = arith.constant 0 : index
    %30 = vector.load %arg6[%c2, %c0_28, %c0_29] : memref<9x1x64xf32, #tpu.memory_space<vmem>>, vector<1x1x64xf32>
    %31 = vector.shape_cast %30 : vector<1x1x64xf32> to vector<1x64xf32>
    %32 = vector.broadcast %31 : vector<1x64xf32> to vector<3x64xf32>
    %33 = arith.mulf %29, %32 : vector<3x64xf32>
    %c2_30 = arith.constant 2 : index
    %c0_31 = arith.constant 0 : index
    %c0_32 = arith.constant 0 : index
    %34 = vector.load %arg4[%c2_30, %c0_31, %c0_32] : memref<9x3x3xf32, #tpu.memory_space<vmem>>, vector<1x3x3xf32>
    %35 = vector.shape_cast %34 : vector<1x3x3xf32> to vector<3x3xf32>
    %cst_33 = arith.constant dense<0.000000e+00> : vector<3x64xf32>
    %36 = tpu.matmul %35, %33, %cst_33 {dimension_numbers = #tpu.dot_dimension_numbers<[1], [0], [0], [1], [0, 0, 1, 1], [], []>} : vector<3x3xf32>, vector<3x64xf32>, vector<3x64xf32> -> vector<3x64xf32>
    %37 = arith.addf %28, %36 : vector<3x64xf32>
    %c0_34 = arith.constant 0 : index
    %c127 = arith.constant 127 : index
    %38 = vector.load %arg8[%c0_34, %c127] : memref<3x320xf32, #tpu.memory_space<vmem>>, vector<3x64xf32>
    %c3 = arith.constant 3 : index
    %c0_35 = arith.constant 0 : index
    %c0_36 = arith.constant 0 : index
    %39 = vector.load %arg6[%c3, %c0_35, %c0_36] : memref<9x1x64xf32, #tpu.memory_space<vmem>>, vector<1x1x64xf32>
    %40 = vector.shape_cast %39 : vector<1x1x64xf32> to vector<1x64xf32>
    %41 = vector.broadcast %40 : vector<1x64xf32> to vector<3x64xf32>
    %42 = arith.mulf %38, %41 : vector<3x64xf32>
    %c3_37 = arith.constant 3 : index
    %c0_38 = arith.constant 0 : index
    %c0_39 = arith.constant 0 : index
    %43 = vector.load %arg4[%c3_37, %c0_38, %c0_39] : memref<9x3x3xf32, #tpu.memory_space<vmem>>, vector<1x3x3xf32>
    %44 = vector.shape_cast %43 : vector<1x3x3xf32> to vector<3x3xf32>
    %cst_40 = arith.constant dense<0.000000e+00> : vector<3x64xf32>
    %45 = tpu.matmul %44, %42, %cst_40 {dimension_numbers = #tpu.dot_dimension_numbers<[1], [0], [0], [1], [0, 0, 1, 1], [], []>} : vector<3x3xf32>, vector<3x64xf32>, vector<3x64xf32> -> vector<3x64xf32>
    %46 = arith.addf %37, %45 : vector<3x64xf32>
    %c4 = arith.constant 4 : index
    %c0_41 = arith.constant 0 : index
    %c0_42 = arith.constant 0 : index
    %47 = vector.load %arg4[%c4, %c0_41, %c0_42] : memref<9x3x3xf32, #tpu.memory_space<vmem>>, vector<1x3x3xf32>
    %48 = vector.shape_cast %47 : vector<1x3x3xf32> to vector<3x3xf32>
    %cst_43 = arith.constant dense<0.000000e+00> : vector<3x64xf32>
    %49 = tpu.matmul %48, %6, %cst_43 {dimension_numbers = #tpu.dot_dimension_numbers<[1], [0], [0], [1], [0, 0, 1, 1], [], []>} : vector<3x3xf32>, vector<3x64xf32>, vector<3x64xf32> -> vector<3x64xf32>
    %50 = arith.addf %46, %49 : vector<3x64xf32>
    %c0_44 = arith.constant 0 : index
    %c129 = arith.constant 129 : index
    %51 = vector.load %arg8[%c0_44, %c129] : memref<3x320xf32, #tpu.memory_space<vmem>>, vector<3x64xf32>
    %c5 = arith.constant 5 : index
    %c0_45 = arith.constant 0 : index
    %c0_46 = arith.constant 0 : index
    %52 = vector.load %arg6[%c5, %c0_45, %c0_46] : memref<9x1x64xf32, #tpu.memory_space<vmem>>, vector<1x1x64xf32>
    %53 = vector.shape_cast %52 : vector<1x1x64xf32> to vector<1x64xf32>
    %54 = vector.broadcast %53 : vector<1x64xf32> to vector<3x64xf32>
    %55 = arith.mulf %51, %54 : vector<3x64xf32>
    %c5_47 = arith.constant 5 : index
    %c0_48 = arith.constant 0 : index
    %c0_49 = arith.constant 0 : index
    %56 = vector.load %arg4[%c5_47, %c0_48, %c0_49] : memref<9x3x3xf32, #tpu.memory_space<vmem>>, vector<1x3x3xf32>
    %57 = vector.shape_cast %56 : vector<1x3x3xf32> to vector<3x3xf32>
    %cst_50 = arith.constant dense<0.000000e+00> : vector<3x64xf32>
    %58 = tpu.matmul %57, %55, %cst_50 {dimension_numbers = #tpu.dot_dimension_numbers<[1], [0], [0], [1], [0, 0, 1, 1], [], []>} : vector<3x3xf32>, vector<3x64xf32>, vector<3x64xf32> -> vector<3x64xf32>
    %59 = arith.addf %50, %58 : vector<3x64xf32>
    %c0_51 = arith.constant 0 : index
    %c135 = arith.constant 135 : index
    %60 = vector.load %arg8[%c0_51, %c135] : memref<3x320xf32, #tpu.memory_space<vmem>>, vector<3x64xf32>
    %c6 = arith.constant 6 : index
    %c0_52 = arith.constant 0 : index
    %c0_53 = arith.constant 0 : index
    %61 = vector.load %arg6[%c6, %c0_52, %c0_53] : memref<9x1x64xf32, #tpu.memory_space<vmem>>, vector<1x1x64xf32>
    %62 = vector.shape_cast %61 : vector<1x1x64xf32> to vector<1x64xf32>
    %63 = vector.broadcast %62 : vector<1x64xf32> to vector<3x64xf32>
    %64 = arith.mulf %60, %63 : vector<3x64xf32>
    %c6_54 = arith.constant 6 : index
    %c0_55 = arith.constant 0 : index
    %c0_56 = arith.constant 0 : index
    %65 = vector.load %arg4[%c6_54, %c0_55, %c0_56] : memref<9x3x3xf32, #tpu.memory_space<vmem>>, vector<1x3x3xf32>
    %66 = vector.shape_cast %65 : vector<1x3x3xf32> to vector<3x3xf32>
    %cst_57 = arith.constant dense<0.000000e+00> : vector<3x64xf32>
    %67 = tpu.matmul %66, %64, %cst_57 {dimension_numbers = #tpu.dot_dimension_numbers<[1], [0], [0], [1], [0, 0, 1, 1], [], []>} : vector<3x3xf32>, vector<3x64xf32>, vector<3x64xf32> -> vector<3x64xf32>
    %68 = arith.addf %59, %67 : vector<3x64xf32>
    %c0_58 = arith.constant 0 : index
    %c136 = arith.constant 136 : index
    %69 = vector.load %arg8[%c0_58, %c136] : memref<3x320xf32, #tpu.memory_space<vmem>>, vector<3x64xf32>
    %c7 = arith.constant 7 : index
    %c0_59 = arith.constant 0 : index
    %c0_60 = arith.constant 0 : index
    %70 = vector.load %arg6[%c7, %c0_59, %c0_60] : memref<9x1x64xf32, #tpu.memory_space<vmem>>, vector<1x1x64xf32>
    %71 = vector.shape_cast %70 : vector<1x1x64xf32> to vector<1x64xf32>
    %72 = vector.broadcast %71 : vector<1x64xf32> to vector<3x64xf32>
    %73 = arith.mulf %69, %72 : vector<3x64xf32>
    %c7_61 = arith.constant 7 : index
    %c0_62 = arith.constant 0 : index
    %c0_63 = arith.constant 0 : index
    %74 = vector.load %arg4[%c7_61, %c0_62, %c0_63] : memref<9x3x3xf32, #tpu.memory_space<vmem>>, vector<1x3x3xf32>
    %75 = vector.shape_cast %74 : vector<1x3x3xf32> to vector<3x3xf32>
    %cst_64 = arith.constant dense<0.000000e+00> : vector<3x64xf32>
    %76 = tpu.matmul %75, %73, %cst_64 {dimension_numbers = #tpu.dot_dimension_numbers<[1], [0], [0], [1], [0, 0, 1, 1], [], []>} : vector<3x3xf32>, vector<3x64xf32>, vector<3x64xf32> -> vector<3x64xf32>
    %77 = arith.addf %68, %76 : vector<3x64xf32>
    %c0_65 = arith.constant 0 : index
    %c137 = arith.constant 137 : index
    %78 = vector.load %arg8[%c0_65, %c137] : memref<3x320xf32, #tpu.memory_space<vmem>>, vector<3x64xf32>
    %c8 = arith.constant 8 : index
    %c0_66 = arith.constant 0 : index
    %c0_67 = arith.constant 0 : index
    %79 = vector.load %arg6[%c8, %c0_66, %c0_67] : memref<9x1x64xf32, #tpu.memory_space<vmem>>, vector<1x1x64xf32>
    %80 = vector.shape_cast %79 : vector<1x1x64xf32> to vector<1x64xf32>
    %81 = vector.broadcast %80 : vector<1x64xf32> to vector<3x64xf32>
    %82 = arith.mulf %78, %81 : vector<3x64xf32>
    %c8_68 = arith.constant 8 : index
    %c0_69 = arith.constant 0 : index
    %c0_70 = arith.constant 0 : index
    %83 = vector.load %arg4[%c8_68, %c0_69, %c0_70] : memref<9x3x3xf32, #tpu.memory_space<vmem>>, vector<1x3x3xf32>
    %84 = vector.shape_cast %83 : vector<1x3x3xf32> to vector<3x3xf32>
    %cst_71 = arith.constant dense<0.000000e+00> : vector<3x64xf32>
    %85 = tpu.matmul %84, %82, %cst_71 {dimension_numbers = #tpu.dot_dimension_numbers<[1], [0], [0], [1], [0, 0, 1, 1], [], []>} : vector<3x3xf32>, vector<3x64xf32>, vector<3x64xf32> -> vector<3x64xf32>
    %86 = arith.addf %77, %85 : vector<3x64xf32>
    %c0_72 = arith.constant 0 : index
    %c0_73 = arith.constant 0 : index
    %87 = vector.load %arg5[%c0_72, %c0_73] : memref<3x1xf32, #tpu.memory_space<vmem>>, vector<3x1xf32>
    %88 = vector.broadcast %87 : vector<3x1xf32> to vector<3x64xf32>
    %89 = arith.addf %86, %88 : vector<3x64xf32>
    %cst_74 = arith.constant 0.000000e+00 : f32
    %90 = vector.broadcast %cst_74 : f32 to vector<3x64xf32>
    %91 = arith.maximumf %89, %90 : vector<3x64xf32>
    %92 = arith.addf %91, %6 : vector<3x64xf32>
    %c0_75 = arith.constant 0 : index
    %c0_76 = arith.constant 0 : index
    %c0_77 = arith.constant 0 : index
    %93 = vector.load %arg7[%c0_75, %c0_76, %c0_77] : memref<1x3x64xf32, #tpu.memory_space<vmem>>, vector<1x3x64xf32>
    %94 = vector.shape_cast %93 : vector<1x3x64xf32> to vector<3x64xf32>
    %95 = vector.shape_cast %92 : vector<3x64xf32> to vector<1x3x64xf32>
    tpu.vector_store %arg7[%c0_75, %c0_76, %c0_77], %95 {strides = array<i32>} : memref<1x3x64xf32, #tpu.memory_space<vmem>>, vector<1x3x64xf32>,
    return
  }
  func.func @transform_0(%arg0: i32) -> (i32, i32, i32) {
    %c0_i32 = arith.constant 0 : i32
    %c0_i32_0 = arith.constant 0 : i32
    %c0_i32_1 = arith.constant 0 : i32
    return %arg0, %c0_i32, %c0_i32_0 : i32, i32, i32
  }
  func.func @transform_1(%arg0: i32) -> (i32, i32) {
    %c0_i32 = arith.constant 0 : i32
    %c0_i32_0 = arith.constant 0 : i32
    %c0_i32_1 = arith.constant 0 : i32
    return %c0_i32, %c0_i32_0 : i32, i32
  }
  func.func @transform_2(%arg0: i32) -> (i32, i32, i32) {
    %c0_i32 = arith.constant 0 : i32
    %c0_i32_0 = arith.constant 0 : i32
    %c0_i32_1 = arith.constant 0 : i32
    return %arg0, %c0_i32, %c0_i32_0 : i32, i32, i32
  }
  func.func @transform_3(%arg0: i32) -> (i32, i32, i32) {
    %c0_i32 = arith.constant 0 : i32
    %c0_i32_0 = arith.constant 0 : i32
    %c0_i32_1 = arith.constant 0 : i32
    %c0_i32_2 = arith.constant 0 : i32
    return %c0_i32, %c0_i32_0, %c0_i32_1 : i32, i32, i32
  }
  func.func @transform_4(%arg0: i32) -> (i32, i32) {
    %c0_i32 = arith.constant 0 : i32
    %c0_i32_0 = arith.constant 0 : i32
    %c0_i32_1 = arith.constant 0 : i32
    return %c0_i32, %c0_i32_0 : i32, i32
  }
  func.func @transform_5(%arg0: i32) -> (i32, i32, i32) {
    %c0_i32 = arith.constant 0 : i32
    %c0_i32_0 = arith.constant 0 : i32
    %c0_i32_1 = arith.constant 0 : i32
    %c0_i32_2 = arith.constant 0 : i32
    return %c0_i32, %c0_i32_0, %c0_i32_1 : i32, i32, i32
  }
  func.func @transform_6(%arg0: i32) -> (i32, i32, i32) {
    %c0_i32 = arith.constant 0 : i32
    %c0_i32_0 = arith.constant 0 : i32
    %c0_i32_1 = arith.constant 0 : i32
    return %arg0, %c0_i32, %c0_i32_0 : i32, i32, i32
  }
}

module attributes {stable_mosaic.version = 11 : i64} {
  func.func @_decompose_kernel(%arg0: i32, %arg1: memref<1x3x256xf32, #tpu.memory_space<vmem>>, %arg2: memref<256x64xf32, #tpu.memory_space<vmem>>, %arg3: memref<64x256xf32, #tpu.memory_space<vmem>>, %arg4: memref<1x3x256xf32, #tpu.memory_space<vmem>>, %arg5: memref<1x3x64xf32, #tpu.memory_space<vmem>>) attributes {dimension_semantics = [#tpu.dimension_semantics<parallel>], iteration_bounds = array<i64: 2>, scalar_prefetch = 0 : i64, scratch_operands = 0 : i64, tpu.core_type = #tpu.core_type<tc>, window_params = [{transform_indices = @transform_0, window_bounds = array<i64: 1, 3, 256>}, {pipeline_mode = #tpu.pipeline_mode<synchronous>, transform_indices = @transform_1, window_bounds = array<i64: 256, 64>}, {pipeline_mode = #tpu.pipeline_mode<synchronous>, transform_indices = @transform_2, window_bounds = array<i64: 64, 256>}, {transform_indices = @transform_3, window_bounds = array<i64: 1, 3, 256>}, {transform_indices = @transform_4, window_bounds = array<i64: 1, 3, 64>}]} {
    %c0 = arith.constant 0 : index
    %c0_0 = arith.constant 0 : index
    %c0_1 = arith.constant 0 : index
    %0 = vector.load %arg1[%c0, %c0_0, %c0_1] : memref<1x3x256xf32, #tpu.memory_space<vmem>>, vector<1x3x256xf32>
    %1 = vector.shape_cast %0 : vector<1x3x256xf32> to vector<3x256xf32>
    %c0_2 = arith.constant 0 : index
    %c0_3 = arith.constant 0 : index
    %2 = vector.load %arg2[%c0_2, %c0_3] : memref<256x64xf32, #tpu.memory_space<vmem>>, vector<256x64xf32>
    %cst = arith.constant dense<0.000000e+00> : vector<3x64xf32>
    %3 = tpu.matmul %1, %2, %cst {dimension_numbers = #tpu.dot_dimension_numbers<[1], [0], [0], [1], [0, 0, 1, 1], [], []>} : vector<3x256xf32>, vector<256x64xf32>, vector<3x64xf32> -> vector<3x64xf32>
    %c0_4 = arith.constant 0 : index
    %c0_5 = arith.constant 0 : index
    %4 = vector.load %arg3[%c0_4, %c0_5] : memref<64x256xf32, #tpu.memory_space<vmem>>, vector<64x256xf32>
    %cst_6 = arith.constant dense<0.000000e+00> : vector<3x256xf32>
    %5 = tpu.matmul %3, %4, %cst_6 {dimension_numbers = #tpu.dot_dimension_numbers<[1], [0], [0], [1], [0, 0, 1, 1], [], []>} : vector<3x64xf32>, vector<64x256xf32>, vector<3x256xf32> -> vector<3x256xf32>
    %6 = arith.subf %1, %5 : vector<3x256xf32>
    %c0_7 = arith.constant 0 : index
    %c0_8 = arith.constant 0 : index
    %c0_9 = arith.constant 0 : index
    %7 = vector.load %arg4[%c0_7, %c0_8, %c0_9] : memref<1x3x256xf32, #tpu.memory_space<vmem>>, vector<1x3x256xf32>
    %8 = vector.shape_cast %7 : vector<1x3x256xf32> to vector<3x256xf32>
    %9 = vector.shape_cast %6 : vector<3x256xf32> to vector<1x3x256xf32>
    tpu.vector_store %arg4[%c0_7, %c0_8, %c0_9], %9 {strides = array<i32>} : memref<1x3x256xf32, #tpu.memory_space<vmem>>, vector<1x3x256xf32>,
    %c0_10 = arith.constant 0 : index
    %c0_11 = arith.constant 0 : index
    %c0_12 = arith.constant 0 : index
    %10 = vector.load %arg5[%c0_10, %c0_11, %c0_12] : memref<1x3x64xf32, #tpu.memory_space<vmem>>, vector<1x3x64xf32>
    %11 = vector.shape_cast %10 : vector<1x3x64xf32> to vector<3x64xf32>
    %12 = vector.shape_cast %3 : vector<3x64xf32> to vector<1x3x64xf32>
    tpu.vector_store %arg5[%c0_10, %c0_11, %c0_12], %12 {strides = array<i32>} : memref<1x3x64xf32, #tpu.memory_space<vmem>>, vector<1x3x64xf32>,
    return
  }
  func.func @transform_0(%arg0: i32) -> (i32, i32, i32) {
    %c0_i32 = arith.constant 0 : i32
    %c0_i32_0 = arith.constant 0 : i32
    %c0_i32_1 = arith.constant 0 : i32
    return %arg0, %c0_i32, %c0_i32_0 : i32, i32, i32
  }
  func.func @transform_1(%arg0: i32) -> (i32, i32) {
    %c0_i32 = arith.constant 0 : i32
    %c0_i32_0 = arith.constant 0 : i32
    %c0_i32_1 = arith.constant 0 : i32
    return %c0_i32, %c0_i32_0 : i32, i32
  }
  func.func @transform_2(%arg0: i32) -> (i32, i32) {
    %c0_i32 = arith.constant 0 : i32
    %c0_i32_0 = arith.constant 0 : i32
    %c0_i32_1 = arith.constant 0 : i32
    return %c0_i32, %c0_i32_0 : i32, i32
  }
  func.func @transform_3(%arg0: i32) -> (i32, i32, i32) {
    %c0_i32 = arith.constant 0 : i32
    %c0_i32_0 = arith.constant 0 : i32
    %c0_i32_1 = arith.constant 0 : i32
    return %arg0, %c0_i32, %c0_i32_0 : i32, i32, i32
  }
  func.func @transform_4(%arg0: i32) -> (i32, i32, i32) {
    %c0_i32 = arith.constant 0 : i32
    %c0_i32_0 = arith.constant 0 : i32
    %c0_i32_1 = arith.constant 0 : i32
    return %arg0, %c0_i32, %c0_i32_0 : i32, i32, i32
  }
}

module attributes {stable_mosaic.version = 11 : i64} {
  func.func @_decompose_kernel(%arg0: i32, %arg1: memref<1x3x64xf32, #tpu.memory_space<vmem>>, %arg2: memref<64x16xf32, #tpu.memory_space<vmem>>, %arg3: memref<16x64xf32, #tpu.memory_space<vmem>>, %arg4: memref<1x3x64xf32, #tpu.memory_space<vmem>>, %arg5: memref<1x3x16xf32, #tpu.memory_space<vmem>>) attributes {dimension_semantics = [#tpu.dimension_semantics<parallel>], iteration_bounds = array<i64: 2>, scalar_prefetch = 0 : i64, scratch_operands = 0 : i64, tpu.core_type = #tpu.core_type<tc>, window_params = [{transform_indices = @transform_0, window_bounds = array<i64: 1, 3, 64>}, {pipeline_mode = #tpu.pipeline_mode<synchronous>, transform_indices = @transform_1, window_bounds = array<i64: 64, 16>}, {pipeline_mode = #tpu.pipeline_mode<synchronous>, transform_indices = @transform_2, window_bounds = array<i64: 16, 64>}, {transform_indices = @transform_3, window_bounds = array<i64: 1, 3, 64>}, {transform_indices = @transform_4, window_bounds = array<i64: 1, 3, 16>}]} {
    %c0 = arith.constant 0 : index
    %c0_0 = arith.constant 0 : index
    %c0_1 = arith.constant 0 : index
    %0 = vector.load %arg1[%c0, %c0_0, %c0_1] : memref<1x3x64xf32, #tpu.memory_space<vmem>>, vector<1x3x64xf32>
    %1 = vector.shape_cast %0 : vector<1x3x64xf32> to vector<3x64xf32>
    %c0_2 = arith.constant 0 : index
    %c0_3 = arith.constant 0 : index
    %2 = vector.load %arg2[%c0_2, %c0_3] : memref<64x16xf32, #tpu.memory_space<vmem>>, vector<64x16xf32>
    %cst = arith.constant dense<0.000000e+00> : vector<3x16xf32>
    %3 = tpu.matmul %1, %2, %cst {dimension_numbers = #tpu.dot_dimension_numbers<[1], [0], [0], [1], [0, 0, 1, 1], [], []>} : vector<3x64xf32>, vector<64x16xf32>, vector<3x16xf32> -> vector<3x16xf32>
    %c0_4 = arith.constant 0 : index
    %c0_5 = arith.constant 0 : index
    %4 = vector.load %arg3[%c0_4, %c0_5] : memref<16x64xf32, #tpu.memory_space<vmem>>, vector<16x64xf32>
    %cst_6 = arith.constant dense<0.000000e+00> : vector<3x64xf32>
    %5 = tpu.matmul %3, %4, %cst_6 {dimension_numbers = #tpu.dot_dimension_numbers<[1], [0], [0], [1], [0, 0, 1, 1], [], []>} : vector<3x16xf32>, vector<16x64xf32>, vector<3x64xf32> -> vector<3x64xf32>
    %6 = arith.subf %1, %5 : vector<3x64xf32>
    %c0_7 = arith.constant 0 : index
    %c0_8 = arith.constant 0 : index
    %c0_9 = arith.constant 0 : index
    %7 = vector.load %arg4[%c0_7, %c0_8, %c0_9] : memref<1x3x64xf32, #tpu.memory_space<vmem>>, vector<1x3x64xf32>
    %8 = vector.shape_cast %7 : vector<1x3x64xf32> to vector<3x64xf32>
    %9 = vector.shape_cast %6 : vector<3x64xf32> to vector<1x3x64xf32>
    tpu.vector_store %arg4[%c0_7, %c0_8, %c0_9], %9 {strides = array<i32>} : memref<1x3x64xf32, #tpu.memory_space<vmem>>, vector<1x3x64xf32>,
    %c0_10 = arith.constant 0 : index
    %c0_11 = arith.constant 0 : index
    %c0_12 = arith.constant 0 : index
    %10 = vector.load %arg5[%c0_10, %c0_11, %c0_12] : memref<1x3x16xf32, #tpu.memory_space<vmem>>, vector<1x3x16xf32>
    %11 = vector.shape_cast %10 : vector<1x3x16xf32> to vector<3x16xf32>
    %12 = vector.shape_cast %3 : vector<3x16xf32> to vector<1x3x16xf32>
    tpu.vector_store %arg5[%c0_10, %c0_11, %c0_12], %12 {strides = array<i32>} : memref<1x3x16xf32, #tpu.memory_space<vmem>>, vector<1x3x16xf32>,
    return
  }
  func.func @transform_0(%arg0: i32) -> (i32, i32, i32) {
    %c0_i32 = arith.constant 0 : i32
    %c0_i32_0 = arith.constant 0 : i32
    %c0_i32_1 = arith.constant 0 : i32
    return %arg0, %c0_i32, %c0_i32_0 : i32, i32, i32
  }
  func.func @transform_1(%arg0: i32) -> (i32, i32) {
    %c0_i32 = arith.constant 0 : i32
    %c0_i32_0 = arith.constant 0 : i32
    %c0_i32_1 = arith.constant 0 : i32
    return %c0_i32, %c0_i32_0 : i32, i32
  }
  func.func @transform_2(%arg0: i32) -> (i32, i32) {
    %c0_i32 = arith.constant 0 : i32
    %c0_i32_0 = arith.constant 0 : i32
    %c0_i32_1 = arith.constant 0 : i32
    return %c0_i32, %c0_i32_0 : i32, i32
  }
  func.func @transform_3(%arg0: i32) -> (i32, i32, i32) {
    %c0_i32 = arith.constant 0 : i32
    %c0_i32_0 = arith.constant 0 : i32
    %c0_i32_1 = arith.constant 0 : i32
    return %arg0, %c0_i32, %c0_i32_0 : i32, i32, i32
  }
  func.func @transform_4(%arg0: i32) -> (i32, i32, i32) {
    %c0_i32 = arith.constant 0 : i32
    %c0_i32_0 = arith.constant 0 : i32
    %c0_i32_1 = arith.constant 0 : i32
    return %arg0, %c0_i32, %c0_i32_0 : i32, i32, i32
  }
}

module attributes {stable_mosaic.version = 11 : i64} {
  func.func @_conv_kernel(%arg0: i32, %arg1: memref<1x3x16xf32, #tpu.memory_space<vmem>>, %arg2: memref<9x3x3xf32, #tpu.memory_space<vmem>>, %arg3: memref<3x1xf32, #tpu.memory_space<vmem>>, %arg4: memref<9x1x16xf32, #tpu.memory_space<vmem>>, %arg5: memref<1x3x16xf32, #tpu.memory_space<vmem>>, %arg6: memref<3x272xf32, #tpu.memory_space<vmem>>) attributes {dimension_semantics = [#tpu.dimension_semantics<parallel>], iteration_bounds = array<i64: 2>, scalar_prefetch = 0 : i64, scratch_operands = 1 : i64, tpu.core_type = #tpu.core_type<tc>, window_params = [{transform_indices = @transform_0, window_bounds = array<i64: 1, 3, 16>}, {pipeline_mode = #tpu.pipeline_mode<synchronous>, transform_indices = @transform_1, window_bounds = array<i64: 9, 3, 3>}, {pipeline_mode = #tpu.pipeline_mode<synchronous>, transform_indices = @transform_2, window_bounds = array<i64: 3, 1>}, {pipeline_mode = #tpu.pipeline_mode<synchronous>, transform_indices = @transform_3, window_bounds = array<i64: 9, 1, 16>}, {transform_indices = @transform_4, window_bounds = array<i64: 1, 3, 16>}]} {
    %c0 = arith.constant 0 : index
    %c0_0 = arith.constant 0 : index
    %c0_1 = arith.constant 0 : index
    %0 = vector.load %arg1[%c0, %c0_0, %c0_1] : memref<1x3x16xf32, #tpu.memory_space<vmem>>, vector<1x3x16xf32>
    %1 = vector.shape_cast %0 : vector<1x3x16xf32> to vector<3x16xf32>
    %cst = arith.constant 0.000000e+00 : f32
    %2 = vector.broadcast %cst : f32 to vector<3x272xf32>
    %c0_2 = arith.constant 0 : index
    %c0_3 = arith.constant 0 : index
    %3 = vector.load %arg6[%c0_2, %c0_3] : memref<3x272xf32, #tpu.memory_space<vmem>>, vector<3x272xf32>
    tpu.vector_store %arg6[%c0_2, %c0_3], %2 {strides = array<i32>} : memref<3x272xf32, #tpu.memory_space<vmem>>, vector<3x272xf32>,
    %c0_4 = arith.constant 0 : index
    %c128 = arith.constant 128 : index
    %4 = vector.load %arg6[%c0_4, %c128] : memref<3x272xf32, #tpu.memory_space<vmem>>, vector<3x16xf32>
    tpu.vector_store %arg6[%c0_4, %c128], %1 {strides = array<i32>} : memref<3x272xf32, #tpu.memory_space<vmem>>, vector<3x16xf32>,
    %cst_5 = arith.constant 0.000000e+00 : f32
    %5 = vector.broadcast %cst_5 : f32 to vector<3x16xf32>
    %c0_6 = arith.constant 0 : index
    %c123 = arith.constant 123 : index
    %6 = vector.load %arg6[%c0_6, %c123] : memref<3x272xf32, #tpu.memory_space<vmem>>, vector<3x16xf32>
    %c0_7 = arith.constant 0 : index
    %c0_8 = arith.constant 0 : index
    %c0_9 = arith.constant 0 : index
    %7 = vector.load %arg4[%c0_7, %c0_8, %c0_9] : memref<9x1x16xf32, #tpu.memory_space<vmem>>, vector<1x1x16xf32>
    %8 = vector.shape_cast %7 : vector<1x1x16xf32> to vector<1x16xf32>
    %9 = vector.broadcast %8 : vector<1x16xf32> to vector<3x16xf32>
    %10 = arith.mulf %6, %9 : vector<3x16xf32>
    %c0_10 = arith.constant 0 : index
    %c0_11 = arith.constant 0 : index
    %c0_12 = arith.constant 0 : index
    %11 = vector.load %arg2[%c0_10, %c0_11, %c0_12] : memref<9x3x3xf32, #tpu.memory_space<vmem>>, vector<1x3x3xf32>
    %12 = vector.shape_cast %11 : vector<1x3x3xf32> to vector<3x3xf32>
    %cst_13 = arith.constant dense<0.000000e+00> : vector<3x16xf32>
    %13 = tpu.matmul %12, %10, %cst_13 {dimension_numbers = #tpu.dot_dimension_numbers<[1], [0], [0], [1], [0, 0, 1, 1], [], []>} : vector<3x3xf32>, vector<3x16xf32>, vector<3x16xf32> -> vector<3x16xf32>
    %14 = arith.addf %5, %13 : vector<3x16xf32>
    %c0_14 = arith.constant 0 : index
    %c124 = arith.constant 124 : index
    %15 = vector.load %arg6[%c0_14, %c124] : memref<3x272xf32, #tpu.memory_space<vmem>>, vector<3x16xf32>
    %c1 = arith.constant 1 : index
    %c0_15 = arith.constant 0 : index
    %c0_16 = arith.constant 0 : index
    %16 = vector.load %arg4[%c1, %c0_15, %c0_16] : memref<9x1x16xf32, #tpu.memory_space<vmem>>, vector<1x1x16xf32>
    %17 = vector.shape_cast %16 : vector<1x1x16xf32> to vector<1x16xf32>
    %18 = vector.broadcast %17 : vector<1x16xf32> to vector<3x16xf32>
    %19 = arith.mulf %15, %18 : vector<3x16xf32>
    %c1_17 = arith.constant 1 : index
    %c0_18 = arith.constant 0 : index
    %c0_19 = arith.constant 0 : index
    %20 = vector.load %arg2[%c1_17, %c0_18, %c0_19] : memref<9x3x3xf32, #tpu.memory_space<vmem>>, vector<1x3x3xf32>
    %21 = vector.shape_cast %20 : vector<1x3x3xf32> to vector<3x3xf32>
    %cst_20 = arith.constant dense<0.000000e+00> : vector<3x16xf32>
    %22 = tpu.matmul %21, %19, %cst_20 {dimension_numbers = #tpu.dot_dimension_numbers<[1], [0], [0], [1], [0, 0, 1, 1], [], []>} : vector<3x3xf32>, vector<3x16xf32>, vector<3x16xf32> -> vector<3x16xf32>
    %23 = arith.addf %14, %22 : vector<3x16xf32>
    %c0_21 = arith.constant 0 : index
    %c125 = arith.constant 125 : index
    %24 = vector.load %arg6[%c0_21, %c125] : memref<3x272xf32, #tpu.memory_space<vmem>>, vector<3x16xf32>
    %c2 = arith.constant 2 : index
    %c0_22 = arith.constant 0 : index
    %c0_23 = arith.constant 0 : index
    %25 = vector.load %arg4[%c2, %c0_22, %c0_23] : memref<9x1x16xf32, #tpu.memory_space<vmem>>, vector<1x1x16xf32>
    %26 = vector.shape_cast %25 : vector<1x1x16xf32> to vector<1x16xf32>
    %27 = vector.broadcast %26 : vector<1x16xf32> to vector<3x16xf32>
    %28 = arith.mulf %24, %27 : vector<3x16xf32>
    %c2_24 = arith.constant 2 : index
    %c0_25 = arith.constant 0 : index
    %c0_26 = arith.constant 0 : index
    %29 = vector.load %arg2[%c2_24, %c0_25, %c0_26] : memref<9x3x3xf32, #tpu.memory_space<vmem>>, vector<1x3x3xf32>
    %30 = vector.shape_cast %29 : vector<1x3x3xf32> to vector<3x3xf32>
    %cst_27 = arith.constant dense<0.000000e+00> : vector<3x16xf32>
    %31 = tpu.matmul %30, %28, %cst_27 {dimension_numbers = #tpu.dot_dimension_numbers<[1], [0], [0], [1], [0, 0, 1, 1], [], []>} : vector<3x3xf32>, vector<3x16xf32>, vector<3x16xf32> -> vector<3x16xf32>
    %32 = arith.addf %23, %31 : vector<3x16xf32>
    %c0_28 = arith.constant 0 : index
    %c127 = arith.constant 127 : index
    %33 = vector.load %arg6[%c0_28, %c127] : memref<3x272xf32, #tpu.memory_space<vmem>>, vector<3x16xf32>
    %c3 = arith.constant 3 : index
    %c0_29 = arith.constant 0 : index
    %c0_30 = arith.constant 0 : index
    %34 = vector.load %arg4[%c3, %c0_29, %c0_30] : memref<9x1x16xf32, #tpu.memory_space<vmem>>, vector<1x1x16xf32>
    %35 = vector.shape_cast %34 : vector<1x1x16xf32> to vector<1x16xf32>
    %36 = vector.broadcast %35 : vector<1x16xf32> to vector<3x16xf32>
    %37 = arith.mulf %33, %36 : vector<3x16xf32>
    %c3_31 = arith.constant 3 : index
    %c0_32 = arith.constant 0 : index
    %c0_33 = arith.constant 0 : index
    %38 = vector.load %arg2[%c3_31, %c0_32, %c0_33] : memref<9x3x3xf32, #tpu.memory_space<vmem>>, vector<1x3x3xf32>
    %39 = vector.shape_cast %38 : vector<1x3x3xf32> to vector<3x3xf32>
    %cst_34 = arith.constant dense<0.000000e+00> : vector<3x16xf32>
    %40 = tpu.matmul %39, %37, %cst_34 {dimension_numbers = #tpu.dot_dimension_numbers<[1], [0], [0], [1], [0, 0, 1, 1], [], []>} : vector<3x3xf32>, vector<3x16xf32>, vector<3x16xf32> -> vector<3x16xf32>
    %41 = arith.addf %32, %40 : vector<3x16xf32>
    %c4 = arith.constant 4 : index
    %c0_35 = arith.constant 0 : index
    %c0_36 = arith.constant 0 : index
    %42 = vector.load %arg2[%c4, %c0_35, %c0_36] : memref<9x3x3xf32, #tpu.memory_space<vmem>>, vector<1x3x3xf32>
    %43 = vector.shape_cast %42 : vector<1x3x3xf32> to vector<3x3xf32>
    %cst_37 = arith.constant dense<0.000000e+00> : vector<3x16xf32>
    %44 = tpu.matmul %43, %1, %cst_37 {dimension_numbers = #tpu.dot_dimension_numbers<[1], [0], [0], [1], [0, 0, 1, 1], [], []>} : vector<3x3xf32>, vector<3x16xf32>, vector<3x16xf32> -> vector<3x16xf32>
    %45 = arith.addf %41, %44 : vector<3x16xf32>
    %c0_38 = arith.constant 0 : index
    %c129 = arith.constant 129 : index
    %46 = vector.load %arg6[%c0_38, %c129] : memref<3x272xf32, #tpu.memory_space<vmem>>, vector<3x16xf32>
    %c5 = arith.constant 5 : index
    %c0_39 = arith.constant 0 : index
    %c0_40 = arith.constant 0 : index
    %47 = vector.load %arg4[%c5, %c0_39, %c0_40] : memref<9x1x16xf32, #tpu.memory_space<vmem>>, vector<1x1x16xf32>
    %48 = vector.shape_cast %47 : vector<1x1x16xf32> to vector<1x16xf32>
    %49 = vector.broadcast %48 : vector<1x16xf32> to vector<3x16xf32>
    %50 = arith.mulf %46, %49 : vector<3x16xf32>
    %c5_41 = arith.constant 5 : index
    %c0_42 = arith.constant 0 : index
    %c0_43 = arith.constant 0 : index
    %51 = vector.load %arg2[%c5_41, %c0_42, %c0_43] : memref<9x3x3xf32, #tpu.memory_space<vmem>>, vector<1x3x3xf32>
    %52 = vector.shape_cast %51 : vector<1x3x3xf32> to vector<3x3xf32>
    %cst_44 = arith.constant dense<0.000000e+00> : vector<3x16xf32>
    %53 = tpu.matmul %52, %50, %cst_44 {dimension_numbers = #tpu.dot_dimension_numbers<[1], [0], [0], [1], [0, 0, 1, 1], [], []>} : vector<3x3xf32>, vector<3x16xf32>, vector<3x16xf32> -> vector<3x16xf32>
    %54 = arith.addf %45, %53 : vector<3x16xf32>
    %c0_45 = arith.constant 0 : index
    %c131 = arith.constant 131 : index
    %55 = vector.load %arg6[%c0_45, %c131] : memref<3x272xf32, #tpu.memory_space<vmem>>, vector<3x16xf32>
    %c6 = arith.constant 6 : index
    %c0_46 = arith.constant 0 : index
    %c0_47 = arith.constant 0 : index
    %56 = vector.load %arg4[%c6, %c0_46, %c0_47] : memref<9x1x16xf32, #tpu.memory_space<vmem>>, vector<1x1x16xf32>
    %57 = vector.shape_cast %56 : vector<1x1x16xf32> to vector<1x16xf32>
    %58 = vector.broadcast %57 : vector<1x16xf32> to vector<3x16xf32>
    %59 = arith.mulf %55, %58 : vector<3x16xf32>
    %c6_48 = arith.constant 6 : index
    %c0_49 = arith.constant 0 : index
    %c0_50 = arith.constant 0 : index
    %60 = vector.load %arg2[%c6_48, %c0_49, %c0_50] : memref<9x3x3xf32, #tpu.memory_space<vmem>>, vector<1x3x3xf32>
    %61 = vector.shape_cast %60 : vector<1x3x3xf32> to vector<3x3xf32>
    %cst_51 = arith.constant dense<0.000000e+00> : vector<3x16xf32>
    %62 = tpu.matmul %61, %59, %cst_51 {dimension_numbers = #tpu.dot_dimension_numbers<[1], [0], [0], [1], [0, 0, 1, 1], [], []>} : vector<3x3xf32>, vector<3x16xf32>, vector<3x16xf32> -> vector<3x16xf32>
    %63 = arith.addf %54, %62 : vector<3x16xf32>
    %c0_52 = arith.constant 0 : index
    %c132 = arith.constant 132 : index
    %64 = vector.load %arg6[%c0_52, %c132] : memref<3x272xf32, #tpu.memory_space<vmem>>, vector<3x16xf32>
    %c7 = arith.constant 7 : index
    %c0_53 = arith.constant 0 : index
    %c0_54 = arith.constant 0 : index
    %65 = vector.load %arg4[%c7, %c0_53, %c0_54] : memref<9x1x16xf32, #tpu.memory_space<vmem>>, vector<1x1x16xf32>
    %66 = vector.shape_cast %65 : vector<1x1x16xf32> to vector<1x16xf32>
    %67 = vector.broadcast %66 : vector<1x16xf32> to vector<3x16xf32>
    %68 = arith.mulf %64, %67 : vector<3x16xf32>
    %c7_55 = arith.constant 7 : index
    %c0_56 = arith.constant 0 : index
    %c0_57 = arith.constant 0 : index
    %69 = vector.load %arg2[%c7_55, %c0_56, %c0_57] : memref<9x3x3xf32, #tpu.memory_space<vmem>>, vector<1x3x3xf32>
    %70 = vector.shape_cast %69 : vector<1x3x3xf32> to vector<3x3xf32>
    %cst_58 = arith.constant dense<0.000000e+00> : vector<3x16xf32>
    %71 = tpu.matmul %70, %68, %cst_58 {dimension_numbers = #tpu.dot_dimension_numbers<[1], [0], [0], [1], [0, 0, 1, 1], [], []>} : vector<3x3xf32>, vector<3x16xf32>, vector<3x16xf32> -> vector<3x16xf32>
    %72 = arith.addf %63, %71 : vector<3x16xf32>
    %c0_59 = arith.constant 0 : index
    %c133 = arith.constant 133 : index
    %73 = vector.load %arg6[%c0_59, %c133] : memref<3x272xf32, #tpu.memory_space<vmem>>, vector<3x16xf32>
    %c8 = arith.constant 8 : index
    %c0_60 = arith.constant 0 : index
    %c0_61 = arith.constant 0 : index
    %74 = vector.load %arg4[%c8, %c0_60, %c0_61] : memref<9x1x16xf32, #tpu.memory_space<vmem>>, vector<1x1x16xf32>
    %75 = vector.shape_cast %74 : vector<1x1x16xf32> to vector<1x16xf32>
    %76 = vector.broadcast %75 : vector<1x16xf32> to vector<3x16xf32>
    %77 = arith.mulf %73, %76 : vector<3x16xf32>
    %c8_62 = arith.constant 8 : index
    %c0_63 = arith.constant 0 : index
    %c0_64 = arith.constant 0 : index
    %78 = vector.load %arg2[%c8_62, %c0_63, %c0_64] : memref<9x3x3xf32, #tpu.memory_space<vmem>>, vector<1x3x3xf32>
    %79 = vector.shape_cast %78 : vector<1x3x3xf32> to vector<3x3xf32>
    %cst_65 = arith.constant dense<0.000000e+00> : vector<3x16xf32>
    %80 = tpu.matmul %79, %77, %cst_65 {dimension_numbers = #tpu.dot_dimension_numbers<[1], [0], [0], [1], [0, 0, 1, 1], [], []>} : vector<3x3xf32>, vector<3x16xf32>, vector<3x16xf32> -> vector<3x16xf32>
    %81 = arith.addf %72, %80 : vector<3x16xf32>
    %c0_66 = arith.constant 0 : index
    %c0_67 = arith.constant 0 : index
    %82 = vector.load %arg3[%c0_66, %c0_67] : memref<3x1xf32, #tpu.memory_space<vmem>>, vector<3x1xf32>
    %83 = vector.broadcast %82 : vector<3x1xf32> to vector<3x16xf32>
    %84 = arith.addf %81, %83 : vector<3x16xf32>
    %cst_68 = arith.constant 0.000000e+00 : f32
    %85 = vector.broadcast %cst_68 : f32 to vector<3x16xf32>
    %86 = arith.maximumf %84, %85 : vector<3x16xf32>
    %87 = arith.addf %86, %1 : vector<3x16xf32>
    %c0_69 = arith.constant 0 : index
    %c0_70 = arith.constant 0 : index
    %c0_71 = arith.constant 0 : index
    %88 = vector.load %arg5[%c0_69, %c0_70, %c0_71] : memref<1x3x16xf32, #tpu.memory_space<vmem>>, vector<1x3x16xf32>
    %89 = vector.shape_cast %88 : vector<1x3x16xf32> to vector<3x16xf32>
    %90 = vector.shape_cast %87 : vector<3x16xf32> to vector<1x3x16xf32>
    tpu.vector_store %arg5[%c0_69, %c0_70, %c0_71], %90 {strides = array<i32>} : memref<1x3x16xf32, #tpu.memory_space<vmem>>, vector<1x3x16xf32>,
    return
  }
  func.func @transform_0(%arg0: i32) -> (i32, i32, i32) {
    %c0_i32 = arith.constant 0 : i32
    %c0_i32_0 = arith.constant 0 : i32
    %c0_i32_1 = arith.constant 0 : i32
    return %arg0, %c0_i32, %c0_i32_0 : i32, i32, i32
  }
  func.func @transform_1(%arg0: i32) -> (i32, i32, i32) {
    %c0_i32 = arith.constant 0 : i32
    %c0_i32_0 = arith.constant 0 : i32
    %c0_i32_1 = arith.constant 0 : i32
    %c0_i32_2 = arith.constant 0 : i32
    return %c0_i32, %c0_i32_0, %c0_i32_1 : i32, i32, i32
  }
  func.func @transform_2(%arg0: i32) -> (i32, i32) {
    %c0_i32 = arith.constant 0 : i32
    %c0_i32_0 = arith.constant 0 : i32
    %c0_i32_1 = arith.constant 0 : i32
    return %c0_i32, %c0_i32_0 : i32, i32
  }
  func.func @transform_3(%arg0: i32) -> (i32, i32, i32) {
    %c0_i32 = arith.constant 0 : i32
    %c0_i32_0 = arith.constant 0 : i32
    %c0_i32_1 = arith.constant 0 : i32
    %c0_i32_2 = arith.constant 0 : i32
    return %c0_i32, %c0_i32_0, %c0_i32_1 : i32, i32, i32
  }
  func.func @transform_4(%arg0: i32) -> (i32, i32, i32) {
    %c0_i32 = arith.constant 0 : i32
    %c0_i32_0 = arith.constant 0 : i32
    %c0_i32_1 = arith.constant 0 : i32
    return %arg0, %c0_i32, %c0_i32_0 : i32, i32, i32
  }
}

module attributes {stable_mosaic.version = 11 : i64} {
  func.func @_recon_kernel(%arg0: i32, %arg1: memref<1x3x64xf32, #tpu.memory_space<vmem>>, %arg2: memref<64x256xf32, #tpu.memory_space<vmem>>, %arg3: memref<1x3x256xf32, #tpu.memory_space<vmem>>, %arg4: memref<9x3x3xf32, #tpu.memory_space<vmem>>, %arg5: memref<3x1xf32, #tpu.memory_space<vmem>>, %arg6: memref<9x1x256xf32, #tpu.memory_space<vmem>>, %arg7: memref<1x3x256xf32, #tpu.memory_space<vmem>>, %arg8: memref<3x512xf32, #tpu.memory_space<vmem>>) attributes {dimension_semantics = [#tpu.dimension_semantics<parallel>], iteration_bounds = array<i64: 2>, scalar_prefetch = 0 : i64, scratch_operands = 1 : i64, tpu.core_type = #tpu.core_type<tc>, window_params = [{transform_indices = @transform_0, window_bounds = array<i64: 1, 3, 64>}, {pipeline_mode = #tpu.pipeline_mode<synchronous>, transform_indices = @transform_1, window_bounds = array<i64: 64, 256>}, {transform_indices = @transform_2, window_bounds = array<i64: 1, 3, 256>}, {pipeline_mode = #tpu.pipeline_mode<synchronous>, transform_indices = @transform_3, window_bounds = array<i64: 9, 3, 3>}, {pipeline_mode = #tpu.pipeline_mode<synchronous>, transform_indices = @transform_4, window_bounds = array<i64: 3, 1>}, {pipeline_mode = #tpu.pipeline_mode<synchronous>, transform_indices = @transform_5, window_bounds = array<i64: 9, 1, 256>}, {transform_indices = @transform_6, window_bounds = array<i64: 1, 3, 256>}]} {
    %c0 = arith.constant 0 : index
    %c0_0 = arith.constant 0 : index
    %c0_1 = arith.constant 0 : index
    %0 = vector.load %arg1[%c0, %c0_0, %c0_1] : memref<1x3x64xf32, #tpu.memory_space<vmem>>, vector<1x3x64xf32>
    %1 = vector.shape_cast %0 : vector<1x3x64xf32> to vector<3x64xf32>
    %c0_2 = arith.constant 0 : index
    %c0_3 = arith.constant 0 : index
    %2 = vector.load %arg2[%c0_2, %c0_3] : memref<64x256xf32, #tpu.memory_space<vmem>>, vector<64x256xf32>
    %cst = arith.constant dense<0.000000e+00> : vector<3x256xf32>
    %3 = tpu.matmul %1, %2, %cst {dimension_numbers = #tpu.dot_dimension_numbers<[1], [0], [0], [1], [0, 0, 1, 1], [], []>} : vector<3x64xf32>, vector<64x256xf32>, vector<3x256xf32> -> vector<3x256xf32>
    %c0_4 = arith.constant 0 : index
    %c0_5 = arith.constant 0 : index
    %c0_6 = arith.constant 0 : index
    %4 = vector.load %arg3[%c0_4, %c0_5, %c0_6] : memref<1x3x256xf32, #tpu.memory_space<vmem>>, vector<1x3x256xf32>
    %5 = vector.shape_cast %4 : vector<1x3x256xf32> to vector<3x256xf32>
    %6 = arith.addf %3, %5 : vector<3x256xf32>
    %cst_7 = arith.constant 0.000000e+00 : f32
    %7 = vector.broadcast %cst_7 : f32 to vector<3x512xf32>
    %c0_8 = arith.constant 0 : index
    %c0_9 = arith.constant 0 : index
    %8 = vector.load %arg8[%c0_8, %c0_9] : memref<3x512xf32, #tpu.memory_space<vmem>>, vector<3x512xf32>
    tpu.vector_store %arg8[%c0_8, %c0_9], %7 {strides = array<i32>} : memref<3x512xf32, #tpu.memory_space<vmem>>, vector<3x512xf32>,
    %c0_10 = arith.constant 0 : index
    %c128 = arith.constant 128 : index
    %9 = vector.load %arg8[%c0_10, %c128] : memref<3x512xf32, #tpu.memory_space<vmem>>, vector<3x256xf32>
    tpu.vector_store %arg8[%c0_10, %c128], %6 {strides = array<i32>} : memref<3x512xf32, #tpu.memory_space<vmem>>, vector<3x256xf32>,
    %cst_11 = arith.constant 0.000000e+00 : f32
    %10 = vector.broadcast %cst_11 : f32 to vector<3x256xf32>
    %c0_12 = arith.constant 0 : index
    %c111 = arith.constant 111 : index
    %11 = vector.load %arg8[%c0_12, %c111] : memref<3x512xf32, #tpu.memory_space<vmem>>, vector<3x256xf32>
    %c0_13 = arith.constant 0 : index
    %c0_14 = arith.constant 0 : index
    %c0_15 = arith.constant 0 : index
    %12 = vector.load %arg6[%c0_13, %c0_14, %c0_15] : memref<9x1x256xf32, #tpu.memory_space<vmem>>, vector<1x1x256xf32>
    %13 = vector.shape_cast %12 : vector<1x1x256xf32> to vector<1x256xf32>
    %14 = vector.broadcast %13 : vector<1x256xf32> to vector<3x256xf32>
    %15 = arith.mulf %11, %14 : vector<3x256xf32>
    %c0_16 = arith.constant 0 : index
    %c0_17 = arith.constant 0 : index
    %c0_18 = arith.constant 0 : index
    %16 = vector.load %arg4[%c0_16, %c0_17, %c0_18] : memref<9x3x3xf32, #tpu.memory_space<vmem>>, vector<1x3x3xf32>
    %17 = vector.shape_cast %16 : vector<1x3x3xf32> to vector<3x3xf32>
    %cst_19 = arith.constant dense<0.000000e+00> : vector<3x256xf32>
    %18 = tpu.matmul %17, %15, %cst_19 {dimension_numbers = #tpu.dot_dimension_numbers<[1], [0], [0], [1], [0, 0, 1, 1], [], []>} : vector<3x3xf32>, vector<3x256xf32>, vector<3x256xf32> -> vector<3x256xf32>
    %19 = arith.addf %10, %18 : vector<3x256xf32>
    %c0_20 = arith.constant 0 : index
    %c112 = arith.constant 112 : index
    %20 = vector.load %arg8[%c0_20, %c112] : memref<3x512xf32, #tpu.memory_space<vmem>>, vector<3x256xf32>
    %c1 = arith.constant 1 : index
    %c0_21 = arith.constant 0 : index
    %c0_22 = arith.constant 0 : index
    %21 = vector.load %arg6[%c1, %c0_21, %c0_22] : memref<9x1x256xf32, #tpu.memory_space<vmem>>, vector<1x1x256xf32>
    %22 = vector.shape_cast %21 : vector<1x1x256xf32> to vector<1x256xf32>
    %23 = vector.broadcast %22 : vector<1x256xf32> to vector<3x256xf32>
    %24 = arith.mulf %20, %23 : vector<3x256xf32>
    %c1_23 = arith.constant 1 : index
    %c0_24 = arith.constant 0 : index
    %c0_25 = arith.constant 0 : index
    %25 = vector.load %arg4[%c1_23, %c0_24, %c0_25] : memref<9x3x3xf32, #tpu.memory_space<vmem>>, vector<1x3x3xf32>
    %26 = vector.shape_cast %25 : vector<1x3x3xf32> to vector<3x3xf32>
    %cst_26 = arith.constant dense<0.000000e+00> : vector<3x256xf32>
    %27 = tpu.matmul %26, %24, %cst_26 {dimension_numbers = #tpu.dot_dimension_numbers<[1], [0], [0], [1], [0, 0, 1, 1], [], []>} : vector<3x3xf32>, vector<3x256xf32>, vector<3x256xf32> -> vector<3x256xf32>
    %28 = arith.addf %19, %27 : vector<3x256xf32>
    %c0_27 = arith.constant 0 : index
    %c113 = arith.constant 113 : index
    %29 = vector.load %arg8[%c0_27, %c113] : memref<3x512xf32, #tpu.memory_space<vmem>>, vector<3x256xf32>
    %c2 = arith.constant 2 : index
    %c0_28 = arith.constant 0 : index
    %c0_29 = arith.constant 0 : index
    %30 = vector.load %arg6[%c2, %c0_28, %c0_29] : memref<9x1x256xf32, #tpu.memory_space<vmem>>, vector<1x1x256xf32>
    %31 = vector.shape_cast %30 : vector<1x1x256xf32> to vector<1x256xf32>
    %32 = vector.broadcast %31 : vector<1x256xf32> to vector<3x256xf32>
    %33 = arith.mulf %29, %32 : vector<3x256xf32>
    %c2_30 = arith.constant 2 : index
    %c0_31 = arith.constant 0 : index
    %c0_32 = arith.constant 0 : index
    %34 = vector.load %arg4[%c2_30, %c0_31, %c0_32] : memref<9x3x3xf32, #tpu.memory_space<vmem>>, vector<1x3x3xf32>
    %35 = vector.shape_cast %34 : vector<1x3x3xf32> to vector<3x3xf32>
    %cst_33 = arith.constant dense<0.000000e+00> : vector<3x256xf32>
    %36 = tpu.matmul %35, %33, %cst_33 {dimension_numbers = #tpu.dot_dimension_numbers<[1], [0], [0], [1], [0, 0, 1, 1], [], []>} : vector<3x3xf32>, vector<3x256xf32>, vector<3x256xf32> -> vector<3x256xf32>
    %37 = arith.addf %28, %36 : vector<3x256xf32>
    %c0_34 = arith.constant 0 : index
    %c127 = arith.constant 127 : index
    %38 = vector.load %arg8[%c0_34, %c127] : memref<3x512xf32, #tpu.memory_space<vmem>>, vector<3x256xf32>
    %c3 = arith.constant 3 : index
    %c0_35 = arith.constant 0 : index
    %c0_36 = arith.constant 0 : index
    %39 = vector.load %arg6[%c3, %c0_35, %c0_36] : memref<9x1x256xf32, #tpu.memory_space<vmem>>, vector<1x1x256xf32>
    %40 = vector.shape_cast %39 : vector<1x1x256xf32> to vector<1x256xf32>
    %41 = vector.broadcast %40 : vector<1x256xf32> to vector<3x256xf32>
    %42 = arith.mulf %38, %41 : vector<3x256xf32>
    %c3_37 = arith.constant 3 : index
    %c0_38 = arith.constant 0 : index
    %c0_39 = arith.constant 0 : index
    %43 = vector.load %arg4[%c3_37, %c0_38, %c0_39] : memref<9x3x3xf32, #tpu.memory_space<vmem>>, vector<1x3x3xf32>
    %44 = vector.shape_cast %43 : vector<1x3x3xf32> to vector<3x3xf32>
    %cst_40 = arith.constant dense<0.000000e+00> : vector<3x256xf32>
    %45 = tpu.matmul %44, %42, %cst_40 {dimension_numbers = #tpu.dot_dimension_numbers<[1], [0], [0], [1], [0, 0, 1, 1], [], []>} : vector<3x3xf32>, vector<3x256xf32>, vector<3x256xf32> -> vector<3x256xf32>
    %46 = arith.addf %37, %45 : vector<3x256xf32>
    %c4 = arith.constant 4 : index
    %c0_41 = arith.constant 0 : index
    %c0_42 = arith.constant 0 : index
    %47 = vector.load %arg4[%c4, %c0_41, %c0_42] : memref<9x3x3xf32, #tpu.memory_space<vmem>>, vector<1x3x3xf32>
    %48 = vector.shape_cast %47 : vector<1x3x3xf32> to vector<3x3xf32>
    %cst_43 = arith.constant dense<0.000000e+00> : vector<3x256xf32>
    %49 = tpu.matmul %48, %6, %cst_43 {dimension_numbers = #tpu.dot_dimension_numbers<[1], [0], [0], [1], [0, 0, 1, 1], [], []>} : vector<3x3xf32>, vector<3x256xf32>, vector<3x256xf32> -> vector<3x256xf32>
    %50 = arith.addf %46, %49 : vector<3x256xf32>
    %c0_44 = arith.constant 0 : index
    %c129 = arith.constant 129 : index
    %51 = vector.load %arg8[%c0_44, %c129] : memref<3x512xf32, #tpu.memory_space<vmem>>, vector<3x256xf32>
    %c5 = arith.constant 5 : index
    %c0_45 = arith.constant 0 : index
    %c0_46 = arith.constant 0 : index
    %52 = vector.load %arg6[%c5, %c0_45, %c0_46] : memref<9x1x256xf32, #tpu.memory_space<vmem>>, vector<1x1x256xf32>
    %53 = vector.shape_cast %52 : vector<1x1x256xf32> to vector<1x256xf32>
    %54 = vector.broadcast %53 : vector<1x256xf32> to vector<3x256xf32>
    %55 = arith.mulf %51, %54 : vector<3x256xf32>
    %c5_47 = arith.constant 5 : index
    %c0_48 = arith.constant 0 : index
    %c0_49 = arith.constant 0 : index
    %56 = vector.load %arg4[%c5_47, %c0_48, %c0_49] : memref<9x3x3xf32, #tpu.memory_space<vmem>>, vector<1x3x3xf32>
    %57 = vector.shape_cast %56 : vector<1x3x3xf32> to vector<3x3xf32>
    %cst_50 = arith.constant dense<0.000000e+00> : vector<3x256xf32>
    %58 = tpu.matmul %57, %55, %cst_50 {dimension_numbers = #tpu.dot_dimension_numbers<[1], [0], [0], [1], [0, 0, 1, 1], [], []>} : vector<3x3xf32>, vector<3x256xf32>, vector<3x256xf32> -> vector<3x256xf32>
    %59 = arith.addf %50, %58 : vector<3x256xf32>
    %c0_51 = arith.constant 0 : index
    %c143 = arith.constant 143 : index
    %60 = vector.load %arg8[%c0_51, %c143] : memref<3x512xf32, #tpu.memory_space<vmem>>, vector<3x256xf32>
    %c6 = arith.constant 6 : index
    %c0_52 = arith.constant 0 : index
    %c0_53 = arith.constant 0 : index
    %61 = vector.load %arg6[%c6, %c0_52, %c0_53] : memref<9x1x256xf32, #tpu.memory_space<vmem>>, vector<1x1x256xf32>
    %62 = vector.shape_cast %61 : vector<1x1x256xf32> to vector<1x256xf32>
    %63 = vector.broadcast %62 : vector<1x256xf32> to vector<3x256xf32>
    %64 = arith.mulf %60, %63 : vector<3x256xf32>
    %c6_54 = arith.constant 6 : index
    %c0_55 = arith.constant 0 : index
    %c0_56 = arith.constant 0 : index
    %65 = vector.load %arg4[%c6_54, %c0_55, %c0_56] : memref<9x3x3xf32, #tpu.memory_space<vmem>>, vector<1x3x3xf32>
    %66 = vector.shape_cast %65 : vector<1x3x3xf32> to vector<3x3xf32>
    %cst_57 = arith.constant dense<0.000000e+00> : vector<3x256xf32>
    %67 = tpu.matmul %66, %64, %cst_57 {dimension_numbers = #tpu.dot_dimension_numbers<[1], [0], [0], [1], [0, 0, 1, 1], [], []>} : vector<3x3xf32>, vector<3x256xf32>, vector<3x256xf32> -> vector<3x256xf32>
    %68 = arith.addf %59, %67 : vector<3x256xf32>
    %c0_58 = arith.constant 0 : index
    %c144 = arith.constant 144 : index
    %69 = vector.load %arg8[%c0_58, %c144] : memref<3x512xf32, #tpu.memory_space<vmem>>, vector<3x256xf32>
    %c7 = arith.constant 7 : index
    %c0_59 = arith.constant 0 : index
    %c0_60 = arith.constant 0 : index
    %70 = vector.load %arg6[%c7, %c0_59, %c0_60] : memref<9x1x256xf32, #tpu.memory_space<vmem>>, vector<1x1x256xf32>
    %71 = vector.shape_cast %70 : vector<1x1x256xf32> to vector<1x256xf32>
    %72 = vector.broadcast %71 : vector<1x256xf32> to vector<3x256xf32>
    %73 = arith.mulf %69, %72 : vector<3x256xf32>
    %c7_61 = arith.constant 7 : index
    %c0_62 = arith.constant 0 : index
    %c0_63 = arith.constant 0 : index
    %74 = vector.load %arg4[%c7_61, %c0_62, %c0_63] : memref<9x3x3xf32, #tpu.memory_space<vmem>>, vector<1x3x3xf32>
    %75 = vector.shape_cast %74 : vector<1x3x3xf32> to vector<3x3xf32>
    %cst_64 = arith.constant dense<0.000000e+00> : vector<3x256xf32>
    %76 = tpu.matmul %75, %73, %cst_64 {dimension_numbers = #tpu.dot_dimension_numbers<[1], [0], [0], [1], [0, 0, 1, 1], [], []>} : vector<3x3xf32>, vector<3x256xf32>, vector<3x256xf32> -> vector<3x256xf32>
    %77 = arith.addf %68, %76 : vector<3x256xf32>
    %c0_65 = arith.constant 0 : index
    %c145 = arith.constant 145 : index
    %78 = vector.load %arg8[%c0_65, %c145] : memref<3x512xf32, #tpu.memory_space<vmem>>, vector<3x256xf32>
    %c8 = arith.constant 8 : index
    %c0_66 = arith.constant 0 : index
    %c0_67 = arith.constant 0 : index
    %79 = vector.load %arg6[%c8, %c0_66, %c0_67] : memref<9x1x256xf32, #tpu.memory_space<vmem>>, vector<1x1x256xf32>
    %80 = vector.shape_cast %79 : vector<1x1x256xf32> to vector<1x256xf32>
    %81 = vector.broadcast %80 : vector<1x256xf32> to vector<3x256xf32>
    %82 = arith.mulf %78, %81 : vector<3x256xf32>
    %c8_68 = arith.constant 8 : index
    %c0_69 = arith.constant 0 : index
    %c0_70 = arith.constant 0 : index
    %83 = vector.load %arg4[%c8_68, %c0_69, %c0_70] : memref<9x3x3xf32, #tpu.memory_space<vmem>>, vector<1x3x3xf32>
    %84 = vector.shape_cast %83 : vector<1x3x3xf32> to vector<3x3xf32>
    %cst_71 = arith.constant dense<0.000000e+00> : vector<3x256xf32>
    %85 = tpu.matmul %84, %82, %cst_71 {dimension_numbers = #tpu.dot_dimension_numbers<[1], [0], [0], [1], [0, 0, 1, 1], [], []>} : vector<3x3xf32>, vector<3x256xf32>, vector<3x256xf32> -> vector<3x256xf32>
    %86 = arith.addf %77, %85 : vector<3x256xf32>
    %c0_72 = arith.constant 0 : index
    %c0_73 = arith.constant 0 : index
    %87 = vector.load %arg5[%c0_72, %c0_73] : memref<3x1xf32, #tpu.memory_space<vmem>>, vector<3x1xf32>
    %88 = vector.broadcast %87 : vector<3x1xf32> to vector<3x256xf32>
    %89 = arith.addf %86, %88 : vector<3x256xf32>
    %cst_74 = arith.constant 0.000000e+00 : f32
    %90 = vector.broadcast %cst_74 : f32 to vector<3x256xf32>
    %91 = arith.maximumf %89, %90 : vector<3x256xf32>
    %92 = arith.addf %91, %6 : vector<3x256xf32>
    %c0_75 = arith.constant 0 : index
    %c0_76 = arith.constant 0 : index
    %c0_77 = arith.constant 0 : index
    %93 = vector.load %arg7[%c0_75, %c0_76, %c0_77] : memref<1x3x256xf32, #tpu.memory_space<vmem>>, vector<1x3x256xf32>
    %94 = vector.shape_cast %93 : vector<1x3x256xf32> to vector<3x256xf32>
    %95 = vector.shape_cast %92 : vector<3x256xf32> to vector<1x3x256xf32>
    tpu.vector_store %arg7[%c0_75, %c0_76, %c0_77], %95 {strides = array<i32>} : memref<1x3x256xf32, #tpu.memory_space<vmem>>, vector<1x3x256xf32>,
    return
  }
  func.func @transform_0(%arg0: i32) -> (i32, i32, i32) {
    %c0_i32 = arith.constant 0 : i32
    %c0_i32_0 = arith.constant 0 : i32
    %c0_i32_1 = arith.constant 0 : i32
    return %arg0, %c0_i32, %c0_i32_0 : i32, i32, i32
  }
  func.func @transform_1(%arg0: i32) -> (i32, i32) {
    %c0_i32 = arith.constant 0 : i32
    %c0_i32_0 = arith.constant 0 : i32
    %c0_i32_1 = arith.constant 0 : i32
    return %c0_i32, %c0_i32_0 : i32, i32
  }
  func.func @transform_2(%arg0: i32) -> (i32, i32, i32) {
    %c0_i32 = arith.constant 0 : i32
    %c0_i32_0 = arith.constant 0 : i32
    %c0_i32_1 = arith.constant 0 : i32
    return %arg0, %c0_i32, %c0_i32_0 : i32, i32, i32
  }
  func.func @transform_3(%arg0: i32) -> (i32, i32, i32) {
    %c0_i32 = arith.constant 0 : i32
    %c0_i32_0 = arith.constant 0 : i32
    %c0_i32_1 = arith.constant 0 : i32
    %c0_i32_2 = arith.constant 0 : i32
    return %c0_i32, %c0_i32_0, %c0_i32_1 : i32, i32, i32
  }
  func.func @transform_4(%arg0: i32) -> (i32, i32) {
    %c0_i32 = arith.constant 0 : i32
    %c0_i32_0 = arith.constant 0 : i32
    %c0_i32_1 = arith.constant 0 : i32
    return %c0_i32, %c0_i32_0 : i32, i32
  }
  func.func @transform_5(%arg0: i32) -> (i32, i32, i32) {
    %c0_i32 = arith.constant 0 : i32
    %c0_i32_0 = arith.constant 0 : i32
    %c0_i32_1 = arith.constant 0 : i32
    %c0_i32_2 = arith.constant 0 : i32
    return %c0_i32, %c0_i32_0, %c0_i32_1 : i32, i32, i32
  }
  func.func @transform_6(%arg0: i32) -> (i32, i32, i32) {
    %c0_i32 = arith.constant 0 : i32
    %c0_i32_0 = arith.constant 0 : i32
    %c0_i32_1 = arith.constant 0 : i32
    return %arg0, %c0_i32, %c0_i32_0 : i32, i32, i32
  }
}

</mosaic_0001>

<llo_original>
// kernel: model_forward.6
$region0: #{model_forward.6}
  #allocation0 [shape = 'u32[]', space=smem, size = 0x4, offset = 0x4, fixed_abs, tag = 'smem constant byte address 0x4 - core index']
  #allocation1 [shape = 'u32[144,128]{1,0:T(1,128)}', space=vmem, size = 0x12000, scoped, tag = 'internal scratch']
  %s0 = inlined_call_operand.vmem [shape: f32[2,3,64], index: 0, kind: input, shape index: {}]
  %s1 = inlined_call_operand.vmem [shape: f32[64,16], index: 1, kind: input, shape index: {}]
  %s2 = inlined_call_operand.vmem [shape: f32[16,64], index: 2, kind: input, shape index: {}]
  %s3 = inlined_call_operand.vmem [shape: f32[2,3,64], index: 3, kind: output, shape index: {0}]
  %s4 = inlined_call_operand.vmem [shape: f32[2,3,16], index: 4, kind: output, shape index: {1}]
  %5 = xla_tuple %s3, %s4
  %s6 = sld [smem:[#allocation0]]
  $region53: #{model_forward.6} parent=0
    _
  %s8 = ssub.s32 1, %s6
  %s9 = scalar_select 0, %s8, %s6
  loop: start=0, step=1, limit=4
  $region2: #{model_forward.6} parent=0 // loop_pre_header
    _
  $region3: #{model_forward.6} parent=0 // loop_header
    %s11 = sphi 0, %s15
    %p12 = scmp.ge.s32.totalorder %s11, 4
    %s21 = sphi 0, %s23
    %s24 = sphi 0, %s21
    %s25 = sphi 0, %s24
    %s41 = sphi 0, %s25
    %s45 = sphi 0, %s45
    %s47 = sphi 0, %s45
    %s48 = sphi 0, %s47
    %s62 = sphi 0, %s48
    %s66 = sphi 0, %s66
    %s68 = sphi 0, %s66
    %s69 = sphi 0, %s68
    %s83 = sphi 0, %s69
    %s89 = sphi 0, %s91
    %s92 = sphi 0, %s89
    %s93 = sphi 0, %s92
    %s109 = sphi 0, %s93
    %s115 = sphi 0, %s117
    %s118 = sphi 0, %s115
    %s119 = sphi 0, %s118
    %s135 = sphi 0, %s119
  $region4: #{model_forward.6} parent=0 // loop_header_branch
    %14 = sbr.rel (%p12) target = $region8
  $region5: #{model_forward.6} parent=0 // loop_body
    %s16 = ssub.s32 %s11, 1
    %s17 = ssub.s32 %s11, 2
    %s18 = sadd.s32 %s11, 1
    %s19 = ssub.s32 %s11, %s18
    %p20 = scmp.eq.s32.totalorder %s19, 0
    %s22 = sadd.s32 %s21, 1
    %s23 = scalar_select %p20, %s21, %s22
    %p26 = pneg %p20
    %p27 = scmp.eq.s32.totalorder %s11, 1
    %p28 = por %p26, %p27
    %p29 = scmp.ne.s32.totalorder %s21, %s24
    %p30 = scmp.eq.s32.totalorder %s11, 0
    %p31 = por %p29, %p30
    %p32 = scmp.ne.s32.totalorder %s21, %s24
    %p33 = scmp.eq.s32.totalorder %s16, 1
    %p34 = por %p32, %p33
    %p35 = scmp.ne.s32.totalorder %s24, %s25
    %p36 = scmp.eq.s32.totalorder %s16, 0
    %p37 = por %p35, %p36
    %p38 = scmp.ne.s32.totalorder %s24, %s25
    %p39 = scmp.eq.s32.totalorder %s17, 1
    %p40 = por %p38, %p39
    %p42 = scmp.ne.s32.totalorder %s25, %s41
    %p43 = scmp.eq.s32.totalorder %s17, 0
    %p44 = por %p42, %p43
    %s46 = sadd.s32 %s45, 1
    %p49 = scmp.eq.s32.totalorder %s11, 1
    %p50 = scmp.ne.s32.totalorder %s45, %s47
    %p51 = scmp.eq.s32.totalorder %s11, 0
    %p52 = por %p50, %p51
    %p53 = scmp.ne.s32.totalorder %s45, %s47
    %p54 = scmp.eq.s32.totalorder %s16, 1
    %p55 = por %p53, %p54
    %p56 = scmp.ne.s32.totalorder %s47, %s48
    %p57 = scmp.eq.s32.totalorder %s16, 0
    %p58 = por %p56, %p57
    %p59 = scmp.ne.s32.totalorder %s47, %s48
    %p60 = scmp.eq.s32.totalorder %s17, 1
    %p61 = por %p59, %p60
    %p63 = scmp.ne.s32.totalorder %s48, %s62
    %p64 = scmp.eq.s32.totalorder %s17, 0
    %p65 = por %p63, %p64
    %s67 = sadd.s32 %s66, 1
    %p70 = scmp.eq.s32.totalorder %s11, 1
    %p71 = scmp.ne.s32.totalorder %s66, %s68
    %p72 = scmp.eq.s32.totalorder %s11, 0
    %p73 = por %p71, %p72
    %p74 = scmp.ne.s32.totalorder %s66, %s68
    %p75 = scmp.eq.s32.totalorder %s16, 1
    %p76 = por %p74, %p75
    %p77 = scmp.ne.s32.totalorder %s68, %s69
    %p78 = scmp.eq.s32.totalorder %s16, 0
    %p79 = por %p77, %p78
    %p80 = scmp.ne.s32.totalorder %s68, %s69
    %p81 = scmp.eq.s32.totalorder %s17, 1
    %p82 = por %p80, %p81
    %p84 = scmp.ne.s32.totalorder %s69, %s83
    %p85 = scmp.eq.s32.totalorder %s17, 0
    %p86 = por %p84, %p85
    %s87 = ssub.s32 %s11, %s18
    %p88 = scmp.eq.s32.totalorder %s87, 0
    %s90 = sadd.s32 %s89, 1
    %s91 = scalar_select %p88, %s89, %s90
    %p94 = pneg %p88
    %p95 = scmp.eq.s32.totalorder %s11, 1
    %p96 = por %p94, %p95
    %p97 = scmp.ne.s32.totalorder %s89, %s92
    %p98 = scmp.eq.s32.totalorder %s11, 0
    %p99 = por %p97, %p98
    %p100 = scmp.ne.s32.totalorder %s89, %s92
    %p101 = scmp.eq.s32.totalorder %s16, 1
    %p102 = por %p100, %p101
    %p103 = scmp.ne.s32.totalorder %s92, %s93
    %p104 = scmp.eq.s32.totalorder %s16, 0
    %p105 = por %p103, %p104
    %p106 = scmp.ne.s32.totalorder %s92, %s93
    %p107 = scmp.eq.s32.totalorder %s17, 1
    %p108 = por %p106, %p107
    %p110 = scmp.ne.s32.totalorder %s93, %s109
    %p111 = scmp.eq.s32.totalorder %s17, 0
    %p112 = por %p110, %p111
    %s113 = ssub.s32 %s11, %s18
    %p114 = scmp.eq.s32.totalorder %s113, 0
    %s116 = sadd.s32 %s115, 1
    %s117 = scalar_select %p114, %s115, %s116
    %p120 = pneg %p114
    %p121 = scmp.eq.s32.totalorder %s11, 1
    %p122 = por %p120, %p121
    %p123 = scmp.ne.s32.totalorder %s115, %s118
    %p124 = scmp.eq.s32.totalorder %s11, 0
    %p125 = por %p123, %p124
    %p126 = scmp.ne.s32.totalorder %s115, %s118
    %p127 = scmp.eq.s32.totalorder %s16, 1
    %p128 = por %p126, %p127
    %p129 = scmp.ne.s32.totalorder %s118, %s119
    %p130 = scmp.eq.s32.totalorder %s16, 0
    %p131 = por %p129, %p130
    %p132 = scmp.ne.s32.totalorder %s118, %s119
    %p133 = scmp.eq.s32.totalorder %s17, 1
    %p134 = por %p132, %p133
    %p136 = scmp.ne.s32.totalorder %s119, %s135
    %p137 = scmp.eq.s32.totalorder %s17, 0
    %p138 = por %p136, %p137
    %p139 = scmp.le.s32.totalorder 1, %s11
    %p140 = scmp.lt.s32.totalorder %s11, 3
    %p141 = pnand %p139, %p140
    %p142 = pneg %p141
    // Predicated region
    $region9: #{model_forward.6} parent=5 // pred_check
      _
    $region10: #{model_forward.6} parent=5 // pred_check_branch
      %144 = sbr.rel (%p141) target = $region12
    $region11: #{model_forward.6} parent=5 // pred_region
      %s145 = ssub.s32 %s11, 1
      // Predicated region
      $region13: #{model_forward.6} parent=11 // pred_check
        %p146 = pneg %p58
      $region14: #{model_forward.6} parent=11 // pred_check_branch
        %148 = sbr.rel (%p146) target = $region16
      $region15: #{model_forward.6} parent=11 // pred_region
        _
      $region16: #{model_forward.6} parent=11 // pred_fallthru
        _
      // Predicated region
      $region17: #{model_forward.6} parent=11 // pred_check
        %p149 = pneg %p79
      $region18: #{model_forward.6} parent=11 // pred_check_branch
        %151 = sbr.rel (%p149) target = $region20
      $region19: #{model_forward.6} parent=11 // pred_region
        _
      $region20: #{model_forward.6} parent=11 // pred_fallthru
        _
    $region12: #{model_forward.6} parent=5 // pred_fallthru
      _
    %p152 = scmp.lt.s32.totalorder %s11, 2
    // Predicated region
    $region21: #{model_forward.6} parent=5 // pred_check
      %p153 = pneg %p152
    $region22: #{model_forward.6} parent=5 // pred_check_branch
      %155 = sbr.rel (%p153) target = $region24
    $region23: #{model_forward.6} parent=5 // pred_region
      // Predicated region
      $region25: #{model_forward.6} parent=23 // pred_check
        %p156 = pneg %p31
      $region26: #{model_forward.6} parent=23 // pred_check_branch
        %158 = sbr.rel (%p156) target = $region28
      $region27: #{model_forward.6} parent=23 // pred_region
        %p159 = scmp.lt.s32.totalorder %s11, 1
        %s160 = scalar_select %p159, %s11, 1
        %s161 = smul.addr %s160, 4
        %s162 = scalar_lea.vmem %s0, %s161
      $region28: #{model_forward.6} parent=23 // pred_fallthru
        _
    $region24: #{model_forward.6} parent=5 // pred_fallthru
      _
    %p163 = scmp.le.s32.totalorder 1, %s11
    %p164 = scmp.lt.s32.totalorder %s11, 3
    %p165 = pnand %p163, %p164
    %p166 = pneg %p165
    // Predicated region
    $region29: #{model_forward.6} parent=5 // pred_check
      _
    $region30: #{model_forward.6} parent=5 // pred_check_branch
      %168 = sbr.rel (%p165) target = $region32
    $region31: #{model_forward.6} parent=5 // pred_region
      %s169 = ssub.s32 %s11, 1
      %p170 = scmp.lt.s32.totalorder %s16, 1
      %s171 = scalar_select %p170, %s16, 1
      %s172 = smul.addr %s171, 4
      %s173 = scalar_lea.vmem %s0, %s172
      %p174 = pneg %p37
      %p175 = pneg %p34
      %p176 = pneg %p58
      %p177 = pneg %p55
      %p178 = pneg %p79
      %p179 = pneg %p76
      %p180 = pneg %p105
      %p181 = pneg %p102
      %p182 = scmp.lt.s32.totalorder %s16, 1
      %s183 = scalar_select %p182, %s16, 1
      %s184 = smul.addr %s183, 4
      %s185 = scalar_lea.vmem %s3, %s184
      %p186 = pneg %p131
      %p187 = pneg %p128
      %p188 = scmp.lt.s32.totalorder %s16, 1
      %s189 = scalar_select %p188, %s16, 1
      %s190 = smul.addr %s189, 4
      %s191 = scalar_lea.vmem %s4, %s190
      %p192 = scmp.lt.s32.totalorder %s16, 1
      %s193 = scalar_select %p192, %s16, 1
      %s194 = smul.addr %s193, 4
      %s195 = scalar_lea.vmem %s0, %s194
      %p196 = scmp.lt.s32.totalorder %s16, 1
      %s197 = scalar_select %p196, %s16, 1
      %s198 = smul.addr %s197, 4
      %s199 = scalar_lea.vmem %s3, %s198
      %p200 = scmp.lt.s32.totalorder %s16, 1
      %s201 = scalar_select %p200, %s16, 1
      %s202 = smul.addr %s201, 4
      %s203 = scalar_lea.vmem %s4, %s202
      %v204 = vld [vmem:[%s195] sm:$0x7]
      %v205 = vld [vmem:[%s1] sm:$0xff]
      %v206 = vld [vmem:[%s1 + $0x8] sm:$0xff]
      %v207 = vld [vmem:[%s1 + $0x10] sm:$0xff]
      %v208 = vld [vmem:[%s1 + $0x18] sm:$0xff]
      %v209 = vld [vmem:[%s1 + $0x20] sm:$0xff]
      %v210 = vld [vmem:[%s1 + $0x28] sm:$0xff]
      %v211 = vld [vmem:[%s1 + $0x30] sm:$0xff]
      %v212 = vld [vmem:[%s1 + $0x38] sm:$0xff]
      %vm213 = vcmask 523264
      %v215 = vsel %vm213, %v204, 0
      %217 = vmatprep.subr.mxu0 0.0
      %218 = vmatpush1.msra.mxu0 %v205
      %219 = vmatprep.subr.mxu0 0.0
      %220 = vmatpush1.msra.mxu0 %v206
      %221 = vmatprep.subr.mxu0 0.0
      %222 = vmatpush1.msra.mxu0 %v207
      %223 = vmatprep.subr.mxu0 0.0
      %224 = vmatpush1.msra.mxu0 %v208
      %225 = vmatprep.subr.mxu0 0.0
      %226 = vmatpush1.msra.mxu0 %v209
      %227 = vmatprep.subr.mxu0 0.0
      %228 = vmatpush1.msra.mxu0 %v210
      %229 = vmatprep.subr.mxu0 0.0
      %230 = vmatpush1.msra.mxu0 %v211
      %231 = vmatprep.subr.mxu0 0.0
      %232 = vmatpush1.msra.mxu0 %v212
      %233 = vmatprep.subr.mxu0 0.0
      %234 = vmatpush1.msra.mxu0 0.0
      %235 = vmatprep.subr.mxu0 0.0
      %236 = vmatpush1.msra.mxu0 0.0
      %237 = vmatprep.subr.mxu0 0.0
      %238 = vmatpush1.msra.mxu0 0.0
      %239 = vmatprep.subr.mxu0 0.0
      %240 = vmatpush1.msra.mxu0 0.0
      %241 = vmatprep.subr.mxu0 0.0
      %242 = vmatpush1.msra.mxu0 0.0
      %243 = vmatprep.subr.mxu0 0.0
      %244 = vmatpush1.msra.mxu0 0.0
      %245 = vmatprep.subr.mxu0 0.0
      %246 = vmatpush1.msra.mxu0 0.0
      %247 = vmatprep.subr.mxu0 0.0
      %248 = vmatpush1.msra.mxu0 0.0
      %249 = vmatprep.subr.mxu0 0.0
      %250 = vmatpush1.msra.mxu0 0.0
      %251 = vmatprep.subr.mxu0 0.0
      %252 = vmatpush1.msra.mxu0 0.0
      %253 = vmatprep.subr.mxu0 0.0
      %254 = vmatpush1.msra.mxu0 0.0
      %255 = vmatprep.subr.mxu0 0.0
      %256 = vmatpush1.msra.mxu0 0.0
      %257 = vmatprep.subr.mxu0 0.0
      %258 = vmatpush1.msra.mxu0 0.0
      %259 = vmatprep.subr.mxu0 0.0
      %260 = vmatpush1.msra.mxu0 0.0
      %261 = vmatprep.subr.mxu0 0.0
      %262 = vmatpush1.msra.mxu0 0.0
      %263 = vmatprep.subr.mxu0 0.0
      %264 = vmatpush1.msra.mxu0 0.0
      %265 = vmatprep.subr.mxu0 0.0
      %266 = vmatpush1.msra.mxu0 0.0
      %267 = vmatprep.subr.mxu0 0.0
      %268 = vmatpush1.msra.mxu0 0.0
      %269 = vmatprep.subr.mxu0 0.0
      %270 = vmatpush1.msra.mxu0 0.0
      %271 = vmatprep.subr.mxu0 0.0
      %272 = vmatpush1.msra.mxu0 0.0
      %273 = vmatprep.subr.mxu0 0.0
      %274 = vmatpush1.msra.mxu0 0.0
      %275 = vmatprep.subr.mxu0 0.0
      %276 = vmatpush1.msra.mxu0 0.0
      %277 = vmatprep.subr.mxu0 0.0
      %278 = vmatpush1.msra.mxu0 0.0
      %279 = vmatprep.subr.mxu0 0.0
      %280 = vmatpush1.msra.mxu0 0.0
      %281 = vmatprep.mubr.f32.mxu0 0.0
      %282 = vmatmul.mubr.f32.gmra.mrb[0].mxu0 %v215
      %v283 = vpop.f32.mrb[0].mxu0
      %v284 = vadd.f32 0.0, %v283
      %v285 = vpop.f32.mrb[0].mxu0
      %286 = vdwg.mxu0
      %v287 = vld [vmem:[%s2] sm:$0xff]
      %v288 = vld [vmem:[%s2 + $0x8] sm:$0xff]
      %vm289 = vcmask 130048
      %v291 = vsel %vm289, %v284, 0
      %293 = vmatprep.subr.mxu0 0.0
      %294 = vmatpush1.msra.mxu0 %v287
      %295 = vmatprep.subr.mxu0 0.0
      %296 = vmatpush1.msra.mxu0 %v288
      %297 = vmatprep.subr.mxu0 0.0
      %298 = vmatpush1.msra.mxu0 0.0
      %299 = vmatprep.subr.mxu0 0.0
      %300 = vmatpush1.msra.mxu0 0.0
      %301 = vmatprep.subr.mxu0 0.0
      %302 = vmatpush1.msra.mxu0 0.0
      %303 = vmatprep.subr.mxu0 0.0
      %304 = vmatpush1.msra.mxu0 0.0
      %305 = vmatprep.subr.mxu0 0.0
      %306 = vmatpush1.msra.mxu0 0.0
      %307 = vmatprep.subr.mxu0 0.0
      %308 = vmatpush1.msra.mxu0 0.0
      %309 = vmatprep.subr.mxu0 0.0
      %310 = vmatpush1.msra.mxu0 0.0
      %311 = vmatprep.subr.mxu0 0.0
      %312 = vmatpush1.msra.mxu0 0.0
      %313 = vmatprep.subr.mxu0 0.0
      %314 = vmatpush1.msra.mxu0 0.0
      %315 = vmatprep.subr.mxu0 0.0
      %316 = vmatpush1.msra.mxu0 0.0
      %317 = vmatprep.subr.mxu0 0.0
      %318 = vmatpush1.msra.mxu0 0.0
      %319 = vmatprep.subr.mxu0 0.0
      %320 = vmatpush1.msra.mxu0 0.0
      %321 = vmatprep.subr.mxu0 0.0
      %322 = vmatpush1.msra.mxu0 0.0
      %323 = vmatprep.subr.mxu0 0.0
      %324 = vmatpush1.msra.mxu0 0.0
      %325 = vmatprep.subr.mxu0 0.0
      %326 = vmatpush1.msra.mxu0 0.0
      %327 = vmatprep.subr.mxu0 0.0
      %328 = vmatpush1.msra.mxu0 0.0
      %329 = vmatprep.subr.mxu0 0.0
      %330 = vmatpush1.msra.mxu0 0.0
      %331 = vmatprep.subr.mxu0 0.0
      %332 = vmatpush1.msra.mxu0 0.0
      %333 = vmatprep.subr.mxu0 0.0
      %334 = vmatpush1.msra.mxu0 0.0
      %335 = vmatprep.subr.mxu0 0.0
      %336 = vmatpush1.msra.mxu0 0.0
      %337 = vmatprep.subr.mxu0 0.0
      %338 = vmatpush1.msra.mxu0 0.0
      %339 = vmatprep.subr.mxu0 0.0
      %340 = vmatpush1.msra.mxu0 0.0
      %341 = vmatprep.subr.mxu0 0.0
      %342 = vmatpush1.msra.mxu0 0.0
      %343 = vmatprep.subr.mxu0 0.0
      %344 = vmatpush1.msra.mxu0 0.0
      %345 = vmatprep.subr.mxu0 0.0
      %346 = vmatpush1.msra.mxu0 0.0
      %347 = vmatprep.subr.mxu0 0.0
      %348 = vmatpush1.msra.mxu0 0.0
      %349 = vmatprep.subr.mxu0 0.0
      %350 = vmatpush1.msra.mxu0 0.0
      %351 = vmatprep.subr.mxu0 0.0
      %352 = vmatpush1.msra.mxu0 0.0
      %353 = vmatprep.subr.mxu0 0.0
      %354 = vmatpush1.msra.mxu0 0.0
      %355 = vmatprep.subr.mxu0 0.0
      %356 = vmatpush1.msra.mxu0 0.0
      %357 = vmatprep.mubr.f32.mxu0 0.0
      %358 = vmatmul.mubr.f32.gmra.mrb[0].mxu0 %v291
      %v359 = vpop.f32.mrb[0].mxu0
      %v360 = vadd.f32 0.0, %v359
      %v361 = vpop.f32.mrb[0].mxu0
      %362 = vdwg.mxu0
      %v363 = vsub.f32 %v204, %v360
      %vm364 = vcmask 518144
      %365 = vst.msk [vmem:[%s199] sm:$0x7] %vm364, %v363
      %vm366 = vcmask 124928
      %367 = vst.msk [vmem:[%s203] sm:$0x7] %vm366, %v284
      %p368 = scmp.lt.s32.totalorder %s16, 1
      %s369 = scalar_select %p368, %s16, 1
      %s370 = smul.addr %s369, 4
      %s371 = scalar_lea.vmem %s3, %s370
      %p372 = scmp.lt.s32.totalorder %s16, 1
      %s373 = scalar_select %p372, %s16, 1
      %s374 = smul.addr %s373, 4
      %s375 = scalar_lea.vmem %s4, %s374
      // Predicated region
      $region33: #{model_forward.6} parent=31 // pred_check
        %p376 = pneg %p102
      $region34: #{model_forward.6} parent=31 // pred_check_branch
        %378 = sbr.rel (%p376) target = $region36
      $region35: #{model_forward.6} parent=31 // pred_region
        _
      $region36: #{model_forward.6} parent=31 // pred_fallthru
        _
      // Predicated region
      $region37: #{model_forward.6} parent=31 // pred_check
        %p379 = pneg %p128
      $region38: #{model_forward.6} parent=31 // pred_check_branch
        %381 = sbr.rel (%p379) target = $region40
      $region39: #{model_forward.6} parent=31 // pred_region
        _
      $region40: #{model_forward.6} parent=31 // pred_fallthru
        _
    $region32: #{model_forward.6} parent=5 // pred_fallthru
      _
    %p382 = scmp.le.s32.totalorder 2, %s11
    // Predicated region
    $region41: #{model_forward.6} parent=5 // pred_check
      %p383 = pneg %p382
    $region42: #{model_forward.6} parent=5 // pred_check_branch
      %385 = sbr.rel (%p383) target = $region44
    $region43: #{model_forward.6} parent=5 // pred_region
      %s386 = ssub.s32 %s11, 2
      // Predicated region
      $region45: #{model_forward.6} parent=43 // pred_check
        %p387 = pneg %p108
      $region46: #{model_forward.6} parent=43 // pred_check_branch
        %389 = sbr.rel (%p387) target = $region48
      $region47: #{model_forward.6} parent=43 // pred_region
        %p390 = scmp.lt.s32.totalorder %s17, 1
        %s391 = scalar_select %p390, %s17, 1
        %s392 = smul.addr %s391, 4
        %s393 = scalar_lea.vmem %s3, %s392
      $region48: #{model_forward.6} parent=43 // pred_fallthru
        _
      // Predicated region
      $region49: #{model_forward.6} parent=43 // pred_check
        %p394 = pneg %p134
      $region50: #{model_forward.6} parent=43 // pred_check_branch
        %396 = sbr.rel (%p394) target = $region52
      $region51: #{model_forward.6} parent=43 // pred_region
        %p397 = scmp.lt.s32.totalorder %s17, 1
        %s398 = scalar_select %p397, %s17, 1
        %s399 = smul.addr %s398, 4
        %s400 = scalar_lea.vmem %s4, %s399
      $region52: #{model_forward.6} parent=43 // pred_fallthru
        _
    $region44: #{model_forward.6} parent=5 // pred_fallthru
      _
  $region6: #{model_forward.6} parent=0 // loop_footer
    %s15 = sadd.s32 1, %s11
  $region7: #{model_forward.6} parent=0 // loop_footer_branch
    %10 = sbr.rel target = $region3
  $region8: #{model_forward.6} parent=0 // loop_exit
    _

// kernel: model_forward.7
$region0: #{model_forward.7}
  #allocation0 [shape = 'u32[]', space=smem, size = 0x4, offset = 0x4, fixed_abs, tag = 'smem constant byte address 0x4 - core index']
  #allocation1 [shape = 'u32[144,128]{1,0:T(1,128)}', space=vmem, size = 0x12000, scoped, tag = 'internal scratch']
  #allocation2 [shape = 'f32[3,272]{1,0:T(4,128)}', space=vmem, size = 0x1800, scoped, tag = 'scratch operand']
  %s0 = inlined_call_operand.vmem [shape: f32[2,3,16], index: 0, kind: input, shape index: {}]
  %s1 = inlined_call_operand.vmem [shape: f32[9,3,3], index: 1, kind: input, shape index: {}]
  %s2 = inlined_call_operand.vmem [shape: f32[3,1], index: 2, kind: input, shape index: {}]
  %s3 = inlined_call_operand.vmem [shape: f32[9,1,16], index: 3, kind: input, shape index: {}]
  %s4 = inlined_call_operand.vmem [shape: f32[2,3,16], index: 4, kind: output, shape index: {}]
  %s5 = sld [smem:[#allocation0]]
  $region49: #{model_forward.7} parent=0
    _
  %s7 = ssub.s32 1, %s5
  %s8 = scalar_select 0, %s7, %s5
  loop: start=0, step=1, limit=4
  $region2: #{model_forward.7} parent=0 // loop_pre_header
    _
  $region3: #{model_forward.7} parent=0 // loop_header
    %s10 = sphi 0, %s14
    %p11 = scmp.ge.s32.totalorder %s10, 4
    %s20 = sphi 0, %s22
    %s23 = sphi 0, %s20
    %s24 = sphi 0, %s23
    %s40 = sphi 0, %s24
    %s44 = sphi 0, %s44
    %s46 = sphi 0, %s44
    %s47 = sphi 0, %s46
    %s61 = sphi 0, %s47
    %s65 = sphi 0, %s65
    %s67 = sphi 0, %s65
    %s68 = sphi 0, %s67
    %s82 = sphi 0, %s68
    %s86 = sphi 0, %s86
    %s88 = sphi 0, %s86
    %s89 = sphi 0, %s88
    %s103 = sphi 0, %s89
    %s109 = sphi 0, %s111
    %s112 = sphi 0, %s109
    %s113 = sphi 0, %s112
    %s129 = sphi 0, %s113
  $region4: #{model_forward.7} parent=0 // loop_header_branch
    %13 = sbr.rel (%p11) target = $region8
  $region5: #{model_forward.7} parent=0 // loop_body
    %s15 = ssub.s32 %s10, 1
    %s16 = ssub.s32 %s10, 2
    %s17 = sadd.s32 %s10, 1
    %s18 = ssub.s32 %s10, %s17
    %p19 = scmp.eq.s32.totalorder %s18, 0
    %s21 = sadd.s32 %s20, 1
    %s22 = scalar_select %p19, %s20, %s21
    %p25 = pneg %p19
    %p26 = scmp.eq.s32.totalorder %s10, 1
    %p27 = por %p25, %p26
    %p28 = scmp.ne.s32.totalorder %s20, %s23
    %p29 = scmp.eq.s32.totalorder %s10, 0
    %p30 = por %p28, %p29
    %p31 = scmp.ne.s32.totalorder %s20, %s23
    %p32 = scmp.eq.s32.totalorder %s15, 1
    %p33 = por %p31, %p32
    %p34 = scmp.ne.s32.totalorder %s23, %s24
    %p35 = scmp.eq.s32.totalorder %s15, 0
    %p36 = por %p34, %p35
    %p37 = scmp.ne.s32.totalorder %s23, %s24
    %p38 = scmp.eq.s32.totalorder %s16, 1
    %p39 = por %p37, %p38
    %p41 = scmp.ne.s32.totalorder %s24, %s40
    %p42 = scmp.eq.s32.totalorder %s16, 0
    %p43 = por %p41, %p42
    %s45 = sadd.s32 %s44, 1
    %p48 = scmp.eq.s32.totalorder %s10, 1
    %p49 = scmp.ne.s32.totalorder %s44, %s46
    %p50 = scmp.eq.s32.totalorder %s10, 0
    %p51 = por %p49, %p50
    %p52 = scmp.ne.s32.totalorder %s44, %s46
    %p53 = scmp.eq.s32.totalorder %s15, 1
    %p54 = por %p52, %p53
    %p55 = scmp.ne.s32.totalorder %s46, %s47
    %p56 = scmp.eq.s32.totalorder %s15, 0
    %p57 = por %p55, %p56
    %p58 = scmp.ne.s32.totalorder %s46, %s47
    %p59 = scmp.eq.s32.totalorder %s16, 1
    %p60 = por %p58, %p59
    %p62 = scmp.ne.s32.totalorder %s47, %s61
    %p63 = scmp.eq.s32.totalorder %s16, 0
    %p64 = por %p62, %p63
    %s66 = sadd.s32 %s65, 1
    %p69 = scmp.eq.s32.totalorder %s10, 1
    %p70 = scmp.ne.s32.totalorder %s65, %s67
    %p71 = scmp.eq.s32.totalorder %s10, 0
    %p72 = por %p70, %p71
    %p73 = scmp.ne.s32.totalorder %s65, %s67
    %p74 = scmp.eq.s32.totalorder %s15, 1
    %p75 = por %p73, %p74
    %p76 = scmp.ne.s32.totalorder %s67, %s68
    %p77 = scmp.eq.s32.totalorder %s15, 0
    %p78 = por %p76, %p77
    %p79 = scmp.ne.s32.totalorder %s67, %s68
    %p80 = scmp.eq.s32.totalorder %s16, 1
    %p81 = por %p79, %p80
    %p83 = scmp.ne.s32.totalorder %s68, %s82
    %p84 = scmp.eq.s32.totalorder %s16, 0
    %p85 = por %p83, %p84
    %s87 = sadd.s32 %s86, 1
    %p90 = scmp.eq.s32.totalorder %s10, 1
    %p91 = scmp.ne.s32.totalorder %s86, %s88
    %p92 = scmp.eq.s32.totalorder %s10, 0
    %p93 = por %p91, %p92
    %p94 = scmp.ne.s32.totalorder %s86, %s88
    %p95 = scmp.eq.s32.totalorder %s15, 1
    %p96 = por %p94, %p95
    %p97 = scmp.ne.s32.totalorder %s88, %s89
    %p98 = scmp.eq.s32.totalorder %s15, 0
    %p99 = por %p97, %p98
    %p100 = scmp.ne.s32.totalorder %s88, %s89
    %p101 = scmp.eq.s32.totalorder %s16, 1
    %p102 = por %p100, %p101
    %p104 = scmp.ne.s32.totalorder %s89, %s103
    %p105 = scmp.eq.s32.totalorder %s16, 0
    %p106 = por %p104, %p105
    %s107 = ssub.s32 %s10, %s17
    %p108 = scmp.eq.s32.totalorder %s107, 0
    %s110 = sadd.s32 %s109, 1
    %s111 = scalar_select %p108, %s109, %s110
    %p114 = pneg %p108
    %p115 = scmp.eq.s32.totalorder %s10, 1
    %p116 = por %p114, %p115
    %p117 = scmp.ne.s32.totalorder %s109, %s112
    %p118 = scmp.eq.s32.totalorder %s10, 0
    %p119 = por %p117, %p118
    %p120 = scmp.ne.s32.totalorder %s109, %s112
    %p121 = scmp.eq.s32.totalorder %s15, 1
    %p122 = por %p120, %p121
    %p123 = scmp.ne.s32.totalorder %s112, %s113
    %p124 = scmp.eq.s32.totalorder %s15, 0
    %p125 = por %p123, %p124
    %p126 = scmp.ne.s32.totalorder %s112, %s113
    %p127 = scmp.eq.s32.totalorder %s16, 1
    %p128 = por %p126, %p127
    %p130 = scmp.ne.s32.totalorder %s113, %s129
    %p131 = scmp.eq.s32.totalorder %s16, 0
    %p132 = por %p130, %p131
    %p133 = scmp.le.s32.totalorder 1, %s10
    %p134 = scmp.lt.s32.totalorder %s10, 3
    %p135 = pnand %p133, %p134
    %p136 = pneg %p135
    // Predicated region
    $region9: #{model_forward.7} parent=5 // pred_check
      _
    $region10: #{model_forward.7} parent=5 // pred_check_branch
      %138 = sbr.rel (%p135) target = $region12
    $region11: #{model_forward.7} parent=5 // pred_region
      %s139 = ssub.s32 %s10, 1
      // Predicated region
      $region13: #{model_forward.7} parent=11 // pred_check
        %p140 = pneg %p57
      $region14: #{model_forward.7} parent=11 // pred_check_branch
        %142 = sbr.rel (%p140) target = $region16
      $region15: #{model_forward.7} parent=11 // pred_region
        _
      $region16: #{model_forward.7} parent=11 // pred_fallthru
        _
      // Predicated region
      $region17: #{model_forward.7} parent=11 // pred_check
        %p143 = pneg %p78
      $region18: #{model_forward.7} parent=11 // pred_check_branch
        %145 = sbr.rel (%p143) target = $region20
      $region19: #{model_forward.7} parent=11 // pred_region
        _
      $region20: #{model_forward.7} parent=11 // pred_fallthru
        _
      // Predicated region
      $region21: #{model_forward.7} parent=11 // pred_check
        %p146 = pneg %p99
      $region22: #{model_forward.7} parent=11 // pred_check_branch
        %148 = sbr.rel (%p146) target = $region24
      $region23: #{model_forward.7} parent=11 // pred_region
        _
      $region24: #{model_forward.7} parent=11 // pred_fallthru
        _
    $region12: #{model_forward.7} parent=5 // pred_fallthru
      _
    %p149 = scmp.lt.s32.totalorder %s10, 2
    // Predicated region
    $region25: #{model_forward.7} parent=5 // pred_check
      %p150 = pneg %p149
    $region26: #{model_forward.7} parent=5 // pred_check_branch
      %152 = sbr.rel (%p150) target = $region28
    $region27: #{model_forward.7} parent=5 // pred_region
      // Predicated region
      $region29: #{model_forward.7} parent=27 // pred_check
        %p153 = pneg %p30
      $region30: #{model_forward.7} parent=27 // pred_check_branch
        %155 = sbr.rel (%p153) target = $region32
      $region31: #{model_forward.7} parent=27 // pred_region
        %p156 = scmp.lt.s32.totalorder %s10, 1
        %s157 = scalar_select %p156, %s10, 1
        %s158 = smul.addr %s157, 4
        %s159 = scalar_lea.vmem %s0, %s158
      $region32: #{model_forward.7} parent=27 // pred_fallthru
        _
    $region28: #{model_forward.7} parent=5 // pred_fallthru
      _
    %p160 = scmp.le.s32.totalorder 1, %s10
    %p161 = scmp.lt.s32.totalorder %s10, 3
    %p162 = pnand %p160, %p161
    %p163 = pneg %p162
    // Predicated region
    $region33: #{model_forward.7} parent=5 // pred_check
      _
    $region34: #{model_forward.7} parent=5 // pred_check_branch
      %165 = sbr.rel (%p162) target = $region36
    $region35: #{model_forward.7} parent=5 // pred_region
      %s166 = ssub.s32 %s10, 1
      %p167 = scmp.lt.s32.totalorder %s15, 1
      %s168 = scalar_select %p167, %s15, 1
      %s169 = smul.addr %s168, 4
      %s170 = scalar_lea.vmem %s0, %s169
      %p171 = pneg %p36
      %p172 = pneg %p33
      %p173 = pneg %p57
      %p174 = pneg %p54
      %p175 = pneg %p78
      %p176 = pneg %p75
      %p177 = pneg %p99
      %p178 = pneg %p96
      %p179 = pneg %p125
      %p180 = pneg %p122
      %p181 = scmp.lt.s32.totalorder %s15, 1
      %s182 = scalar_select %p181, %s15, 1
      %s183 = smul.addr %s182, 4
      %s184 = scalar_lea.vmem %s4, %s183
      %p185 = scmp.lt.s32.totalorder %s15, 1
      %s186 = scalar_select %p185, %s15, 1
      %s187 = smul.addr %s186, 4
      %s188 = scalar_lea.vmem %s0, %s187
      %p189 = scmp.lt.s32.totalorder %s15, 1
      %s190 = scalar_select %p189, %s15, 1
      %s191 = smul.addr %s190, 4
      %s192 = scalar_lea.vmem %s4, %s191
      %v193 = vld [vmem:[%s188] sm:$0x7]
      %194 = vst [vmem:[#allocation2] sm:$0x77] 0.0
      %vm195 = vcmask 124928
      %196 = vst.msk [vmem:[#allocation2 + $0x8] sm:$0x7] %vm195, 0.0
      %197 = vst.msk [vmem:[#allocation2 + $0x4] sm:$0x7] %vm195, %v193
      %v198 = vld [vmem:[#allocation2] sm:$0x77]
      %v199 = vld [vmem:[%s3] sm:$0x1]
      %v201 = vlaneseq
      %v202 = vshrl.u32 %v201, 7
      %v203 = vsub.s32 0, %v202
      %v204 = vrot.slane %v199, %v203
      %205 = vrot.lane.b32.xlu0 %v204, 123
      %v206 = vpop.permute.xlu0 %205
      %v207 = vrot.slane %v206, 4
      %vm208 = vcmask 1006592
      %v209 = vsel %vm208, %v207, %v206
      %v211 = vmul.f32 %v198, %v209
      %v212 = vld [vmem:[%s1] sm:$0x7]
      %s213 = scalar_lea.vmem %s3, 1
      %v214 = vld [vmem:[%s213] sm:$0x1]
      %v216 = vlaneseq
      %v217 = vshrl.u32 %v216, 7
      %v218 = vsub.s32 0, %v217
      %v219 = vrot.slane %v214, %v218
      %220 = vrot.lane.b32.xlu0 %v219, 124
      %v221 = vpop.permute.xlu0 %220
      %v222 = vrot.slane %v221, 4
      %vm223 = vcmask 1014784
      %v224 = vsel %vm223, %v222, %v221
      %v226 = vmul.f32 %v198, %v224
      %s227 = scalar_lea.vmem %s1, 4
      %v228 = vld [vmem:[%s227] sm:$0x7]
      %v230 = vcombine.high %v226, %v226
      %231 = vrot.lane.b32.xlu0 %v226, 4
      %v232 = vpop.permute.xlu0 %231
      %233 = vrot.lane.b32.xlu0 %v230, 4
      %v234 = vpop.permute.xlu0 %233
      %vm235 = vcmask 31744
      %v236 = vsel %vm235, %v232, %v234
      %vm237 = vcmask 23552
      %v239 = vsel %vm237, %v228, 0
      %vm241 = vcmask 1042432
      %v242 = vsel %vm241, %v236, 0
      %244 = vmatprep.subr.mxu0 0.0
      %245 = vmatpush1.msra.mxu0 %v242
      %246 = vmatprep.subr.mxu0 0.0
      %247 = vmatpush1.msra.mxu0 0.0
      %248 = vmatprep.subr.mxu0 0.0
      %249 = vmatpush1.msra.mxu0 0.0
      %250 = vmatprep.subr.mxu0 0.0
      %251 = vmatpush1.msra.mxu0 0.0
      %252 = vmatprep.subr.mxu0 0.0
      %253 = vmatpush1.msra.mxu0 0.0
      %254 = vmatprep.subr.mxu0 0.0
      %255 = vmatpush1.msra.mxu0 0.0
      %256 = vmatprep.subr.mxu0 0.0
      %257 = vmatpush1.msra.mxu0 0.0
      %258 = vmatprep.subr.mxu0 0.0
      %259 = vmatpush1.msra.mxu0 0.0
      %260 = vmatprep.subr.mxu0 0.0
      %261 = vmatpush1.msra.mxu0 0.0
      %262 = vmatprep.subr.mxu0 0.0
      %263 = vmatpush1.msra.mxu0 0.0
      %264 = vmatprep.subr.mxu0 0.0
      %265 = vmatpush1.msra.mxu0 0.0
      %266 = vmatprep.subr.mxu0 0.0
      %267 = vmatpush1.msra.mxu0 0.0
      %268 = vmatprep.subr.mxu0 0.0
      %269 = vmatpush1.msra.mxu0 0.0
      %270 = vmatprep.subr.mxu0 0.0
      %271 = vmatpush1.msra.mxu0 0.0
      %272 = vmatprep.subr.mxu0 0.0
      %273 = vmatpush1.msra.mxu0 0.0
      %274 = vmatprep.subr.mxu0 0.0
      %275 = vmatpush1.msra.mxu0 0.0
      %276 = vmatprep.subr.mxu0 0.0
      %277 = vmatpush1.msra.mxu0 0.0
      %278 = vmatprep.subr.mxu0 0.0
      %279 = vmatpush1.msra.mxu0 0.0
      %280 = vmatprep.subr.mxu0 0.0
      %281 = vmatpush1.msra.mxu0 0.0
      %282 = vmatprep.subr.mxu0 0.0
      %283 = vmatpush1.msra.mxu0 0.0
      %284 = vmatprep.subr.mxu0 0.0
      %285 = vmatpush1.msra.mxu0 0.0
      %286 = vmatprep.subr.mxu0 0.0
      %287 = vmatpush1.msra.mxu0 0.0
      %288 = vmatprep.subr.mxu0 0.0
      %289 = vmatpush1.msra.mxu0 0.0
      %290 = vmatprep.subr.mxu0 0.0
      %291 = vmatpush1.msra.mxu0 0.0
      %292 = vmatprep.subr.mxu0 0.0
      %293 = vmatpush1.msra.mxu0 0.0
      %294 = vmatprep.subr.mxu0 0.0
      %295 = vmatpush1.msra.mxu0 0.0
      %296 = vmatprep.subr.mxu0 0.0
      %297 = vmatpush1.msra.mxu0 0.0
      %298 = vmatprep.subr.mxu0 0.0
      %299 = vmatpush1.msra.mxu0 0.0
      %300 = vmatprep.subr.mxu0 0.0
      %301 = vmatpush1.msra.mxu0 0.0
      %302 = vmatprep.subr.mxu0 0.0
      %303 = vmatpush1.msra.mxu0 0.0
      %304 = vmatprep.subr.mxu0 0.0
      %305 = vmatpush1.msra.mxu0 0.0
      %306 = vmatprep.subr.mxu0 0.0
      %307 = vmatpush1.msra.mxu0 0.0
      %308 = vmatprep.mubr.f32.mxu0 0.0
      %309 = vmatmul.mubr.f32.gmra.mrb[0].mxu0 %v239
      %v310 = vpop.f32.mrb[0].mxu0
      %v311 = vadd.f32 0.0, %v310
      %v312 = vpop.f32.mrb[0].mxu0
      %313 = vdwg.mxu0
      %v315 = vcombine.high %v211, %v211
      %316 = vrot.lane.b32.xlu0 %v211, 5
      %v317 = vpop.permute.xlu0 %316
      %318 = vrot.lane.b32.xlu0 %v315, 5
      %v319 = vpop.permute.xlu0 %318
      %vm320 = vcmask 39936
      %v321 = vsel %vm320, %v317, %v319
      %v323 = vsel %vm237, %v212, 0
      %v325 = vsel %vm241, %v321, 0
      %327 = vmatprep.subr.mxu0 0.0
      %328 = vmatpush1.msra.mxu0 %v325
      %329 = vmatprep.subr.mxu0 0.0
      %330 = vmatpush1.msra.mxu0 0.0
      %331 = vmatprep.subr.mxu0 0.0
      %332 = vmatpush1.msra.mxu0 0.0
      %333 = vmatprep.subr.mxu0 0.0
      %334 = vmatpush1.msra.mxu0 0.0
      %335 = vmatprep.subr.mxu0 0.0
      %336 = vmatpush1.msra.mxu0 0.0
      %337 = vmatprep.subr.mxu0 0.0
      %338 = vmatpush1.msra.mxu0 0.0
      %339 = vmatprep.subr.mxu0 0.0
      %340 = vmatpush1.msra.mxu0 0.0
      %341 = vmatprep.subr.mxu0 0.0
      %342 = vmatpush1.msra.mxu0 0.0
      %343 = vmatprep.subr.mxu0 0.0
      %344 = vmatpush1.msra.mxu0 0.0
      %345 = vmatprep.subr.mxu0 0.0
      %346 = vmatpush1.msra.mxu0 0.0
      %347 = vmatprep.subr.mxu0 0.0
      %348 = vmatpush1.msra.mxu0 0.0
      %349 = vmatprep.subr.mxu0 0.0
      %350 = vmatpush1.msra.mxu0 0.0
      %351 = vmatprep.subr.mxu0 0.0
      %352 = vmatpush1.msra.mxu0 0.0
      %353 = vmatprep.subr.mxu0 0.0
      %354 = vmatpush1.msra.mxu0 0.0
      %355 = vmatprep.subr.mxu0 0.0
      %356 = vmatpush1.msra.mxu0 0.0
      %357 = vmatprep.subr.mxu0 0.0
      %358 = vmatpush1.msra.mxu0 0.0
      %359 = vmatprep.subr.mxu0 0.0
      %360 = vmatpush1.msra.mxu0 0.0
      %361 = vmatprep.subr.mxu0 0.0
      %362 = vmatpush1.msra.mxu0 0.0
      %363 = vmatprep.subr.mxu0 0.0
      %364 = vmatpush1.msra.mxu0 0.0
      %365 = vmatprep.subr.mxu0 0.0
      %366 = vmatpush1.msra.mxu0 0.0
      %367 = vmatprep.subr.mxu0 0.0
      %368 = vmatpush1.msra.mxu0 0.0
      %369 = vmatprep.subr.mxu0 0.0
      %370 = vmatpush1.msra.mxu0 0.0
      %371 = vmatprep.subr.mxu0 0.0
      %372 = vmatpush1.msra.mxu0 0.0
      %373 = vmatprep.subr.mxu0 0.0
      %374 = vmatpush1.msra.mxu0 0.0
      %375 = vmatprep.subr.mxu0 0.0
      %376 = vmatpush1.msra.mxu0 0.0
      %377 = vmatprep.subr.mxu0 0.0
      %378 = vmatpush1.msra.mxu0 0.0
      %379 = vmatprep.subr.mxu0 0.0
      %380 = vmatpush1.msra.mxu0 0.0
      %381 = vmatprep.subr.mxu0 0.0
      %382 = vmatpush1.msra.mxu0 0.0
      %383 = vmatprep.subr.mxu0 0.0
      %384 = vmatpush1.msra.mxu0 0.0
      %385 = vmatprep.subr.mxu0 0.0
      %386 = vmatpush1.msra.mxu0 0.0
      %387 = vmatprep.subr.mxu0 0.0
      %388 = vmatpush1.msra.mxu0 0.0
      %389 = vmatprep.subr.mxu0 0.0
      %390 = vmatpush1.msra.mxu0 0.0
      %391 = vmatprep.mubr.f32.mxu0 0.0
      %392 = vmatmul.mubr.f32.gmra.mrb[0].mxu0 %v323
      %v393 = vpop.f32.mrb[0].mxu0
      %v394 = vadd.f32 %v311, %v393
      %v395 = vpop.f32.mrb[0].mxu0
      %396 = vdwg.mxu0
      %v397 = vld [vmem:[#allocation2] sm:$0x77]
      %s398 = scalar_lea.vmem %s3, 2
      %v399 = vld [vmem:[%s398] sm:$0x1]
      %v401 = vlaneseq
      %v402 = vshrl.u32 %v401, 7
      %v403 = vsub.s32 0, %v402
      %v404 = vrot.slane %v399, %v403
      %405 = vrot.lane.b32.xlu0 %v404, 125
      %v406 = vpop.permute.xlu0 %405
      %v407 = vrot.slane %v406, 4
      %vm408 = vcmask 1022976
      %v409 = vsel %vm408, %v407, %v406
      %v411 = vmul.f32 %v397, %v409
      %s412 = scalar_lea.vmem %s1, 8
      %v413 = vld [vmem:[%s412] sm:$0x7]
      %v415 = vcombine.high %v411, %v411
      %416 = vrot.lane.b32.xlu0 %v411, 3
      %v417 = vpop.permute.xlu0 %416
      %418 = vrot.lane.b32.xlu0 %v415, 3
      %v419 = vpop.permute.xlu0 %418
      %v420 = vsel %vm237, %v417, %v419
      %v422 = vsel %vm237, %v413, 0
      %v424 = vsel %vm241, %v420, 0
      %426 = vmatprep.subr.mxu0 0.0
      %427 = vmatpush1.msra.mxu0 %v424
      %428 = vmatprep.subr.mxu0 0.0
      %429 = vmatpush1.msra.mxu0 0.0
      %430 = vmatprep.subr.mxu0 0.0
      %431 = vmatpush1.msra.mxu0 0.0
      %432 = vmatprep.subr.mxu0 0.0
      %433 = vmatpush1.msra.mxu0 0.0
      %434 = vmatprep.subr.mxu0 0.0
      %435 = vmatpush1.msra.mxu0 0.0
      %436 = vmatprep.subr.mxu0 0.0
      %437 = vmatpush1.msra.mxu0 0.0
      %438 = vmatprep.subr.mxu0 0.0
      %439 = vmatpush1.msra.mxu0 0.0
      %440 = vmatprep.subr.mxu0 0.0
      %441 = vmatpush1.msra.mxu0 0.0
      %442 = vmatprep.subr.mxu0 0.0
      %443 = vmatpush1.msra.mxu0 0.0
      %444 = vmatprep.subr.mxu0 0.0
      %445 = vmatpush1.msra.mxu0 0.0
      %446 = vmatprep.subr.mxu0 0.0
      %447 = vmatpush1.msra.mxu0 0.0
      %448 = vmatprep.subr.mxu0 0.0
      %449 = vmatpush1.msra.mxu0 0.0
      %450 = vmatprep.subr.mxu0 0.0
      %451 = vmatpush1.msra.mxu0 0.0
      %452 = vmatprep.subr.mxu0 0.0
      %453 = vmatpush1.msra.mxu0 0.0
      %454 = vmatprep.subr.mxu0 0.0
      %455 = vmatpush1.msra.mxu0 0.0
      %456 = vmatprep.subr.mxu0 0.0
      %457 = vmatpush1.msra.mxu0 0.0
      %458 = vmatprep.subr.mxu0 0.0
      %459 = vmatpush1.msra.mxu0 0.0
      %460 = vmatprep.subr.mxu0 0.0
      %461 = vmatpush1.msra.mxu0 0.0
      %462 = vmatprep.subr.mxu0 0.0
      %463 = vmatpush1.msra.mxu0 0.0
      %464 = vmatprep.subr.mxu0 0.0
      %465 = vmatpush1.msra.mxu0 0.0
      %466 = vmatprep.subr.mxu0 0.0
      %467 = vmatpush1.msra.mxu0 0.0
      %468 = vmatprep.subr.mxu0 0.0
      %469 = vmatpush1.msra.mxu0 0.0
      %470 = vmatprep.subr.mxu0 0.0
      %471 = vmatpush1.msra.mxu0 0.0
      %472 = vmatprep.subr.mxu0 0.0
      %473 = vmatpush1.msra.mxu0 0.0
      %474 = vmatprep.subr.mxu0 0.0
      %475 = vmatpush1.msra.mxu0 0.0
      %476 = vmatprep.subr.mxu0 0.0
      %477 = vmatpush1.msra.mxu0 0.0
      %478 = vmatprep.subr.mxu0 0.0
      %479 = vmatpush1.msra.mxu0 0.0
      %480 = vmatprep.subr.mxu0 0.0
      %481 = vmatpush1.msra.mxu0 0.0
      %482 = vmatprep.subr.mxu0 0.0
      %483 = vmatpush1.msra.mxu0 0.0
      %484 = vmatprep.subr.mxu0 0.0
      %485 = vmatpush1.msra.mxu0 0.0
      %486 = vmatprep.subr.mxu0 0.0
      %487 = vmatpush1.msra.mxu0 0.0
      %488 = vmatprep.subr.mxu0 0.0
      %489 = vmatpush1.msra.mxu0 0.0
      %490 = vmatprep.mubr.f32.mxu0 0.0
      %491 = vmatmul.mubr.f32.gmra.mrb[0].mxu0 %v422
      %v492 = vpop.f32.mrb[0].mxu0
      %v493 = vadd.f32 0.0, %v492
      %v494 = vpop.f32.mrb[0].mxu0
      %495 = vdwg.mxu0
      %v496 = vadd.f32 %v394, %v493
      %v497 = vld [vmem:[#allocation2] sm:$0x77]
      %s498 = scalar_lea.vmem %s3, 3
      %v499 = vld [vmem:[%s498] sm:$0x1]
      %v501 = vlaneseq
      %v502 = vshrl.u32 %v501, 7
      %v503 = vsub.s32 0, %v502
      %v504 = vrot.slane %v499, %v503
      %505 = vrot.lane.b32.xlu0 %v504, 127
      %v506 = vpop.permute.xlu0 %505
      %v507 = vrot.slane %v506, 4
      %vm508 = vcmask 1039360
      %v509 = vsel %vm508, %v507, %v506
      %v511 = vmul.f32 %v497, %v509
      %s512 = scalar_lea.vmem %s1, 12
      %v513 = vld [vmem:[%s512] sm:$0x7]
      %v515 = vcombine.high %v511, %v511
      %516 = vrot.lane.b32.xlu0 %v511, 1
      %v517 = vpop.permute.xlu0 %516
      %518 = vrot.lane.b32.xlu0 %v515, 1
      %v519 = vpop.permute.xlu0 %518
      %vm520 = vcmask 7168
      %v521 = vsel %vm520, %v517, %v519
      %v523 = vsel %vm237, %v513, 0
      %v525 = vsel %vm241, %v521, 0
      %527 = vmatprep.subr.mxu0 0.0
      %528 = vmatpush1.msra.mxu0 %v525
      %529 = vmatprep.subr.mxu0 0.0
      %530 = vmatpush1.msra.mxu0 0.0
      %531 = vmatprep.subr.mxu0 0.0
      %532 = vmatpush1.msra.mxu0 0.0
      %533 = vmatprep.subr.mxu0 0.0
      %534 = vmatpush1.msra.mxu0 0.0
      %535 = vmatprep.subr.mxu0 0.0
      %536 = vmatpush1.msra.mxu0 0.0
      %537 = vmatprep.subr.mxu0 0.0
      %538 = vmatpush1.msra.mxu0 0.0
      %539 = vmatprep.subr.mxu0 0.0
      %540 = vmatpush1.msra.mxu0 0.0
      %541 = vmatprep.subr.mxu0 0.0
      %542 = vmatpush1.msra.mxu0 0.0
      %543 = vmatprep.subr.mxu0 0.0
      %544 = vmatpush1.msra.mxu0 0.0
      %545 = vmatprep.subr.mxu0 0.0
      %546 = vmatpush1.msra.mxu0 0.0
      %547 = vmatprep.subr.mxu0 0.0
      %548 = vmatpush1.msra.mxu0 0.0
      %549 = vmatprep.subr.mxu0 0.0
      %550 = vmatpush1.msra.mxu0 0.0
      %551 = vmatprep.subr.mxu0 0.0
      %552 = vmatpush1.msra.mxu0 0.0
      %553 = vmatprep.subr.mxu0 0.0
      %554 = vmatpush1.msra.mxu0 0.0
      %555 = vmatprep.subr.mxu0 0.0
      %556 = vmatpush1.msra.mxu0 0.0
      %557 = vmatprep.subr.mxu0 0.0
      %558 = vmatpush1.msra.mxu0 0.0
      %559 = vmatprep.subr.mxu0 0.0
      %560 = vmatpush1.msra.mxu0 0.0
      %561 = vmatprep.subr.mxu0 0.0
      %562 = vmatpush1.msra.mxu0 0.0
      %563 = vmatprep.subr.mxu0 0.0
      %564 = vmatpush1.msra.mxu0 0.0
      %565 = vmatprep.subr.mxu0 0.0
      %566 = vmatpush1.msra.mxu0 0.0
      %567 = vmatprep.subr.mxu0 0.0
      %568 = vmatpush1.msra.mxu0 0.0
      %569 = vmatprep.subr.mxu0 0.0
      %570 = vmatpush1.msra.mxu0 0.0
      %571 = vmatprep.subr.mxu0 0.0
      %572 = vmatpush1.msra.mxu0 0.0
      %573 = vmatprep.subr.mxu0 0.0
      %574 = vmatpush1.msra.mxu0 0.0
      %575 = vmatprep.subr.mxu0 0.0
      %576 = vmatpush1.msra.mxu0 0.0
      %577 = vmatprep.subr.mxu0 0.0
      %578 = vmatpush1.msra.mxu0 0.0
      %579 = vmatprep.subr.mxu0 0.0
      %580 = vmatpush1.msra.mxu0 0.0
      %581 = vmatprep.subr.mxu0 0.0
      %582 = vmatpush1.msra.mxu0 0.0
      %583 = vmatprep.subr.mxu0 0.0
      %584 = vmatpush1.msra.mxu0 0.0
      %585 = vmatprep.subr.mxu0 0.0
      %586 = vmatpush1.msra.mxu0 0.0
      %587 = vmatprep.subr.mxu0 0.0
      %588 = vmatpush1.msra.mxu0 0.0
      %589 = vmatprep.subr.mxu0 0.0
      %590 = vmatpush1.msra.mxu0 0.0
      %591 = vmatprep.mubr.f32.mxu0 0.0
      %592 = vmatmul.mubr.f32.gmra.mrb[0].mxu0 %v523
      %v593 = vpop.f32.mrb[0].mxu0
      %v594 = vadd.f32 0.0, %v593
      %v595 = vpop.f32.mrb[0].mxu0
      %596 = vdwg.mxu0
      %v597 = vadd.f32 %v496, %v594
      %s598 = scalar_lea.vmem %s1, 16
      %v599 = vld [vmem:[%s598] sm:$0x7]
      %v601 = vsel %vm237, %v599, 0
      %v604 = vsel %vm241, %v193, 0
      %606 = vmatprep.subr.mxu0 0.0
      %607 = vmatpush1.msra.mxu0 %v604
      %608 = vmatprep.subr.mxu0 0.0
      %609 = vmatpush1.msra.mxu0 0.0
      %610 = vmatprep.subr.mxu0 0.0
      %611 = vmatpush1.msra.mxu0 0.0
      %612 = vmatprep.subr.mxu0 0.0
      %613 = vmatpush1.msra.mxu0 0.0
      %614 = vmatprep.subr.mxu0 0.0
      %615 = vmatpush1.msra.mxu0 0.0
      %616 = vmatprep.subr.mxu0 0.0
      %617 = vmatpush1.msra.mxu0 0.0
      %618 = vmatprep.subr.mxu0 0.0
      %619 = vmatpush1.msra.mxu0 0.0
      %620 = vmatprep.subr.mxu0 0.0
      %621 = vmatpush1.msra.mxu0 0.0
      %622 = vmatprep.subr.mxu0 0.0
      %623 = vmatpush1.msra.mxu0 0.0
      %624 = vmatprep.subr.mxu0 0.0
      %625 = vmatpush1.msra.mxu0 0.0
      %626 = vmatprep.subr.mxu0 0.0
      %627 = vmatpush1.msra.mxu0 0.0
      %628 = vmatprep.subr.mxu0 0.0
      %629 = vmatpush1.msra.mxu0 0.0
      %630 = vmatprep.subr.mxu0 0.0
      %631 = vmatpush1.msra.mxu0 0.0
      %632 = vmatprep.subr.mxu0 0.0
      %633 = vmatpush1.msra.mxu0 0.0
      %634 = vmatprep.subr.mxu0 0.0
      %635 = vmatpush1.msra.mxu0 0.0
      %636 = vmatprep.subr.mxu0 0.0
      %637 = vmatpush1.msra.mxu0 0.0
      %638 = vmatprep.subr.mxu0 0.0
      %639 = vmatpush1.msra.mxu0 0.0
      %640 = vmatprep.subr.mxu0 0.0
      %641 = vmatpush1.msra.mxu0 0.0
      %642 = vmatprep.subr.mxu0 0.0
      %643 = vmatpush1.msra.mxu0 0.0
      %644 = vmatprep.subr.mxu0 0.0
      %645 = vmatpush1.msra.mxu0 0.0
      %646 = vmatprep.subr.mxu0 0.0
      %647 = vmatpush1.msra.mxu0 0.0
      %648 = vmatprep.subr.mxu0 0.0
      %649 = vmatpush1.msra.mxu0 0.0
      %650 = vmatprep.subr.mxu0 0.0
      %651 = vmatpush1.msra.mxu0 0.0
      %652 = vmatprep.subr.mxu0 0.0
      %653 = vmatpush1.msra.mxu0 0.0
      %654 = vmatprep.subr.mxu0 0.0
      %655 = vmatpush1.msra.mxu0 0.0
      %656 = vmatprep.subr.mxu0 0.0
      %657 = vmatpush1.msra.mxu0 0.0
      %658 = vmatprep.subr.mxu0 0.0
      %659 = vmatpush1.msra.mxu0 0.0
      %660 = vmatprep.subr.mxu0 0.0
      %661 = vmatpush1.msra.mxu0 0.0
      %662 = vmatprep.subr.mxu0 0.0
      %663 = vmatpush1.msra.mxu0 0.0
      %664 = vmatprep.subr.mxu0 0.0
      %665 = vmatpush1.msra.mxu0 0.0
      %666 = vmatprep.subr.mxu0 0.0
      %667 = vmatpush1.msra.mxu0 0.0
      %668 = vmatprep.subr.mxu0 0.0
      %669 = vmatpush1.msra.mxu0 0.0
      %670 = vmatprep.mubr.f32.mxu0 0.0
      %671 = vmatmul.mubr.f32.gmra.mrb[0].mxu0 %v601
      %v672 = vpop.f32.mrb[0].mxu0
      %v673 = vadd.f32 0.0, %v672
      %v674 = vpop.f32.mrb[0].mxu0
      %675 = vdwg.mxu0
      %v676 = vadd.f32 %v597, %v673
      %v677 = vld [vmem:[#allocation2 + $0x4] sm:$0x7]
      %s678 = scalar_lea.vmem %s3, 5
      %v679 = vld [vmem:[%s678] sm:$0x1]
      %v681 = vlaneseq
      %v682 = vshrl.u32 %v681, 7
      %v683 = vsub.s32 0, %v682
      %v684 = vrot.slane %v679, %v683
      %685 = vrot.lane.b32.xlu0 %v684, 1
      %v686 = vpop.permute.xlu0 %685
      %v688 = vmul.f32 %v677, %v686
      %s689 = scalar_lea.vmem %s1, 20
      %v690 = vld [vmem:[%s689] sm:$0x7]
      %692 = vrot.lane.b32.xlu0 %v688, 127
      %v693 = vpop.permute.xlu0 %692
      %v695 = vsel %vm237, %v690, 0
      %v697 = vsel %vm241, %v693, 0
      %699 = vmatprep.subr.mxu0 0.0
      %700 = vmatpush1.msra.mxu0 %v697
      %701 = vmatprep.subr.mxu0 0.0
      %702 = vmatpush1.msra.mxu0 0.0
      %703 = vmatprep.subr.mxu0 0.0
      %704 = vmatpush1.msra.mxu0 0.0
      %705 = vmatprep.subr.mxu0 0.0
      %706 = vmatpush1.msra.mxu0 0.0
      %707 = vmatprep.subr.mxu0 0.0
      %708 = vmatpush1.msra.mxu0 0.0
      %709 = vmatprep.subr.mxu0 0.0
      %710 = vmatpush1.msra.mxu0 0.0
      %711 = vmatprep.subr.mxu0 0.0
      %712 = vmatpush1.msra.mxu0 0.0
      %713 = vmatprep.subr.mxu0 0.0
      %714 = vmatpush1.msra.mxu0 0.0
      %715 = vmatprep.subr.mxu0 0.0
      %716 = vmatpush1.msra.mxu0 0.0
      %717 = vmatprep.subr.mxu0 0.0
      %718 = vmatpush1.msra.mxu0 0.0
      %719 = vmatprep.subr.mxu0 0.0
      %720 = vmatpush1.msra.mxu0 0.0
      %721 = vmatprep.subr.mxu0 0.0
      %722 = vmatpush1.msra.mxu0 0.0
      %723 = vmatprep.subr.mxu0 0.0
      %724 = vmatpush1.msra.mxu0 0.0
      %725 = vmatprep.subr.mxu0 0.0
      %726 = vmatpush1.msra.mxu0 0.0
      %727 = vmatprep.subr.mxu0 0.0
      %728 = vmatpush1.msra.mxu0 0.0
      %729 = vmatprep.subr.mxu0 0.0
      %730 = vmatpush1.msra.mxu0 0.0
      %731 = vmatprep.subr.mxu0 0.0
      %732 = vmatpush1.msra.mxu0 0.0
      %733 = vmatprep.subr.mxu0 0.0
      %734 = vmatpush1.msra.mxu0 0.0
      %735 = vmatprep.subr.mxu0 0.0
      %736 = vmatpush1.msra.mxu0 0.0
      %737 = vmatprep.subr.mxu0 0.0
      %738 = vmatpush1.msra.mxu0 0.0
      %739 = vmatprep.subr.mxu0 0.0
      %740 = vmatpush1.msra.mxu0 0.0
      %741 = vmatprep.subr.mxu0 0.0
      %742 = vmatpush1.msra.mxu0 0.0
      %743 = vmatprep.subr.mxu0 0.0
      %744 = vmatpush1.msra.mxu0 0.0
      %745 = vmatprep.subr.mxu0 0.0
      %746 = vmatpush1.msra.mxu0 0.0
      %747 = vmatprep.subr.mxu0 0.0
      %748 = vmatpush1.msra.mxu0 0.0
      %749 = vmatprep.subr.mxu0 0.0
      %750 = vmatpush1.msra.mxu0 0.0
      %751 = vmatprep.subr.mxu0 0.0
      %752 = vmatpush1.msra.mxu0 0.0
      %753 = vmatprep.subr.mxu0 0.0
      %754 = vmatpush1.msra.mxu0 0.0
      %755 = vmatprep.subr.mxu0 0.0
      %756 = vmatpush1.msra.mxu0 0.0
      %757 = vmatprep.subr.mxu0 0.0
      %758 = vmatpush1.msra.mxu0 0.0
      %759 = vmatprep.subr.mxu0 0.0
      %760 = vmatpush1.msra.mxu0 0.0
      %761 = vmatprep.subr.mxu0 0.0
      %762 = vmatpush1.msra.mxu0 0.0
      %763 = vmatprep.mubr.f32.mxu0 0.0
      %764 = vmatmul.mubr.f32.gmra.mrb[0].mxu0 %v695
      %v765 = vpop.f32.mrb[0].mxu0
      %v766 = vadd.f32 0.0, %v765
      %v767 = vpop.f32.mrb[0].mxu0
      %768 = vdwg.mxu0
      %v769 = vadd.f32 %v676, %v766
      %v770 = vld [vmem:[#allocation2 + $0x4] sm:$0x7]
      %s771 = scalar_lea.vmem %s3, 6
      %v772 = vld [vmem:[%s771] sm:$0x1]
      %v774 = vlaneseq
      %v775 = vshrl.u32 %v774, 7
      %v776 = vsub.s32 0, %v775
      %v777 = vrot.slane %v772, %v776
      %778 = vrot.lane.b32.xlu0 %v777, 3
      %v779 = vpop.permute.xlu0 %778
      %v781 = vmul.f32 %v770, %v779
      %s782 = scalar_lea.vmem %s1, 24
      %v783 = vld [vmem:[%s782] sm:$0x7]
      %785 = vrot.lane.b32.xlu0 %v781, 125
      %v786 = vpop.permute.xlu0 %785
      %v788 = vsel %vm237, %v783, 0
      %v790 = vsel %vm241, %v786, 0
      %792 = vmatprep.subr.mxu0 0.0
      %793 = vmatpush1.msra.mxu0 %v790
      %794 = vmatprep.subr.mxu0 0.0
      %795 = vmatpush1.msra.mxu0 0.0
      %796 = vmatprep.subr.mxu0 0.0
      %797 = vmatpush1.msra.mxu0 0.0
      %798 = vmatprep.subr.mxu0 0.0
      %799 = vmatpush1.msra.mxu0 0.0
      %800 = vmatprep.subr.mxu0 0.0
      %801 = vmatpush1.msra.mxu0 0.0
      %802 = vmatprep.subr.mxu0 0.0
      %803 = vmatpush1.msra.mxu0 0.0
      %804 = vmatprep.subr.mxu0 0.0
      %805 = vmatpush1.msra.mxu0 0.0
      %806 = vmatprep.subr.mxu0 0.0
      %807 = vmatpush1.msra.mxu0 0.0
      %808 = vmatprep.subr.mxu0 0.0
      %809 = vmatpush1.msra.mxu0 0.0
      %810 = vmatprep.subr.mxu0 0.0
      %811 = vmatpush1.msra.mxu0 0.0
      %812 = vmatprep.subr.mxu0 0.0
      %813 = vmatpush1.msra.mxu0 0.0
      %814 = vmatprep.subr.mxu0 0.0
      %815 = vmatpush1.msra.mxu0 0.0
      %816 = vmatprep.subr.mxu0 0.0
      %817 = vmatpush1.msra.mxu0 0.0
      %818 = vmatprep.subr.mxu0 0.0
      %819 = vmatpush1.msra.mxu0 0.0
      %820 = vmatprep.subr.mxu0 0.0
      %821 = vmatpush1.msra.mxu0 0.0
      %822 = vmatprep.subr.mxu0 0.0
      %823 = vmatpush1.msra.mxu0 0.0
      %824 = vmatprep.subr.mxu0 0.0
      %825 = vmatpush1.msra.mxu0 0.0
      %826 = vmatprep.subr.mxu0 0.0
      %827 = vmatpush1.msra.mxu0 0.0
      %828 = vmatprep.subr.mxu0 0.0
      %829 = vmatpush1.msra.mxu0 0.0
      %830 = vmatprep.subr.mxu0 0.0
      %831 = vmatpush1.msra.mxu0 0.0
      %832 = vmatprep.subr.mxu0 0.0
      %833 = vmatpush1.msra.mxu0 0.0
      %834 = vmatprep.subr.mxu0 0.0
      %835 = vmatpush1.msra.mxu0 0.0
      %836 = vmatprep.subr.mxu0 0.0
      %837 = vmatpush1.msra.mxu0 0.0
      %838 = vmatprep.subr.mxu0 0.0
      %839 = vmatpush1.msra.mxu0 0.0
      %840 = vmatprep.subr.mxu0 0.0
      %841 = vmatpush1.msra.mxu0 0.0
      %842 = vmatprep.subr.mxu0 0.0
      %843 = vmatpush1.msra.mxu0 0.0
      %844 = vmatprep.subr.mxu0 0.0
      %845 = vmatpush1.msra.mxu0 0.0
      %846 = vmatprep.subr.mxu0 0.0
      %847 = vmatpush1.msra.mxu0 0.0
      %848 = vmatprep.subr.mxu0 0.0
      %849 = vmatpush1.msra.mxu0 0.0
      %850 = vmatprep.subr.mxu0 0.0
      %851 = vmatpush1.msra.mxu0 0.0
      %852 = vmatprep.subr.mxu0 0.0
      %853 = vmatpush1.msra.mxu0 0.0
      %854 = vmatprep.subr.mxu0 0.0
      %855 = vmatpush1.msra.mxu0 0.0
      %856 = vmatprep.mubr.f32.mxu0 0.0
      %857 = vmatmul.mubr.f32.gmra.mrb[0].mxu0 %v788
      %v858 = vpop.f32.mrb[0].mxu0
      %v859 = vadd.f32 0.0, %v858
      %v860 = vpop.f32.mrb[0].mxu0
      %861 = vdwg.mxu0
      %v862 = vadd.f32 %v769, %v859
      %v863 = vld [vmem:[#allocation2 + $0x4] sm:$0x7]
      %s864 = scalar_lea.vmem %s3, 7
      %v865 = vld [vmem:[%s864] sm:$0x1]
      %v867 = vlaneseq
      %v868 = vshrl.u32 %v867, 7
      %v869 = vsub.s32 0, %v868
      %v870 = vrot.slane %v865, %v869
      %871 = vrot.lane.b32.xlu0 %v870, 4
      %v872 = vpop.permute.xlu0 %871
      %v874 = vmul.f32 %v863, %v872
      %s875 = scalar_lea.vmem %s1, 28
      %v876 = vld [vmem:[%s875] sm:$0x7]
      %878 = vrot.lane.b32.xlu0 %v874, 124
      %v879 = vpop.permute.xlu0 %878
      %v881 = vsel %vm237, %v876, 0
      %v883 = vsel %vm241, %v879, 0
      %885 = vmatprep.subr.mxu0 0.0
      %886 = vmatpush1.msra.mxu0 %v883
      %887 = vmatprep.subr.mxu0 0.0
      %888 = vmatpush1.msra.mxu0 0.0
      %889 = vmatprep.subr.mxu0 0.0
      %890 = vmatpush1.msra.mxu0 0.0
      %891 = vmatprep.subr.mxu0 0.0
      %892 = vmatpush1.msra.mxu0 0.0
      %893 = vmatprep.subr.mxu0 0.0
      %894 = vmatpush1.msra.mxu0 0.0
      %895 = vmatprep.subr.mxu0 0.0
      %896 = vmatpush1.msra.mxu0 0.0
      %897 = vmatprep.subr.mxu0 0.0
      %898 = vmatpush1.msra.mxu0 0.0
      %899 = vmatprep.subr.mxu0 0.0
      %900 = vmatpush1.msra.mxu0 0.0
      %901 = vmatprep.subr.mxu0 0.0
      %902 = vmatpush1.msra.mxu0 0.0
      %903 = vmatprep.subr.mxu0 0.0
      %904 = vmatpush1.msra.mxu0 0.0
      %905 = vmatprep.subr.mxu0 0.0
      %906 = vmatpush1.msra.mxu0 0.0
      %907 = vmatprep.subr.mxu0 0.0
      %908 = vmatpush1.msra.mxu0 0.0
      %909 = vmatprep.subr.mxu0 0.0
      %910 = vmatpush1.msra.mxu0 0.0
      %911 = vmatprep.subr.mxu0 0.0
      %912 = vmatpush1.msra.mxu0 0.0
      %913 = vmatprep.subr.mxu0 0.0
      %914 = vmatpush1.msra.mxu0 0.0
      %915 = vmatprep.subr.mxu0 0.0
      %916 = vmatpush1.msra.mxu0 0.0
      %917 = vmatprep.subr.mxu0 0.0
      %918 = vmatpush1.msra.mxu0 0.0
      %919 = vmatprep.subr.mxu0 0.0
      %920 = vmatpush1.msra.mxu0 0.0
      %921 = vmatprep.subr.mxu0 0.0
      %922 = vmatpush1.msra.mxu0 0.0
      %923 = vmatprep.subr.mxu0 0.0
      %924 = vmatpush1.msra.mxu0 0.0
      %925 = vmatprep.subr.mxu0 0.0
      %926 = vmatpush1.msra.mxu0 0.0
      %927 = vmatprep.subr.mxu0 0.0
      %928 = vmatpush1.msra.mxu0 0.0
      %929 = vmatprep.subr.mxu0 0.0
      %930 = vmatpush1.msra.mxu0 0.0
      %931 = vmatprep.subr.mxu0 0.0
      %932 = vmatpush1.msra.mxu0 0.0
      %933 = vmatprep.subr.mxu0 0.0
      %934 = vmatpush1.msra.mxu0 0.0
      %935 = vmatprep.subr.mxu0 0.0
      %936 = vmatpush1.msra.mxu0 0.0
      %937 = vmatprep.subr.mxu0 0.0
      %938 = vmatpush1.msra.mxu0 0.0
      %939 = vmatprep.subr.mxu0 0.0
      %940 = vmatpush1.msra.mxu0 0.0
      %941 = vmatprep.subr.mxu0 0.0
      %942 = vmatpush1.msra.mxu0 0.0
      %943 = vmatprep.subr.mxu0 0.0
      %944 = vmatpush1.msra.mxu0 0.0
      %945 = vmatprep.subr.mxu0 0.0
      %946 = vmatpush1.msra.mxu0 0.0
      %947 = vmatprep.subr.mxu0 0.0
      %948 = vmatpush1.msra.mxu0 0.0
      %949 = vmatprep.mubr.f32.mxu0 0.0
      %950 = vmatmul.mubr.f32.gmra.mrb[0].mxu0 %v881
      %v951 = vpop.f32.mrb[0].mxu0
      %v952 = vadd.f32 0.0, %v951
      %v953 = vpop.f32.mrb[0].mxu0
      %954 = vdwg.mxu0
      %v955 = vadd.f32 %v862, %v952
      %v956 = vld [vmem:[#allocation2 + $0x4] sm:$0x7]
      %s957 = scalar_lea.vmem %s3, 8
      %v958 = vld [vmem:[%s957] sm:$0x1]
      %v960 = vlaneseq
      %v961 = vshrl.u32 %v960, 7
      %v962 = vsub.s32 0, %v961
      %v963 = vrot.slane %v958, %v962
      %964 = vrot.lane.b32.xlu0 %v963, 5
      %v965 = vpop.permute.xlu0 %964
      %v967 = vmul.f32 %v956, %v965
      %s968 = scalar_lea.vmem %s1, 32
      %v969 = vld [vmem:[%s968] sm:$0x7]
      %971 = vrot.lane.b32.xlu0 %v967, 123
      %v972 = vpop.permute.xlu0 %971
      %v974 = vsel %vm237, %v969, 0
      %v976 = vsel %vm241, %v972, 0
      %978 = vmatprep.subr.mxu0 0.0
      %979 = vmatpush1.msra.mxu0 %v976
      %980 = vmatprep.subr.mxu0 0.0
      %981 = vmatpush1.msra.mxu0 0.0
      %982 = vmatprep.subr.mxu0 0.0
      %983 = vmatpush1.msra.mxu0 0.0
      %984 = vmatprep.subr.mxu0 0.0
      %985 = vmatpush1.msra.mxu0 0.0
      %986 = vmatprep.subr.mxu0 0.0
      %987 = vmatpush1.msra.mxu0 0.0
      %988 = vmatprep.subr.mxu0 0.0
      %989 = vmatpush1.msra.mxu0 0.0
      %990 = vmatprep.subr.mxu0 0.0
      %991 = vmatpush1.msra.mxu0 0.0
      %992 = vmatprep.subr.mxu0 0.0
      %993 = vmatpush1.msra.mxu0 0.0
      %994 = vmatprep.subr.mxu0 0.0
      %995 = vmatpush1.msra.mxu0 0.0
      %996 = vmatprep.subr.mxu0 0.0
      %997 = vmatpush1.msra.mxu0 0.0
      %998 = vmatprep.subr.mxu0 0.0
      %999 = vmatpush1.msra.mxu0 0.0
      %1000 = vmatprep.subr.mxu0 0.0
      %1001 = vmatpush1.msra.mxu0 0.0
      %1002 = vmatprep.subr.mxu0 0.0
      %1003 = vmatpush1.msra.mxu0 0.0
      %1004 = vmatprep.subr.mxu0 0.0
      %1005 = vmatpush1.msra.mxu0 0.0
      %1006 = vmatprep.subr.mxu0 0.0
      %1007 = vmatpush1.msra.mxu0 0.0
      %1008 = vmatprep.subr.mxu0 0.0
      %1009 = vmatpush1.msra.mxu0 0.0
      %1010 = vmatprep.subr.mxu0 0.0
      %1011 = vmatpush1.msra.mxu0 0.0
      %1012 = vmatprep.subr.mxu0 0.0
      %1013 = vmatpush1.msra.mxu0 0.0
      %1014 = vmatprep.subr.mxu0 0.0
      %1015 = vmatpush1.msra.mxu0 0.0
      %1016 = vmatprep.subr.mxu0 0.0
      %1017 = vmatpush1.msra.mxu0 0.0
      %1018 = vmatprep.subr.mxu0 0.0
      %1019 = vmatpush1.msra.mxu0 0.0
      %1020 = vmatprep.subr.mxu0 0.0
      %1021 = vmatpush1.msra.mxu0 0.0
      %1022 = vmatprep.subr.mxu0 0.0
      %1023 = vmatpush1.msra.mxu0 0.0
      %1024 = vmatprep.subr.mxu0 0.0
      %1025 = vmatpush1.msra.mxu0 0.0
      %1026 = vmatprep.subr.mxu0 0.0
      %1027 = vmatpush1.msra.mxu0 0.0
      %1028 = vmatprep.subr.mxu0 0.0
      %1029 = vmatpush1.msra.mxu0 0.0
      %1030 = vmatprep.subr.mxu0 0.0
      %1031 = vmatpush1.msra.mxu0 0.0
      %1032 = vmatprep.subr.mxu0 0.0
      %1033 = vmatpush1.msra.mxu0 0.0
      %1034 = vmatprep.subr.mxu0 0.0
      %1035 = vmatpush1.msra.mxu0 0.0
      %1036 = vmatprep.subr.mxu0 0.0
      %1037 = vmatpush1.msra.mxu0 0.0
      %1038 = vmatprep.subr.mxu0 0.0
      %1039 = vmatpush1.msra.mxu0 0.0
      %1040 = vmatprep.subr.mxu0 0.0
      %1041 = vmatpush1.msra.mxu0 0.0
      %1042 = vmatprep.mubr.f32.mxu0 0.0
      %1043 = vmatmul.mubr.f32.gmra.mrb[0].mxu0 %v974
      %v1044 = vpop.f32.mrb[0].mxu0
      %v1045 = vadd.f32 0.0, %v1044
      %v1046 = vpop.f32.mrb[0].mxu0
      %1047 = vdwg.mxu0
      %v1048 = vadd.f32 %v955, %v1045
      %v1049 = vld [vmem:[%s2] sm:$0x7]
      %1051 = vset.pattern.permute.xlu0 0
      %1052 = vperm.xlu0 %1051, %v1049
      %v1053 = vpop.permute.xlu0 %1052
      %v1055 = vadd.f32 %v1048, %v1053
      %v1056 = vmax.f32 %v1055, 0.0
      %v1057 = vadd.f32 %v1056, %v193
      %1058 = vst.msk [vmem:[%s192] sm:$0x7] %vm195, %v1057
      %p1059 = scmp.lt.s32.totalorder %s15, 1
      %s1060 = scalar_select %p1059, %s15, 1
      %s1061 = smul.addr %s1060, 4
      %s1062 = scalar_lea.vmem %s4, %s1061
      // Predicated region
      $region37: #{model_forward.7} parent=35 // pred_check
        %p1063 = pneg %p122
      $region38: #{model_forward.7} parent=35 // pred_check_branch
        %1065 = sbr.rel (%p1063) target = $region40
      $region39: #{model_forward.7} parent=35 // pred_region
        _
      $region40: #{model_forward.7} parent=35 // pred_fallthru
        _
    $region36: #{model_forward.7} parent=5 // pred_fallthru
      _
    %p1066 = scmp.le.s32.totalorder 2, %s10
    // Predicated region
    $region41: #{model_forward.7} parent=5 // pred_check
      %p1067 = pneg %p1066
    $region42: #{model_forward.7} parent=5 // pred_check_branch
      %1069 = sbr.rel (%p1067) target = $region44
    $region43: #{model_forward.7} parent=5 // pred_region
      %s1070 = ssub.s32 %s10, 2
      // Predicated region
      $region45: #{model_forward.7} parent=43 // pred_check
        %p1071 = pneg %p128
      $region46: #{model_forward.7} parent=43 // pred_check_branch
        %1073 = sbr.rel (%p1071) target = $region48
      $region47: #{model_forward.7} parent=43 // pred_region
        %p1074 = scmp.lt.s32.totalorder %s16, 1
        %s1075 = scalar_select %p1074, %s16, 1
        %s1076 = smul.addr %s1075, 4
        %s1077 = scalar_lea.vmem %s4, %s1076
      $region48: #{model_forward.7} parent=43 // pred_fallthru
        _
    $region44: #{model_forward.7} parent=5 // pred_fallthru
      _
  $region6: #{model_forward.7} parent=0 // loop_footer
    %s14 = sadd.s32 1, %s10
  $region7: #{model_forward.7} parent=0 // loop_footer_branch
    %9 = sbr.rel target = $region3
  $region8: #{model_forward.7} parent=0 // loop_exit
    _

// kernel: model_forward.8
$region0: #{model_forward.8}
  #allocation0 [shape = 'u32[]', space=smem, size = 0x4, offset = 0x4, fixed_abs, tag = 'smem constant byte address 0x4 - core index']
  #allocation1 [shape = 'u32[144,128]{1,0:T(1,128)}', space=vmem, size = 0x12000, scoped, tag = 'internal scratch']
  #allocation2 [shape = 'f32[3,320]{1,0:T(4,128)}', space=vmem, size = 0x1800, scoped, tag = 'scratch operand']
  %s0 = inlined_call_operand.vmem [shape: f32[2,3,16], index: 0, kind: input, shape index: {}]
  %s1 = inlined_call_operand.vmem [shape: f32[16,64], index: 1, kind: input, shape index: {}]
  %s2 = inlined_call_operand.vmem [shape: f32[2,3,64], index: 2, kind: input, shape index: {}]
  %s3 = inlined_call_operand.vmem [shape: f32[9,3,3], index: 3, kind: input, shape index: {}]
  %s4 = inlined_call_operand.vmem [shape: f32[3,1], index: 4, kind: input, shape index: {}]
  %s5 = inlined_call_operand.vmem [shape: f32[9,1,64], index: 5, kind: input, shape index: {}]
  %s6 = inlined_call_operand.vmem [shape: f32[2,3,64], index: 6, kind: output, shape index: {}]
  %s7 = sld [smem:[#allocation0]]
  $region57: #{model_forward.8} parent=0
    _
  %s9 = ssub.s32 1, %s7
  %s10 = scalar_select 0, %s9, %s7
  loop: start=0, step=1, limit=4
  $region2: #{model_forward.8} parent=0 // loop_pre_header
    _
  $region3: #{model_forward.8} parent=0 // loop_header
    %s12 = sphi 0, %s16
    %p13 = scmp.ge.s32.totalorder %s12, 4
    %s22 = sphi 0, %s24
    %s25 = sphi 0, %s22
    %s26 = sphi 0, %s25
    %s42 = sphi 0, %s26
    %s46 = sphi 0, %s46
    %s48 = sphi 0, %s46
    %s49 = sphi 0, %s48
    %s63 = sphi 0, %s49
    %s69 = sphi 0, %s71
    %s72 = sphi 0, %s69
    %s73 = sphi 0, %s72
    %s89 = sphi 0, %s73
    %s93 = sphi 0, %s93
    %s95 = sphi 0, %s93
    %s96 = sphi 0, %s95
    %s110 = sphi 0, %s96
    %s114 = sphi 0, %s114
    %s116 = sphi 0, %s114
    %s117 = sphi 0, %s116
    %s131 = sphi 0, %s117
    %s135 = sphi 0, %s135
    %s137 = sphi 0, %s135
    %s138 = sphi 0, %s137
    %s152 = sphi 0, %s138
    %s158 = sphi 0, %s160
    %s161 = sphi 0, %s158
    %s162 = sphi 0, %s161
    %s178 = sphi 0, %s162
  $region4: #{model_forward.8} parent=0 // loop_header_branch
    %15 = sbr.rel (%p13) target = $region8
  $region5: #{model_forward.8} parent=0 // loop_body
    %s17 = ssub.s32 %s12, 1
    %s18 = ssub.s32 %s12, 2
    %s19 = sadd.s32 %s12, 1
    %s20 = ssub.s32 %s12, %s19
    %p21 = scmp.eq.s32.totalorder %s20, 0
    %s23 = sadd.s32 %s22, 1
    %s24 = scalar_select %p21, %s22, %s23
    %p27 = pneg %p21
    %p28 = scmp.eq.s32.totalorder %s12, 1
    %p29 = por %p27, %p28
    %p30 = scmp.ne.s32.totalorder %s22, %s25
    %p31 = scmp.eq.s32.totalorder %s12, 0
    %p32 = por %p30, %p31
    %p33 = scmp.ne.s32.totalorder %s22, %s25
    %p34 = scmp.eq.s32.totalorder %s17, 1
    %p35 = por %p33, %p34
    %p36 = scmp.ne.s32.totalorder %s25, %s26
    %p37 = scmp.eq.s32.totalorder %s17, 0
    %p38 = por %p36, %p37
    %p39 = scmp.ne.s32.totalorder %s25, %s26
    %p40 = scmp.eq.s32.totalorder %s18, 1
    %p41 = por %p39, %p40
    %p43 = scmp.ne.s32.totalorder %s26, %s42
    %p44 = scmp.eq.s32.totalorder %s18, 0
    %p45 = por %p43, %p44
    %s47 = sadd.s32 %s46, 1
    %p50 = scmp.eq.s32.totalorder %s12, 1
    %p51 = scmp.ne.s32.totalorder %s46, %s48
    %p52 = scmp.eq.s32.totalorder %s12, 0
    %p53 = por %p51, %p52
    %p54 = scmp.ne.s32.totalorder %s46, %s48
    %p55 = scmp.eq.s32.totalorder %s17, 1
    %p56 = por %p54, %p55
    %p57 = scmp.ne.s32.totalorder %s48, %s49
    %p58 = scmp.eq.s32.totalorder %s17, 0
    %p59 = por %p57, %p58
    %p60 = scmp.ne.s32.totalorder %s48, %s49
    %p61 = scmp.eq.s32.totalorder %s18, 1
    %p62 = por %p60, %p61
    %p64 = scmp.ne.s32.totalorder %s49, %s63
    %p65 = scmp.eq.s32.totalorder %s18, 0
    %p66 = por %p64, %p65
    %s67 = ssub.s32 %s12, %s19
    %p68 = scmp.eq.s32.totalorder %s67, 0
    %s70 = sadd.s32 %s69, 1
    %s71 = scalar_select %p68, %s69, %s70
    %p74 = pneg %p68
    %p75 = scmp.eq.s32.totalorder %s12, 1
    %p76 = por %p74, %p75
    %p77 = scmp.ne.s32.totalorder %s69, %s72
    %p78 = scmp.eq.s32.totalorder %s12, 0
    %p79 = por %p77, %p78
    %p80 = scmp.ne.s32.totalorder %s69, %s72
    %p81 = scmp.eq.s32.totalorder %s17, 1
    %p82 = por %p80, %p81
    %p83 = scmp.ne.s32.totalorder %s72, %s73
    %p84 = scmp.eq.s32.totalorder %s17, 0
    %p85 = por %p83, %p84
    %p86 = scmp.ne.s32.totalorder %s72, %s73
    %p87 = scmp.eq.s32.totalorder %s18, 1
    %p88 = por %p86, %p87
    %p90 = scmp.ne.s32.totalorder %s73, %s89
    %p91 = scmp.eq.s32.totalorder %s18, 0
    %p92 = por %p90, %p91
    %s94 = sadd.s32 %s93, 1
    %p97 = scmp.eq.s32.totalorder %s12, 1
    %p98 = scmp.ne.s32.totalorder %s93, %s95
    %p99 = scmp.eq.s32.totalorder %s12, 0
    %p100 = por %p98, %p99
    %p101 = scmp.ne.s32.totalorder %s93, %s95
    %p102 = scmp.eq.s32.totalorder %s17, 1
    %p103 = por %p101, %p102
    %p104 = scmp.ne.s32.totalorder %s95, %s96
    %p105 = scmp.eq.s32.totalorder %s17, 0
    %p106 = por %p104, %p105
    %p107 = scmp.ne.s32.totalorder %s95, %s96
    %p108 = scmp.eq.s32.totalorder %s18, 1
    %p109 = por %p107, %p108
    %p111 = scmp.ne.s32.totalorder %s96, %s110
    %p112 = scmp.eq.s32.totalorder %s18, 0
    %p113 = por %p111, %p112
    %s115 = sadd.s32 %s114, 1
    %p118 = scmp.eq.s32.totalorder %s12, 1
    %p119 = scmp.ne.s32.totalorder %s114, %s116
    %p120 = scmp.eq.s32.totalorder %s12, 0
    %p121 = por %p119, %p120
    %p122 = scmp.ne.s32.totalorder %s114, %s116
    %p123 = scmp.eq.s32.totalorder %s17, 1
    %p124 = por %p122, %p123
    %p125 = scmp.ne.s32.totalorder %s116, %s117
    %p126 = scmp.eq.s32.totalorder %s17, 0
    %p127 = por %p125, %p126
    %p128 = scmp.ne.s32.totalorder %s116, %s117
    %p129 = scmp.eq.s32.totalorder %s18, 1
    %p130 = por %p128, %p129
    %p132 = scmp.ne.s32.totalorder %s117, %s131
    %p133 = scmp.eq.s32.totalorder %s18, 0
    %p134 = por %p132, %p133
    %s136 = sadd.s32 %s135, 1
    %p139 = scmp.eq.s32.totalorder %s12, 1
    %p140 = scmp.ne.s32.totalorder %s135, %s137
    %p141 = scmp.eq.s32.totalorder %s12, 0
    %p142 = por %p140, %p141
    %p143 = scmp.ne.s32.totalorder %s135, %s137
    %p144 = scmp.eq.s32.totalorder %s17, 1
    %p145 = por %p143, %p144
    %p146 = scmp.ne.s32.totalorder %s137, %s138
    %p147 = scmp.eq.s32.totalorder %s17, 0
    %p148 = por %p146, %p147
    %p149 = scmp.ne.s32.totalorder %s137, %s138
    %p150 = scmp.eq.s32.totalorder %s18, 1
    %p151 = por %p149, %p150
    %p153 = scmp.ne.s32.totalorder %s138, %s152
    %p154 = scmp.eq.s32.totalorder %s18, 0
    %p155 = por %p153, %p154
    %s156 = ssub.s32 %s12, %s19
    %p157 = scmp.eq.s32.totalorder %s156, 0
    %s159 = sadd.s32 %s158, 1
    %s160 = scalar_select %p157, %s158, %s159
    %p163 = pneg %p157
    %p164 = scmp.eq.s32.totalorder %s12, 1
    %p165 = por %p163, %p164
    %p166 = scmp.ne.s32.totalorder %s158, %s161
    %p167 = scmp.eq.s32.totalorder %s12, 0
    %p168 = por %p166, %p167
    %p169 = scmp.ne.s32.totalorder %s158, %s161
    %p170 = scmp.eq.s32.totalorder %s17, 1
    %p171 = por %p169, %p170
    %p172 = scmp.ne.s32.totalorder %s161, %s162
    %p173 = scmp.eq.s32.totalorder %s17, 0
    %p174 = por %p172, %p173
    %p175 = scmp.ne.s32.totalorder %s161, %s162
    %p176 = scmp.eq.s32.totalorder %s18, 1
    %p177 = por %p175, %p176
    %p179 = scmp.ne.s32.totalorder %s162, %s178
    %p180 = scmp.eq.s32.totalorder %s18, 0
    %p181 = por %p179, %p180
    %p182 = scmp.le.s32.totalorder 1, %s12
    %p183 = scmp.lt.s32.totalorder %s12, 3
    %p184 = pnand %p182, %p183
    %p185 = pneg %p184
    // Predicated region
    $region9: #{model_forward.8} parent=5 // pred_check
      _
    $region10: #{model_forward.8} parent=5 // pred_check_branch
      %187 = sbr.rel (%p184) target = $region12
    $region11: #{model_forward.8} parent=5 // pred_region
      %s188 = ssub.s32 %s12, 1
      // Predicated region
      $region13: #{model_forward.8} parent=11 // pred_check
        %p189 = pneg %p59
      $region14: #{model_forward.8} parent=11 // pred_check_branch
        %191 = sbr.rel (%p189) target = $region16
      $region15: #{model_forward.8} parent=11 // pred_region
        _
      $region16: #{model_forward.8} parent=11 // pred_fallthru
        _
      // Predicated region
      $region17: #{model_forward.8} parent=11 // pred_check
        %p192 = pneg %p106
      $region18: #{model_forward.8} parent=11 // pred_check_branch
        %194 = sbr.rel (%p192) target = $region20
      $region19: #{model_forward.8} parent=11 // pred_region
        _
      $region20: #{model_forward.8} parent=11 // pred_fallthru
        _
      // Predicated region
      $region21: #{model_forward.8} parent=11 // pred_check
        %p195 = pneg %p127
      $region22: #{model_forward.8} parent=11 // pred_check_branch
        %197 = sbr.rel (%p195) target = $region24
      $region23: #{model_forward.8} parent=11 // pred_region
        _
      $region24: #{model_forward.8} parent=11 // pred_fallthru
        _
      // Predicated region
      $region25: #{model_forward.8} parent=11 // pred_check
        %p198 = pneg %p148
      $region26: #{model_forward.8} parent=11 // pred_check_branch
        %200 = sbr.rel (%p198) target = $region28
      $region27: #{model_forward.8} parent=11 // pred_region
        _
      $region28: #{model_forward.8} parent=11 // pred_fallthru
        _
    $region12: #{model_forward.8} parent=5 // pred_fallthru
      _
    %p201 = scmp.lt.s32.totalorder %s12, 2
    // Predicated region
    $region29: #{model_forward.8} parent=5 // pred_check
      %p202 = pneg %p201
    $region30: #{model_forward.8} parent=5 // pred_check_branch
      %204 = sbr.rel (%p202) target = $region32
    $region31: #{model_forward.8} parent=5 // pred_region
      // Predicated region
      $region33: #{model_forward.8} parent=31 // pred_check
        %p205 = pneg %p32
      $region34: #{model_forward.8} parent=31 // pred_check_branch
        %207 = sbr.rel (%p205) target = $region36
      $region35: #{model_forward.8} parent=31 // pred_region
        %p208 = scmp.lt.s32.totalorder %s12, 1
        %s209 = scalar_select %p208, %s12, 1
        %s210 = smul.addr %s209, 4
        %s211 = scalar_lea.vmem %s0, %s210
      $region36: #{model_forward.8} parent=31 // pred_fallthru
        _
      // Predicated region
      $region37: #{model_forward.8} parent=31 // pred_check
        %p212 = pneg %p79
      $region38: #{model_forward.8} parent=31 // pred_check_branch
        %214 = sbr.rel (%p212) target = $region40
      $region39: #{model_forward.8} parent=31 // pred_region
        %p215 = scmp.lt.s32.totalorder %s12, 1
        %s216 = scalar_select %p215, %s12, 1
        %s217 = smul.addr %s216, 4
        %s218 = scalar_lea.vmem %s2, %s217
      $region40: #{model_forward.8} parent=31 // pred_fallthru
        _
    $region32: #{model_forward.8} parent=5 // pred_fallthru
      _
    %p219 = scmp.le.s32.totalorder 1, %s12
    %p220 = scmp.lt.s32.totalorder %s12, 3
    %p221 = pnand %p219, %p220
    %p222 = pneg %p221
    // Predicated region
    $region41: #{model_forward.8} parent=5 // pred_check
      _
    $region42: #{model_forward.8} parent=5 // pred_check_branch
      %224 = sbr.rel (%p221) target = $region44
    $region43: #{model_forward.8} parent=5 // pred_region
      %s225 = ssub.s32 %s12, 1
      %p226 = scmp.lt.s32.totalorder %s17, 1
      %s227 = scalar_select %p226, %s17, 1
      %s228 = smul.addr %s227, 4
      %s229 = scalar_lea.vmem %s0, %s228
      %p230 = pneg %p38
      %p231 = pneg %p35
      %p232 = pneg %p59
      %p233 = pneg %p56
      %p234 = scmp.lt.s32.totalorder %s17, 1
      %s235 = scalar_select %p234, %s17, 1
      %s236 = smul.addr %s235, 4
      %s237 = scalar_lea.vmem %s2, %s236
      %p238 = pneg %p85
      %p239 = pneg %p82
      %p240 = pneg %p106
      %p241 = pneg %p103
      %p242 = pneg %p127
      %p243 = pneg %p124
      %p244 = pneg %p148
      %p245 = pneg %p145
      %p246 = pneg %p174
      %p247 = pneg %p171
      %p248 = scmp.lt.s32.totalorder %s17, 1
      %s249 = scalar_select %p248, %s17, 1
      %s250 = smul.addr %s249, 4
      %s251 = scalar_lea.vmem %s6, %s250
      %p252 = scmp.lt.s32.totalorder %s17, 1
      %s253 = scalar_select %p252, %s17, 1
      %s254 = smul.addr %s253, 4
      %s255 = scalar_lea.vmem %s0, %s254
      %p256 = scmp.lt.s32.totalorder %s17, 1
      %s257 = scalar_select %p256, %s17, 1
      %s258 = smul.addr %s257, 4
      %s259 = scalar_lea.vmem %s2, %s258
      %p260 = scmp.lt.s32.totalorder %s17, 1
      %s261 = scalar_select %p260, %s17, 1
      %s262 = smul.addr %s261, 4
      %s263 = scalar_lea.vmem %s6, %s262
      %v264 = vld [vmem:[%s255] sm:$0x7]
      %v265 = vld [vmem:[%s1] sm:$0xff]
      %v266 = vld [vmem:[%s1 + $0x8] sm:$0xff]
      %v267 = vld [vmem:[%s259] sm:$0x7]
      %vm268 = vcmask 130048
      %v270 = vsel %vm268, %v264, 0
      %272 = vmatprep.subr.mxu0 0.0
      %273 = vmatpush1.msra.mxu0 %v265
      %274 = vmatprep.subr.mxu0 0.0
      %275 = vmatpush1.msra.mxu0 %v266
      %276 = vmatprep.subr.mxu0 0.0
      %277 = vmatpush1.msra.mxu0 0.0
      %278 = vmatprep.subr.mxu0 0.0
      %279 = vmatpush1.msra.mxu0 0.0
      %280 = vmatprep.subr.mxu0 0.0
      %281 = vmatpush1.msra.mxu0 0.0
      %282 = vmatprep.subr.mxu0 0.0
      %283 = vmatpush1.msra.mxu0 0.0
      %284 = vmatprep.subr.mxu0 0.0
      %285 = vmatpush1.msra.mxu0 0.0
      %286 = vmatprep.subr.mxu0 0.0
      %287 = vmatpush1.msra.mxu0 0.0
      %288 = vmatprep.subr.mxu0 0.0
      %289 = vmatpush1.msra.mxu0 0.0
      %290 = vmatprep.subr.mxu0 0.0
      %291 = vmatpush1.msra.mxu0 0.0
      %292 = vmatprep.subr.mxu0 0.0
      %293 = vmatpush1.msra.mxu0 0.0
      %294 = vmatprep.subr.mxu0 0.0
      %295 = vmatpush1.msra.mxu0 0.0
      %296 = vmatprep.subr.mxu0 0.0
      %297 = vmatpush1.msra.mxu0 0.0
      %298 = vmatprep.subr.mxu0 0.0
      %299 = vmatpush1.msra.mxu0 0.0
      %300 = vmatprep.subr.mxu0 0.0
      %301 = vmatpush1.msra.mxu0 0.0
      %302 = vmatprep.subr.mxu0 0.0
      %303 = vmatpush1.msra.mxu0 0.0
      %304 = vmatprep.subr.mxu0 0.0
      %305 = vmatpush1.msra.mxu0 0.0
      %306 = vmatprep.subr.mxu0 0.0
      %307 = vmatpush1.msra.mxu0 0.0
      %308 = vmatprep.subr.mxu0 0.0
      %309 = vmatpush1.msra.mxu0 0.0
      %310 = vmatprep.subr.mxu0 0.0
      %311 = vmatpush1.msra.mxu0 0.0
      %312 = vmatprep.subr.mxu0 0.0
      %313 = vmatpush1.msra.mxu0 0.0
      %314 = vmatprep.subr.mxu0 0.0
      %315 = vmatpush1.msra.mxu0 0.0
      %316 = vmatprep.subr.mxu0 0.0
      %317 = vmatpush1.msra.mxu0 0.0
      %318 = vmatprep.subr.mxu0 0.0
      %319 = vmatpush1.msra.mxu0 0.0
      %320 = vmatprep.subr.mxu0 0.0
      %321 = vmatpush1.msra.mxu0 0.0
      %322 = vmatprep.subr.mxu0 0.0
      %323 = vmatpush1.msra.mxu0 0.0
      %324 = vmatprep.subr.mxu0 0.0
      %325 = vmatpush1.msra.mxu0 0.0
      %326 = vmatprep.subr.mxu0 0.0
      %327 = vmatpush1.msra.mxu0 0.0
      %328 = vmatprep.subr.mxu0 0.0
      %329 = vmatpush1.msra.mxu0 0.0
      %330 = vmatprep.subr.mxu0 0.0
      %331 = vmatpush1.msra.mxu0 0.0
      %332 = vmatprep.subr.mxu0 0.0
      %333 = vmatpush1.msra.mxu0 0.0
      %334 = vmatprep.subr.mxu0 0.0
      %335 = vmatpush1.msra.mxu0 0.0
      %336 = vmatprep.mubr.f32.mxu0 0.0
      %337 = vmatmul.mubr.f32.gmra.mrb[0].mxu0 %v270
      %v338 = vpop.f32.mrb[0].mxu0
      %v339 = vadd.f32 %v267, %v338
      %v340 = vpop.f32.mrb[0].mxu0
      %341 = vdwg.mxu0
      %342 = vst [vmem:[#allocation2] sm:$0x77] 0.0
      %vm343 = vcmask 518144
      %344 = vst.msk [vmem:[#allocation2 + $0x8] sm:$0x7] %vm343, 0.0
      %345 = vst.msk [vmem:[#allocation2 + $0x4] sm:$0x7] %vm343, %v339
      %v346 = vld [vmem:[#allocation2] sm:$0x77]
      %v347 = vld [vmem:[%s5] sm:$0x1]
      %v349 = vlaneseq
      %v350 = vshrl.u32 %v349, 7
      %v351 = vsub.s32 0, %v350
      %v352 = vrot.slane %v347, %v351
      %353 = vrot.lane.b32.xlu0 %v352, 119
      %v354 = vpop.permute.xlu0 %353
      %v355 = vrot.slane %v354, 4
      %vm356 = vcmask 973824
      %v357 = vsel %vm356, %v355, %v354
      %v359 = vmul.f32 %v346, %v357
      %v360 = vld [vmem:[%s3] sm:$0x7]
      %s361 = scalar_lea.vmem %s5, 1
      %v362 = vld [vmem:[%s361] sm:$0x1]
      %v364 = vlaneseq
      %v365 = vshrl.u32 %v364, 7
      %v366 = vsub.s32 0, %v365
      %v367 = vrot.slane %v362, %v366
      %368 = vrot.lane.b32.xlu0 %v367, 120
      %v369 = vpop.permute.xlu0 %368
      %v370 = vrot.slane %v369, 4
      %vm371 = vcmask 982016
      %v372 = vsel %vm371, %v370, %v369
      %v374 = vmul.f32 %v346, %v372
      %s375 = scalar_lea.vmem %s3, 4
      %v376 = vld [vmem:[%s375] sm:$0x7]
      %v378 = vcombine.high %v374, %v374
      %379 = vrot.lane.b32.xlu0 %v374, 8
      %v380 = vpop.permute.xlu0 %379
      %381 = vrot.lane.b32.xlu0 %v378, 8
      %v382 = vpop.permute.xlu0 %381
      %vm383 = vcmask 64512
      %v384 = vsel %vm383, %v380, %v382
      %vm385 = vcmask 23552
      %v387 = vsel %vm385, %v376, 0
      %vm389 = vcmask 1042432
      %v390 = vsel %vm389, %v384, 0
      %392 = vmatprep.subr.mxu0 0.0
      %393 = vmatpush1.msra.mxu0 %v390
      %394 = vmatprep.subr.mxu0 0.0
      %395 = vmatpush1.msra.mxu0 0.0
      %396 = vmatprep.subr.mxu0 0.0
      %397 = vmatpush1.msra.mxu0 0.0
      %398 = vmatprep.subr.mxu0 0.0
      %399 = vmatpush1.msra.mxu0 0.0
      %400 = vmatprep.subr.mxu0 0.0
      %401 = vmatpush1.msra.mxu0 0.0
      %402 = vmatprep.subr.mxu0 0.0
      %403 = vmatpush1.msra.mxu0 0.0
      %404 = vmatprep.subr.mxu0 0.0
      %405 = vmatpush1.msra.mxu0 0.0
      %406 = vmatprep.subr.mxu0 0.0
      %407 = vmatpush1.msra.mxu0 0.0
      %408 = vmatprep.subr.mxu0 0.0
      %409 = vmatpush1.msra.mxu0 0.0
      %410 = vmatprep.subr.mxu0 0.0
      %411 = vmatpush1.msra.mxu0 0.0
      %412 = vmatprep.subr.mxu0 0.0
      %413 = vmatpush1.msra.mxu0 0.0
      %414 = vmatprep.subr.mxu0 0.0
      %415 = vmatpush1.msra.mxu0 0.0
      %416 = vmatprep.subr.mxu0 0.0
      %417 = vmatpush1.msra.mxu0 0.0
      %418 = vmatprep.subr.mxu0 0.0
      %419 = vmatpush1.msra.mxu0 0.0
      %420 = vmatprep.subr.mxu0 0.0
      %421 = vmatpush1.msra.mxu0 0.0
      %422 = vmatprep.subr.mxu0 0.0
      %423 = vmatpush1.msra.mxu0 0.0
      %424 = vmatprep.subr.mxu0 0.0
      %425 = vmatpush1.msra.mxu0 0.0
      %426 = vmatprep.subr.mxu0 0.0
      %427 = vmatpush1.msra.mxu0 0.0
      %428 = vmatprep.subr.mxu0 0.0
      %429 = vmatpush1.msra.mxu0 0.0
      %430 = vmatprep.subr.mxu0 0.0
      %431 = vmatpush1.msra.mxu0 0.0
      %432 = vmatprep.subr.mxu0 0.0
      %433 = vmatpush1.msra.mxu0 0.0
      %434 = vmatprep.subr.mxu0 0.0
      %435 = vmatpush1.msra.mxu0 0.0
      %436 = vmatprep.subr.mxu0 0.0
      %437 = vmatpush1.msra.mxu0 0.0
      %438 = vmatprep.subr.mxu0 0.0
      %439 = vmatpush1.msra.mxu0 0.0
      %440 = vmatprep.subr.mxu0 0.0
      %441 = vmatpush1.msra.mxu0 0.0
      %442 = vmatprep.subr.mxu0 0.0
      %443 = vmatpush1.msra.mxu0 0.0
      %444 = vmatprep.subr.mxu0 0.0
      %445 = vmatpush1.msra.mxu0 0.0
      %446 = vmatprep.subr.mxu0 0.0
      %447 = vmatpush1.msra.mxu0 0.0
      %448 = vmatprep.subr.mxu0 0.0
      %449 = vmatpush1.msra.mxu0 0.0
      %450 = vmatprep.subr.mxu0 0.0
      %451 = vmatpush1.msra.mxu0 0.0
      %452 = vmatprep.subr.mxu0 0.0
      %453 = vmatpush1.msra.mxu0 0.0
      %454 = vmatprep.subr.mxu0 0.0
      %455 = vmatpush1.msra.mxu0 0.0
      %456 = vmatprep.mubr.f32.mxu0 0.0
      %457 = vmatmul.mubr.f32.gmra.mrb[0].mxu0 %v387
      %v458 = vpop.f32.mrb[0].mxu0
      %v459 = vadd.f32 0.0, %v458
      %v460 = vpop.f32.mrb[0].mxu0
      %461 = vdwg.mxu0
      %v463 = vcombine.high %v359, %v359
      %464 = vrot.lane.b32.xlu0 %v359, 9
      %v465 = vpop.permute.xlu0 %464
      %466 = vrot.lane.b32.xlu0 %v463, 9
      %v467 = vpop.permute.xlu0 %466
      %vm468 = vcmask 72704
      %v469 = vsel %vm468, %v465, %v467
      %v471 = vsel %vm385, %v360, 0
      %v473 = vsel %vm389, %v469, 0
      %475 = vmatprep.subr.mxu0 0.0
      %476 = vmatpush1.msra.mxu0 %v473
      %477 = vmatprep.subr.mxu0 0.0
      %478 = vmatpush1.msra.mxu0 0.0
      %479 = vmatprep.subr.mxu0 0.0
      %480 = vmatpush1.msra.mxu0 0.0
      %481 = vmatprep.subr.mxu0 0.0
      %482 = vmatpush1.msra.mxu0 0.0
      %483 = vmatprep.subr.mxu0 0.0
      %484 = vmatpush1.msra.mxu0 0.0
      %485 = vmatprep.subr.mxu0 0.0
      %486 = vmatpush1.msra.mxu0 0.0
      %487 = vmatprep.subr.mxu0 0.0
      %488 = vmatpush1.msra.mxu0 0.0
      %489 = vmatprep.subr.mxu0 0.0
      %490 = vmatpush1.msra.mxu0 0.0
      %491 = vmatprep.subr.mxu0 0.0
      %492 = vmatpush1.msra.mxu0 0.0
      %493 = vmatprep.subr.mxu0 0.0
      %494 = vmatpush1.msra.mxu0 0.0
      %495 = vmatprep.subr.mxu0 0.0
      %496 = vmatpush1.msra.mxu0 0.0
      %497 = vmatprep.subr.mxu0 0.0
      %498 = vmatpush1.msra.mxu0 0.0
      %499 = vmatprep.subr.mxu0 0.0
      %500 = vmatpush1.msra.mxu0 0.0
      %501 = vmatprep.subr.mxu0 0.0
      %502 = vmatpush1.msra.mxu0 0.0
      %503 = vmatprep.subr.mxu0 0.0
      %504 = vmatpush1.msra.mxu0 0.0
      %505 = vmatprep.subr.mxu0 0.0
      %506 = vmatpush1.msra.mxu0 0.0
      %507 = vmatprep.subr.mxu0 0.0
      %508 = vmatpush1.msra.mxu0 0.0
      %509 = vmatprep.subr.mxu0 0.0
      %510 = vmatpush1.msra.mxu0 0.0
      %511 = vmatprep.subr.mxu0 0.0
      %512 = vmatpush1.msra.mxu0 0.0
      %513 = vmatprep.subr.mxu0 0.0
      %514 = vmatpush1.msra.mxu0 0.0
      %515 = vmatprep.subr.mxu0 0.0
      %516 = vmatpush1.msra.mxu0 0.0
      %517 = vmatprep.subr.mxu0 0.0
      %518 = vmatpush1.msra.mxu0 0.0
      %519 = vmatprep.subr.mxu0 0.0
      %520 = vmatpush1.msra.mxu0 0.0
      %521 = vmatprep.subr.mxu0 0.0
      %522 = vmatpush1.msra.mxu0 0.0
      %523 = vmatprep.subr.mxu0 0.0
      %524 = vmatpush1.msra.mxu0 0.0
      %525 = vmatprep.subr.mxu0 0.0
      %526 = vmatpush1.msra.mxu0 0.0
      %527 = vmatprep.subr.mxu0 0.0
      %528 = vmatpush1.msra.mxu0 0.0
      %529 = vmatprep.subr.mxu0 0.0
      %530 = vmatpush1.msra.mxu0 0.0
      %531 = vmatprep.subr.mxu0 0.0
      %532 = vmatpush1.msra.mxu0 0.0
      %533 = vmatprep.subr.mxu0 0.0
      %534 = vmatpush1.msra.mxu0 0.0
      %535 = vmatprep.subr.mxu0 0.0
      %536 = vmatpush1.msra.mxu0 0.0
      %537 = vmatprep.subr.mxu0 0.0
      %538 = vmatpush1.msra.mxu0 0.0
      %539 = vmatprep.mubr.f32.mxu0 0.0
      %540 = vmatmul.mubr.f32.gmra.mrb[0].mxu0 %v471
      %v541 = vpop.f32.mrb[0].mxu0
      %v542 = vadd.f32 %v459, %v541
      %v543 = vpop.f32.mrb[0].mxu0
      %544 = vdwg.mxu0
      %v545 = vld [vmem:[#allocation2] sm:$0x77]
      %s546 = scalar_lea.vmem %s5, 2
      %v547 = vld [vmem:[%s546] sm:$0x1]
      %v549 = vlaneseq
      %v550 = vshrl.u32 %v549, 7
      %v551 = vsub.s32 0, %v550
      %v552 = vrot.slane %v547, %v551
      %553 = vrot.lane.b32.xlu0 %v552, 121
      %v554 = vpop.permute.xlu0 %553
      %v555 = vrot.slane %v554, 4
      %vm556 = vcmask 990208
      %v557 = vsel %vm556, %v555, %v554
      %v559 = vmul.f32 %v545, %v557
      %s560 = scalar_lea.vmem %s3, 8
      %v561 = vld [vmem:[%s560] sm:$0x7]
      %v563 = vcombine.high %v559, %v559
      %564 = vrot.lane.b32.xlu0 %v559, 7
      %v565 = vpop.permute.xlu0 %564
      %566 = vrot.lane.b32.xlu0 %v563, 7
      %v567 = vpop.permute.xlu0 %566
      %vm568 = vcmask 56320
      %v569 = vsel %vm568, %v565, %v567
      %v571 = vsel %vm385, %v561, 0
      %v573 = vsel %vm389, %v569, 0
      %575 = vmatprep.subr.mxu0 0.0
      %576 = vmatpush1.msra.mxu0 %v573
      %577 = vmatprep.subr.mxu0 0.0
      %578 = vmatpush1.msra.mxu0 0.0
      %579 = vmatprep.subr.mxu0 0.0
      %580 = vmatpush1.msra.mxu0 0.0
      %581 = vmatprep.subr.mxu0 0.0
      %582 = vmatpush1.msra.mxu0 0.0
      %583 = vmatprep.subr.mxu0 0.0
      %584 = vmatpush1.msra.mxu0 0.0
      %585 = vmatprep.subr.mxu0 0.0
      %586 = vmatpush1.msra.mxu0 0.0
      %587 = vmatprep.subr.mxu0 0.0
      %588 = vmatpush1.msra.mxu0 0.0
      %589 = vmatprep.subr.mxu0 0.0
      %590 = vmatpush1.msra.mxu0 0.0
      %591 = vmatprep.subr.mxu0 0.0
      %592 = vmatpush1.msra.mxu0 0.0
      %593 = vmatprep.subr.mxu0 0.0
      %594 = vmatpush1.msra.mxu0 0.0
      %595 = vmatprep.subr.mxu0 0.0
      %596 = vmatpush1.msra.mxu0 0.0
      %597 = vmatprep.subr.mxu0 0.0
      %598 = vmatpush1.msra.mxu0 0.0
      %599 = vmatprep.subr.mxu0 0.0
      %600 = vmatpush1.msra.mxu0 0.0
      %601 = vmatprep.subr.mxu0 0.0
      %602 = vmatpush1.msra.mxu0 0.0
      %603 = vmatprep.subr.mxu0 0.0
      %604 = vmatpush1.msra.mxu0 0.0
      %605 = vmatprep.subr.mxu0 0.0
      %606 = vmatpush1.msra.mxu0 0.0
      %607 = vmatprep.subr.mxu0 0.0
      %608 = vmatpush1.msra.mxu0 0.0
      %609 = vmatprep.subr.mxu0 0.0
      %610 = vmatpush1.msra.mxu0 0.0
      %611 = vmatprep.subr.mxu0 0.0
      %612 = vmatpush1.msra.mxu0 0.0
      %613 = vmatprep.subr.mxu0 0.0
      %614 = vmatpush1.msra.mxu0 0.0
      %615 = vmatprep.subr.mxu0 0.0
      %616 = vmatpush1.msra.mxu0 0.0
      %617 = vmatprep.subr.mxu0 0.0
      %618 = vmatpush1.msra.mxu0 0.0
      %619 = vmatprep.subr.mxu0 0.0
      %620 = vmatpush1.msra.mxu0 0.0
      %621 = vmatprep.subr.mxu0 0.0
      %622 = vmatpush1.msra.mxu0 0.0
      %623 = vmatprep.subr.mxu0 0.0
      %624 = vmatpush1.msra.mxu0 0.0
      %625 = vmatprep.subr.mxu0 0.0
      %626 = vmatpush1.msra.mxu0 0.0
      %627 = vmatprep.subr.mxu0 0.0
      %628 = vmatpush1.msra.mxu0 0.0
      %629 = vmatprep.subr.mxu0 0.0
      %630 = vmatpush1.msra.mxu0 0.0
      %631 = vmatprep.subr.mxu0 0.0
      %632 = vmatpush1.msra.mxu0 0.0
      %633 = vmatprep.subr.mxu0 0.0
      %634 = vmatpush1.msra.mxu0 0.0
      %635 = vmatprep.subr.mxu0 0.0
      %636 = vmatpush1.msra.mxu0 0.0
      %637 = vmatprep.subr.mxu0 0.0
      %638 = vmatpush1.msra.mxu0 0.0
      %639 = vmatprep.mubr.f32.mxu0 0.0
      %640 = vmatmul.mubr.f32.gmra.mrb[0].mxu0 %v571
      %v641 = vpop.f32.mrb[0].mxu0
      %v642 = vadd.f32 0.0, %v641
      %v643 = vpop.f32.mrb[0].mxu0
      %644 = vdwg.mxu0
      %v645 = vadd.f32 %v542, %v642
      %v646 = vld [vmem:[#allocation2] sm:$0x77]
      %s647 = scalar_lea.vmem %s5, 3
      %v648 = vld [vmem:[%s647] sm:$0x1]
      %v650 = vlaneseq
      %v651 = vshrl.u32 %v650, 7
      %v652 = vsub.s32 0, %v651
      %v653 = vrot.slane %v648, %v652
      %654 = vrot.lane.b32.xlu0 %v653, 127
      %v655 = vpop.permute.xlu0 %654
      %v656 = vrot.slane %v655, 4
      %vm657 = vcmask 1039360
      %v658 = vsel %vm657, %v656, %v655
      %v660 = vmul.f32 %v646, %v658
      %s661 = scalar_lea.vmem %s3, 12
      %v662 = vld [vmem:[%s661] sm:$0x7]
      %v664 = vcombine.high %v660, %v660
      %665 = vrot.lane.b32.xlu0 %v660, 1
      %v666 = vpop.permute.xlu0 %665
      %667 = vrot.lane.b32.xlu0 %v664, 1
      %v668 = vpop.permute.xlu0 %667
      %vm669 = vcmask 7168
      %v670 = vsel %vm669, %v666, %v668
      %v672 = vsel %vm385, %v662, 0
      %v674 = vsel %vm389, %v670, 0
      %676 = vmatprep.subr.mxu0 0.0
      %677 = vmatpush1.msra.mxu0 %v674
      %678 = vmatprep.subr.mxu0 0.0
      %679 = vmatpush1.msra.mxu0 0.0
      %680 = vmatprep.subr.mxu0 0.0
      %681 = vmatpush1.msra.mxu0 0.0
      %682 = vmatprep.subr.mxu0 0.0
      %683 = vmatpush1.msra.mxu0 0.0
      %684 = vmatprep.subr.mxu0 0.0
      %685 = vmatpush1.msra.mxu0 0.0
      %686 = vmatprep.subr.mxu0 0.0
      %687 = vmatpush1.msra.mxu0 0.0
      %688 = vmatprep.subr.mxu0 0.0
      %689 = vmatpush1.msra.mxu0 0.0
      %690 = vmatprep.subr.mxu0 0.0
      %691 = vmatpush1.msra.mxu0 0.0
      %692 = vmatprep.subr.mxu0 0.0
      %693 = vmatpush1.msra.mxu0 0.0
      %694 = vmatprep.subr.mxu0 0.0
      %695 = vmatpush1.msra.mxu0 0.0
      %696 = vmatprep.subr.mxu0 0.0
      %697 = vmatpush1.msra.mxu0 0.0
      %698 = vmatprep.subr.mxu0 0.0
      %699 = vmatpush1.msra.mxu0 0.0
      %700 = vmatprep.subr.mxu0 0.0
      %701 = vmatpush1.msra.mxu0 0.0
      %702 = vmatprep.subr.mxu0 0.0
      %703 = vmatpush1.msra.mxu0 0.0
      %704 = vmatprep.subr.mxu0 0.0
      %705 = vmatpush1.msra.mxu0 0.0
      %706 = vmatprep.subr.mxu0 0.0
      %707 = vmatpush1.msra.mxu0 0.0
      %708 = vmatprep.subr.mxu0 0.0
      %709 = vmatpush1.msra.mxu0 0.0
      %710 = vmatprep.subr.mxu0 0.0
      %711 = vmatpush1.msra.mxu0 0.0
      %712 = vmatprep.subr.mxu0 0.0
      %713 = vmatpush1.msra.mxu0 0.0
      %714 = vmatprep.subr.mxu0 0.0
      %715 = vmatpush1.msra.mxu0 0.0
      %716 = vmatprep.subr.mxu0 0.0
      %717 = vmatpush1.msra.mxu0 0.0
      %718 = vmatprep.subr.mxu0 0.0
      %719 = vmatpush1.msra.mxu0 0.0
      %720 = vmatprep.subr.mxu0 0.0
      %721 = vmatpush1.msra.mxu0 0.0
      %722 = vmatprep.subr.mxu0 0.0
      %723 = vmatpush1.msra.mxu0 0.0
      %724 = vmatprep.subr.mxu0 0.0
      %725 = vmatpush1.msra.mxu0 0.0
      %726 = vmatprep.subr.mxu0 0.0
      %727 = vmatpush1.msra.mxu0 0.0
      %728 = vmatprep.subr.mxu0 0.0
      %729 = vmatpush1.msra.mxu0 0.0
      %730 = vmatprep.subr.mxu0 0.0
      %731 = vmatpush1.msra.mxu0 0.0
      %732 = vmatprep.subr.mxu0 0.0
      %733 = vmatpush1.msra.mxu0 0.0
      %734 = vmatprep.subr.mxu0 0.0
      %735 = vmatpush1.msra.mxu0 0.0
      %736 = vmatprep.subr.mxu0 0.0
      %737 = vmatpush1.msra.mxu0 0.0
      %738 = vmatprep.subr.mxu0 0.0
      %739 = vmatpush1.msra.mxu0 0.0
      %740 = vmatprep.mubr.f32.mxu0 0.0
      %741 = vmatmul.mubr.f32.gmra.mrb[0].mxu0 %v672
      %v742 = vpop.f32.mrb[0].mxu0
      %v743 = vadd.f32 0.0, %v742
      %v744 = vpop.f32.mrb[0].mxu0
      %745 = vdwg.mxu0
      %v746 = vadd.f32 %v645, %v743
      %s747 = scalar_lea.vmem %s3, 16
      %v748 = vld [vmem:[%s747] sm:$0x7]
      %v750 = vsel %vm385, %v748, 0
      %v753 = vsel %vm389, %v339, 0
      %755 = vmatprep.subr.mxu0 0.0
      %756 = vmatpush1.msra.mxu0 %v753
      %757 = vmatprep.subr.mxu0 0.0
      %758 = vmatpush1.msra.mxu0 0.0
      %759 = vmatprep.subr.mxu0 0.0
      %760 = vmatpush1.msra.mxu0 0.0
      %761 = vmatprep.subr.mxu0 0.0
      %762 = vmatpush1.msra.mxu0 0.0
      %763 = vmatprep.subr.mxu0 0.0
      %764 = vmatpush1.msra.mxu0 0.0
      %765 = vmatprep.subr.mxu0 0.0
      %766 = vmatpush1.msra.mxu0 0.0
      %767 = vmatprep.subr.mxu0 0.0
      %768 = vmatpush1.msra.mxu0 0.0
      %769 = vmatprep.subr.mxu0 0.0
      %770 = vmatpush1.msra.mxu0 0.0
      %771 = vmatprep.subr.mxu0 0.0
      %772 = vmatpush1.msra.mxu0 0.0
      %773 = vmatprep.subr.mxu0 0.0
      %774 = vmatpush1.msra.mxu0 0.0
      %775 = vmatprep.subr.mxu0 0.0
      %776 = vmatpush1.msra.mxu0 0.0
      %777 = vmatprep.subr.mxu0 0.0
      %778 = vmatpush1.msra.mxu0 0.0
      %779 = vmatprep.subr.mxu0 0.0
      %780 = vmatpush1.msra.mxu0 0.0
      %781 = vmatprep.subr.mxu0 0.0
      %782 = vmatpush1.msra.mxu0 0.0
      %783 = vmatprep.subr.mxu0 0.0
      %784 = vmatpush1.msra.mxu0 0.0
      %785 = vmatprep.subr.mxu0 0.0
      %786 = vmatpush1.msra.mxu0 0.0
      %787 = vmatprep.subr.mxu0 0.0
      %788 = vmatpush1.msra.mxu0 0.0
      %789 = vmatprep.subr.mxu0 0.0
      %790 = vmatpush1.msra.mxu0 0.0
      %791 = vmatprep.subr.mxu0 0.0
      %792 = vmatpush1.msra.mxu0 0.0
      %793 = vmatprep.subr.mxu0 0.0
      %794 = vmatpush1.msra.mxu0 0.0
      %795 = vmatprep.subr.mxu0 0.0
      %796 = vmatpush1.msra.mxu0 0.0
      %797 = vmatprep.subr.mxu0 0.0
      %798 = vmatpush1.msra.mxu0 0.0
      %799 = vmatprep.subr.mxu0 0.0
      %800 = vmatpush1.msra.mxu0 0.0
      %801 = vmatprep.subr.mxu0 0.0
      %802 = vmatpush1.msra.mxu0 0.0
      %803 = vmatprep.subr.mxu0 0.0
      %804 = vmatpush1.msra.mxu0 0.0
      %805 = vmatprep.subr.mxu0 0.0
      %806 = vmatpush1.msra.mxu0 0.0
      %807 = vmatprep.subr.mxu0 0.0
      %808 = vmatpush1.msra.mxu0 0.0
      %809 = vmatprep.subr.mxu0 0.0
      %810 = vmatpush1.msra.mxu0 0.0
      %811 = vmatprep.subr.mxu0 0.0
      %812 = vmatpush1.msra.mxu0 0.0
      %813 = vmatprep.subr.mxu0 0.0
      %814 = vmatpush1.msra.mxu0 0.0
      %815 = vmatprep.subr.mxu0 0.0
      %816 = vmatpush1.msra.mxu0 0.0
      %817 = vmatprep.subr.mxu0 0.0
      %818 = vmatpush1.msra.mxu0 0.0
      %819 = vmatprep.mubr.f32.mxu0 0.0
      %820 = vmatmul.mubr.f32.gmra.mrb[0].mxu0 %v750
      %v821 = vpop.f32.mrb[0].mxu0
      %v822 = vadd.f32 0.0, %v821
      %v823 = vpop.f32.mrb[0].mxu0
      %824 = vdwg.mxu0
      %v825 = vadd.f32 %v746, %v822
      %v826 = vld [vmem:[#allocation2 + $0x4] sm:$0x7]
      %s827 = scalar_lea.vmem %s5, 5
      %v828 = vld [vmem:[%s827] sm:$0x1]
      %v830 = vlaneseq
      %v831 = vshrl.u32 %v830, 7
      %v832 = vsub.s32 0, %v831
      %v833 = vrot.slane %v828, %v832
      %834 = vrot.lane.b32.xlu0 %v833, 1
      %v835 = vpop.permute.xlu0 %834
      %v837 = vmul.f32 %v826, %v835
      %s838 = scalar_lea.vmem %s3, 20
      %v839 = vld [vmem:[%s838] sm:$0x7]
      %841 = vrot.lane.b32.xlu0 %v837, 127
      %v842 = vpop.permute.xlu0 %841
      %v844 = vsel %vm385, %v839, 0
      %v846 = vsel %vm389, %v842, 0
      %848 = vmatprep.subr.mxu0 0.0
      %849 = vmatpush1.msra.mxu0 %v846
      %850 = vmatprep.subr.mxu0 0.0
      %851 = vmatpush1.msra.mxu0 0.0
      %852 = vmatprep.subr.mxu0 0.0
      %853 = vmatpush1.msra.mxu0 0.0
      %854 = vmatprep.subr.mxu0 0.0
      %855 = vmatpush1.msra.mxu0 0.0
      %856 = vmatprep.subr.mxu0 0.0
      %857 = vmatpush1.msra.mxu0 0.0
      %858 = vmatprep.subr.mxu0 0.0
      %859 = vmatpush1.msra.mxu0 0.0
      %860 = vmatprep.subr.mxu0 0.0
      %861 = vmatpush1.msra.mxu0 0.0
      %862 = vmatprep.subr.mxu0 0.0
      %863 = vmatpush1.msra.mxu0 0.0
      %864 = vmatprep.subr.mxu0 0.0
      %865 = vmatpush1.msra.mxu0 0.0
      %866 = vmatprep.subr.mxu0 0.0
      %867 = vmatpush1.msra.mxu0 0.0
      %868 = vmatprep.subr.mxu0 0.0
      %869 = vmatpush1.msra.mxu0 0.0
      %870 = vmatprep.subr.mxu0 0.0
      %871 = vmatpush1.msra.mxu0 0.0
      %872 = vmatprep.subr.mxu0 0.0
      %873 = vmatpush1.msra.mxu0 0.0
      %874 = vmatprep.subr.mxu0 0.0
      %875 = vmatpush1.msra.mxu0 0.0
      %876 = vmatprep.subr.mxu0 0.0
      %877 = vmatpush1.msra.mxu0 0.0
      %878 = vmatprep.subr.mxu0 0.0
      %879 = vmatpush1.msra.mxu0 0.0
      %880 = vmatprep.subr.mxu0 0.0
      %881 = vmatpush1.msra.mxu0 0.0
      %882 = vmatprep.subr.mxu0 0.0
      %883 = vmatpush1.msra.mxu0 0.0
      %884 = vmatprep.subr.mxu0 0.0
      %885 = vmatpush1.msra.mxu0 0.0
      %886 = vmatprep.subr.mxu0 0.0
      %887 = vmatpush1.msra.mxu0 0.0
      %888 = vmatprep.subr.mxu0 0.0
      %889 = vmatpush1.msra.mxu0 0.0
      %890 = vmatprep.subr.mxu0 0.0
      %891 = vmatpush1.msra.mxu0 0.0
      %892 = vmatprep.subr.mxu0 0.0
      %893 = vmatpush1.msra.mxu0 0.0
      %894 = vmatprep.subr.mxu0 0.0
      %895 = vmatpush1.msra.mxu0 0.0
      %896 = vmatprep.subr.mxu0 0.0
      %897 = vmatpush1.msra.mxu0 0.0
      %898 = vmatprep.subr.mxu0 0.0
      %899 = vmatpush1.msra.mxu0 0.0
      %900 = vmatprep.subr.mxu0 0.0
      %901 = vmatpush1.msra.mxu0 0.0
      %902 = vmatprep.subr.mxu0 0.0
      %903 = vmatpush1.msra.mxu0 0.0
      %904 = vmatprep.subr.mxu0 0.0
      %905 = vmatpush1.msra.mxu0 0.0
      %906 = vmatprep.subr.mxu0 0.0
      %907 = vmatpush1.msra.mxu0 0.0
      %908 = vmatprep.subr.mxu0 0.0
      %909 = vmatpush1.msra.mxu0 0.0
      %910 = vmatprep.subr.mxu0 0.0
      %911 = vmatpush1.msra.mxu0 0.0
      %912 = vmatprep.mubr.f32.mxu0 0.0
      %913 = vmatmul.mubr.f32.gmra.mrb[0].mxu0 %v844
      %v914 = vpop.f32.mrb[0].mxu0
      %v915 = vadd.f32 0.0, %v914
      %v916 = vpop.f32.mrb[0].mxu0
      %917 = vdwg.mxu0
      %v918 = vadd.f32 %v825, %v915
      %v919 = vld [vmem:[#allocation2 + $0x4] sm:$0x7]
      %s920 = scalar_lea.vmem %s5, 6
      %v921 = vld [vmem:[%s920] sm:$0x1]
      %v923 = vlaneseq
      %v924 = vshrl.u32 %v923, 7
      %v925 = vsub.s32 0, %v924
      %v926 = vrot.slane %v921, %v925
      %927 = vrot.lane.b32.xlu0 %v926, 7
      %v928 = vpop.permute.xlu0 %927
      %v930 = vmul.f32 %v919, %v928
      %s931 = scalar_lea.vmem %s3, 24
      %v932 = vld [vmem:[%s931] sm:$0x7]
      %934 = vrot.lane.b32.xlu0 %v930, 121
      %v935 = vpop.permute.xlu0 %934
      %v937 = vsel %vm385, %v932, 0
      %v939 = vsel %vm389, %v935, 0
      %941 = vmatprep.subr.mxu0 0.0
      %942 = vmatpush1.msra.mxu0 %v939
      %943 = vmatprep.subr.mxu0 0.0
      %944 = vmatpush1.msra.mxu0 0.0
      %945 = vmatprep.subr.mxu0 0.0
      %946 = vmatpush1.msra.mxu0 0.0
      %947 = vmatprep.subr.mxu0 0.0
      %948 = vmatpush1.msra.mxu0 0.0
      %949 = vmatprep.subr.mxu0 0.0
      %950 = vmatpush1.msra.mxu0 0.0
      %951 = vmatprep.subr.mxu0 0.0
      %952 = vmatpush1.msra.mxu0 0.0
      %953 = vmatprep.subr.mxu0 0.0
      %954 = vmatpush1.msra.mxu0 0.0
      %955 = vmatprep.subr.mxu0 0.0
      %956 = vmatpush1.msra.mxu0 0.0
      %957 = vmatprep.subr.mxu0 0.0
      %958 = vmatpush1.msra.mxu0 0.0
      %959 = vmatprep.subr.mxu0 0.0
      %960 = vmatpush1.msra.mxu0 0.0
      %961 = vmatprep.subr.mxu0 0.0
      %962 = vmatpush1.msra.mxu0 0.0
      %963 = vmatprep.subr.mxu0 0.0
      %964 = vmatpush1.msra.mxu0 0.0
      %965 = vmatprep.subr.mxu0 0.0
      %966 = vmatpush1.msra.mxu0 0.0
      %967 = vmatprep.subr.mxu0 0.0
      %968 = vmatpush1.msra.mxu0 0.0
      %969 = vmatprep.subr.mxu0 0.0
      %970 = vmatpush1.msra.mxu0 0.0
      %971 = vmatprep.subr.mxu0 0.0
      %972 = vmatpush1.msra.mxu0 0.0
      %973 = vmatprep.subr.mxu0 0.0
      %974 = vmatpush1.msra.mxu0 0.0
      %975 = vmatprep.subr.mxu0 0.0
      %976 = vmatpush1.msra.mxu0 0.0
      %977 = vmatprep.subr.mxu0 0.0
      %978 = vmatpush1.msra.mxu0 0.0
      %979 = vmatprep.subr.mxu0 0.0
      %980 = vmatpush1.msra.mxu0 0.0
      %981 = vmatprep.subr.mxu0 0.0
      %982 = vmatpush1.msra.mxu0 0.0
      %983 = vmatprep.subr.mxu0 0.0
      %984 = vmatpush1.msra.mxu0 0.0
      %985 = vmatprep.subr.mxu0 0.0
      %986 = vmatpush1.msra.mxu0 0.0
      %987 = vmatprep.subr.mxu0 0.0
      %988 = vmatpush1.msra.mxu0 0.0
      %989 = vmatprep.subr.mxu0 0.0
      %990 = vmatpush1.msra.mxu0 0.0
      %991 = vmatprep.subr.mxu0 0.0
      %992 = vmatpush1.msra.mxu0 0.0
      %993 = vmatprep.subr.mxu0 0.0
      %994 = vmatpush1.msra.mxu0 0.0
      %995 = vmatprep.subr.mxu0 0.0
      %996 = vmatpush1.msra.mxu0 0.0
      %997 = vmatprep.subr.mxu0 0.0
      %998 = vmatpush1.msra.mxu0 0.0
      %999 = vmatprep.subr.mxu0 0.0
      %1000 = vmatpush1.msra.mxu0 0.0
      %1001 = vmatprep.subr.mxu0 0.0
      %1002 = vmatpush1.msra.mxu0 0.0
      %1003 = vmatprep.subr.mxu0 0.0
      %1004 = vmatpush1.msra.mxu0 0.0
      %1005 = vmatprep.mubr.f32.mxu0 0.0
      %1006 = vmatmul.mubr.f32.gmra.mrb[0].mxu0 %v937
      %v1007 = vpop.f32.mrb[0].mxu0
      %v1008 = vadd.f32 0.0, %v1007
      %v1009 = vpop.f32.mrb[0].mxu0
      %1010 = vdwg.mxu0
      %v1011 = vadd.f32 %v918, %v1008
      %v1012 = vld [vmem:[#allocation2 + $0x4] sm:$0x7]
      %s1013 = scalar_lea.vmem %s5, 7
      %v1014 = vld [vmem:[%s1013] sm:$0x1]
      %v1016 = vlaneseq
      %v1017 = vshrl.u32 %v1016, 7
      %v1018 = vsub.s32 0, %v1017
      %v1019 = vrot.slane %v1014, %v1018
      %1020 = vrot.lane.b32.xlu0 %v1019, 8
      %v1021 = vpop.permute.xlu0 %1020
      %v1023 = vmul.f32 %v1012, %v1021
      %s1024 = scalar_lea.vmem %s3, 28
      %v1025 = vld [vmem:[%s1024] sm:$0x7]
      %1027 = vrot.lane.b32.xlu0 %v1023, 120
      %v1028 = vpop.permute.xlu0 %1027
      %v1030 = vsel %vm385, %v1025, 0
      %v1032 = vsel %vm389, %v1028, 0
      %1034 = vmatprep.subr.mxu0 0.0
      %1035 = vmatpush1.msra.mxu0 %v1032
      %1036 = vmatprep.subr.mxu0 0.0
      %1037 = vmatpush1.msra.mxu0 0.0
      %1038 = vmatprep.subr.mxu0 0.0
      %1039 = vmatpush1.msra.mxu0 0.0
      %1040 = vmatprep.subr.mxu0 0.0
      %1041 = vmatpush1.msra.mxu0 0.0
      %1042 = vmatprep.subr.mxu0 0.0
      %1043 = vmatpush1.msra.mxu0 0.0
      %1044 = vmatprep.subr.mxu0 0.0
      %1045 = vmatpush1.msra.mxu0 0.0
      %1046 = vmatprep.subr.mxu0 0.0
      %1047 = vmatpush1.msra.mxu0 0.0
      %1048 = vmatprep.subr.mxu0 0.0
      %1049 = vmatpush1.msra.mxu0 0.0
      %1050 = vmatprep.subr.mxu0 0.0
      %1051 = vmatpush1.msra.mxu0 0.0
      %1052 = vmatprep.subr.mxu0 0.0
      %1053 = vmatpush1.msra.mxu0 0.0
      %1054 = vmatprep.subr.mxu0 0.0
      %1055 = vmatpush1.msra.mxu0 0.0
      %1056 = vmatprep.subr.mxu0 0.0
      %1057 = vmatpush1.msra.mxu0 0.0
      %1058 = vmatprep.subr.mxu0 0.0
      %1059 = vmatpush1.msra.mxu0 0.0
      %1060 = vmatprep.subr.mxu0 0.0
      %1061 = vmatpush1.msra.mxu0 0.0
      %1062 = vmatprep.subr.mxu0 0.0
      %1063 = vmatpush1.msra.mxu0 0.0
      %1064 = vmatprep.subr.mxu0 0.0
      %1065 = vmatpush1.msra.mxu0 0.0
      %1066 = vmatprep.subr.mxu0 0.0
      %1067 = vmatpush1.msra.mxu0 0.0
      %1068 = vmatprep.subr.mxu0 0.0
      %1069 = vmatpush1.msra.mxu0 0.0
      %1070 = vmatprep.subr.mxu0 0.0
      %1071 = vmatpush1.msra.mxu0 0.0
      %1072 = vmatprep.subr.mxu0 0.0
      %1073 = vmatpush1.msra.mxu0 0.0
      %1074 = vmatprep.subr.mxu0 0.0
      %1075 = vmatpush1.msra.mxu0 0.0
      %1076 = vmatprep.subr.mxu0 0.0
      %1077 = vmatpush1.msra.mxu0 0.0
      %1078 = vmatprep.subr.mxu0 0.0
      %1079 = vmatpush1.msra.mxu0 0.0
      %1080 = vmatprep.subr.mxu0 0.0
      %1081 = vmatpush1.msra.mxu0 0.0
      %1082 = vmatprep.subr.mxu0 0.0
      %1083 = vmatpush1.msra.mxu0 0.0
      %1084 = vmatprep.subr.mxu0 0.0
      %1085 = vmatpush1.msra.mxu0 0.0
      %1086 = vmatprep.subr.mxu0 0.0
      %1087 = vmatpush1.msra.mxu0 0.0
      %1088 = vmatprep.subr.mxu0 0.0
      %1089 = vmatpush1.msra.mxu0 0.0
      %1090 = vmatprep.subr.mxu0 0.0
      %1091 = vmatpush1.msra.mxu0 0.0
      %1092 = vmatprep.subr.mxu0 0.0
      %1093 = vmatpush1.msra.mxu0 0.0
      %1094 = vmatprep.subr.mxu0 0.0
      %1095 = vmatpush1.msra.mxu0 0.0
      %1096 = vmatprep.subr.mxu0 0.0
      %1097 = vmatpush1.msra.mxu0 0.0
      %1098 = vmatprep.mubr.f32.mxu0 0.0
      %1099 = vmatmul.mubr.f32.gmra.mrb[0].mxu0 %v1030
      %v1100 = vpop.f32.mrb[0].mxu0
      %v1101 = vadd.f32 0.0, %v1100
      %v1102 = vpop.f32.mrb[0].mxu0
      %1103 = vdwg.mxu0
      %v1104 = vadd.f32 %v1011, %v1101
      %v1105 = vld [vmem:[#allocation2 + $0x4] sm:$0x7]
      %s1106 = scalar_lea.vmem %s5, 8
      %v1107 = vld [vmem:[%s1106] sm:$0x1]
      %v1109 = vlaneseq
      %v1110 = vshrl.u32 %v1109, 7
      %v1111 = vsub.s32 0, %v1110
      %v1112 = vrot.slane %v1107, %v1111
      %1113 = vrot.lane.b32.xlu0 %v1112, 9
      %v1114 = vpop.permute.xlu0 %1113
      %v1116 = vmul.f32 %v1105, %v1114
      %s1117 = scalar_lea.vmem %s3, 32
      %v1118 = vld [vmem:[%s1117] sm:$0x7]
      %1120 = vrot.lane.b32.xlu0 %v1116, 119
      %v1121 = vpop.permute.xlu0 %1120
      %v1123 = vsel %vm385, %v1118, 0
      %v1125 = vsel %vm389, %v1121, 0
      %1127 = vmatprep.subr.mxu0 0.0
      %1128 = vmatpush1.msra.mxu0 %v1125
      %1129 = vmatprep.subr.mxu0 0.0
      %1130 = vmatpush1.msra.mxu0 0.0
      %1131 = vmatprep.subr.mxu0 0.0
      %1132 = vmatpush1.msra.mxu0 0.0
      %1133 = vmatprep.subr.mxu0 0.0
      %1134 = vmatpush1.msra.mxu0 0.0
      %1135 = vmatprep.subr.mxu0 0.0
      %1136 = vmatpush1.msra.mxu0 0.0
      %1137 = vmatprep.subr.mxu0 0.0
      %1138 = vmatpush1.msra.mxu0 0.0
      %1139 = vmatprep.subr.mxu0 0.0
      %1140 = vmatpush1.msra.mxu0 0.0
      %1141 = vmatprep.subr.mxu0 0.0
      %1142 = vmatpush1.msra.mxu0 0.0
      %1143 = vmatprep.subr.mxu0 0.0
      %1144 = vmatpush1.msra.mxu0 0.0
      %1145 = vmatprep.subr.mxu0 0.0
      %1146 = vmatpush1.msra.mxu0 0.0
      %1147 = vmatprep.subr.mxu0 0.0
      %1148 = vmatpush1.msra.mxu0 0.0
      %1149 = vmatprep.subr.mxu0 0.0
      %1150 = vmatpush1.msra.mxu0 0.0
      %1151 = vmatprep.subr.mxu0 0.0
      %1152 = vmatpush1.msra.mxu0 0.0
      %1153 = vmatprep.subr.mxu0 0.0
      %1154 = vmatpush1.msra.mxu0 0.0
      %1155 = vmatprep.subr.mxu0 0.0
      %1156 = vmatpush1.msra.mxu0 0.0
      %1157 = vmatprep.subr.mxu0 0.0
      %1158 = vmatpush1.msra.mxu0 0.0
      %1159 = vmatprep.subr.mxu0 0.0
      %1160 = vmatpush1.msra.mxu0 0.0
      %1161 = vmatprep.subr.mxu0 0.0
      %1162 = vmatpush1.msra.mxu0 0.0
      %1163 = vmatprep.subr.mxu0 0.0
      %1164 = vmatpush1.msra.mxu0 0.0
      %1165 = vmatprep.subr.mxu0 0.0
      %1166 = vmatpush1.msra.mxu0 0.0
      %1167 = vmatprep.subr.mxu0 0.0
      %1168 = vmatpush1.msra.mxu0 0.0
      %1169 = vmatprep.subr.mxu0 0.0
      %1170 = vmatpush1.msra.mxu0 0.0
      %1171 = vmatprep.subr.mxu0 0.0
      %1172 = vmatpush1.msra.mxu0 0.0
      %1173 = vmatprep.subr.mxu0 0.0
      %1174 = vmatpush1.msra.mxu0 0.0
      %1175 = vmatprep.subr.mxu0 0.0
      %1176 = vmatpush1.msra.mxu0 0.0
      %1177 = vmatprep.subr.mxu0 0.0
      %1178 = vmatpush1.msra.mxu0 0.0
      %1179 = vmatprep.subr.mxu0 0.0
      %1180 = vmatpush1.msra.mxu0 0.0
      %1181 = vmatprep.subr.mxu0 0.0
      %1182 = vmatpush1.msra.mxu0 0.0
      %1183 = vmatprep.subr.mxu0 0.0
      %1184 = vmatpush1.msra.mxu0 0.0
      %1185 = vmatprep.subr.mxu0 0.0
      %1186 = vmatpush1.msra.mxu0 0.0
      %1187 = vmatprep.subr.mxu0 0.0
      %1188 = vmatpush1.msra.mxu0 0.0
      %1189 = vmatprep.subr.mxu0 0.0
      %1190 = vmatpush1.msra.mxu0 0.0
      %1191 = vmatprep.mubr.f32.mxu0 0.0
      %1192 = vmatmul.mubr.f32.gmra.mrb[0].mxu0 %v1123
      %v1193 = vpop.f32.mrb[0].mxu0
      %v1194 = vadd.f32 0.0, %v1193
      %v1195 = vpop.f32.mrb[0].mxu0
      %1196 = vdwg.mxu0
      %v1197 = vadd.f32 %v1104, %v1194
      %v1198 = vld [vmem:[%s4] sm:$0x7]
      %1200 = vset.pattern.permute.xlu0 0
      %1201 = vperm.xlu0 %1200, %v1198
      %v1202 = vpop.permute.xlu0 %1201
      %v1204 = vadd.f32 %v1197, %v1202
      %v1205 = vmax.f32 %v1204, 0.0
      %v1206 = vadd.f32 %v1205, %v339
      %1207 = vst.msk [vmem:[%s263] sm:$0x7] %vm343, %v1206
      %p1208 = scmp.lt.s32.totalorder %s17, 1
      %s1209 = scalar_select %p1208, %s17, 1
      %s1210 = smul.addr %s1209, 4
      %s1211 = scalar_lea.vmem %s6, %s1210
      // Predicated region
      $region45: #{model_forward.8} parent=43 // pred_check
        %p1212 = pneg %p171
      $region46: #{model_forward.8} parent=43 // pred_check_branch
        %1214 = sbr.rel (%p1212) target = $region48
      $region47: #{model_forward.8} parent=43 // pred_region
        _
      $region48: #{model_forward.8} parent=43 // pred_fallthru
        _
    $region44: #{model_forward.8} parent=5 // pred_fallthru
      _
    %p1215 = scmp.le.s32.totalorder 2, %s12
    // Predicated region
    $region49: #{model_forward.8} parent=5 // pred_check
      %p1216 = pneg %p1215
    $region50: #{model_forward.8} parent=5 // pred_check_branch
      %1218 = sbr.rel (%p1216) target = $region52
    $region51: #{model_forward.8} parent=5 // pred_region
      %s1219 = ssub.s32 %s12, 2
      // Predicated region
      $region53: #{model_forward.8} parent=51 // pred_check
        %p1220 = pneg %p177
      $region54: #{model_forward.8} parent=51 // pred_check_branch
        %1222 = sbr.rel (%p1220) target = $region56
      $region55: #{model_forward.8} parent=51 // pred_region
        %p1223 = scmp.lt.s32.totalorder %s18, 1
        %s1224 = scalar_select %p1223, %s18, 1
        %s1225 = smul.addr %s1224, 4
        %s1226 = scalar_lea.vmem %s6, %s1225
      $region56: #{model_forward.8} parent=51 // pred_fallthru
        _
    $region52: #{model_forward.8} parent=5 // pred_fallthru
      _
  $region6: #{model_forward.8} parent=0 // loop_footer
    %s16 = sadd.s32 1, %s12
  $region7: #{model_forward.8} parent=0 // loop_footer_branch
    %11 = sbr.rel target = $region3
  $region8: #{model_forward.8} parent=0 // loop_exit
    _

// kernel: model_forward.5
$region0: #{model_forward.5}
  #allocation0 [shape = 'u32[]', space=smem, size = 0x4, offset = 0x4, fixed_abs, tag = 'smem constant byte address 0x4 - core index']
  #allocation1 [shape = 'u32[144,128]{1,0:T(1,128)}', space=vmem, size = 0x12000, scoped, tag = 'internal scratch']
  %s0 = inlined_call_operand.vmem [shape: f32[2,3,256], index: 0, kind: input, shape index: {}]
  %s1 = inlined_call_operand.hbm [shape: f32[256,64], index: 1, kind: input, shape index: {}]
  %s2 = inlined_call_operand.vmem [shape: f32[64,256], index: 2, kind: input, shape index: {}]
  %s3 = inlined_call_operand.vmem [shape: f32[2,3,256], index: 3, kind: output, shape index: {0}]
  %s4 = inlined_call_operand.vmem [shape: f32[2,3,64], index: 4, kind: output, shape index: {1}]
  %5 = xla_tuple %s3, %s4
  %s6 = sld [smem:[#allocation0]]
  $region57: #{model_forward.5} parent=0
    _
  %s8 = ssub.s32 1, %s6
  %s9 = scalar_select 0, %s8, %s6
  $region1: #{model_forward.5} parent=0
    #allocation2 [shape = 'u8[131072]{0}', space=vmem, size = 0x20000, scoped, tag = 'input window, operand 1, single buffered']
    #allocation3 [shape = 's32[2]{0}', space=sflag, size = 0x8, scoped, tag = 'scoped memory for model_forward.5']
    %10 = vsyncpa [#allocation3], 0
    loop: start=0, step=1, limit=4
    $region2: #{model_forward.5} parent=1 // loop_pre_header
      _
    $region3: #{model_forward.5} parent=1 // loop_header
      %s12 = sphi 0, %s16
      %p13 = scmp.ge.s32.totalorder %s12, 4
      %s22 = sphi 0, %s24
      %s25 = sphi 0, %s22
      %s26 = sphi 0, %s25
      %s42 = sphi 0, %s26
      %s46 = sphi 0, %s46
      %s48 = sphi 0, %s46
      %s49 = sphi 0, %s48
      %s63 = sphi 0, %s49
      %s67 = sphi 0, %s67
      %s69 = sphi 0, %s67
      %s70 = sphi 0, %s69
      %s84 = sphi 0, %s70
      %s90 = sphi 0, %s92
      %s93 = sphi 0, %s90
      %s94 = sphi 0, %s93
      %s110 = sphi 0, %s94
      %s116 = sphi 0, %s118
      %s119 = sphi 0, %s116
      %s120 = sphi 0, %s119
      %s136 = sphi 0, %s120
    $region4: #{model_forward.5} parent=1 // loop_header_branch
      %15 = sbr.rel (%p13) target = $region8
    $region5: #{model_forward.5} parent=1 // loop_body
      %s17 = ssub.s32 %s12, 1
      %s18 = ssub.s32 %s12, 2
      %s19 = sadd.s32 %s12, 1
      %s20 = ssub.s32 %s12, %s19
      %p21 = scmp.eq.s32.totalorder %s20, 0
      %s23 = sadd.s32 %s22, 1
      %s24 = scalar_select %p21, %s22, %s23
      %p27 = pneg %p21
      %p28 = scmp.eq.s32.totalorder %s12, 1
      %p29 = por %p27, %p28
      %p30 = scmp.ne.s32.totalorder %s22, %s25
      %p31 = scmp.eq.s32.totalorder %s12, 0
      %p32 = por %p30, %p31
      %p33 = scmp.ne.s32.totalorder %s22, %s25
      %p34 = scmp.eq.s32.totalorder %s17, 1
      %p35 = por %p33, %p34
      %p36 = scmp.ne.s32.totalorder %s25, %s26
      %p37 = scmp.eq.s32.totalorder %s17, 0
      %p38 = por %p36, %p37
      %p39 = scmp.ne.s32.totalorder %s25, %s26
      %p40 = scmp.eq.s32.totalorder %s18, 1
      %p41 = por %p39, %p40
      %p43 = scmp.ne.s32.totalorder %s26, %s42
      %p44 = scmp.eq.s32.totalorder %s18, 0
      %p45 = por %p43, %p44
      %s47 = sadd.s32 %s46, 1
      %p50 = scmp.eq.s32.totalorder %s12, 1
      %p51 = scmp.ne.s32.totalorder %s46, %s48
      %p52 = scmp.eq.s32.totalorder %s12, 0
      %p53 = por %p51, %p52
      %p54 = scmp.ne.s32.totalorder %s46, %s48
      %p55 = scmp.eq.s32.totalorder %s17, 1
      %p56 = por %p54, %p55
      %p57 = scmp.ne.s32.totalorder %s48, %s49
      %p58 = scmp.eq.s32.totalorder %s17, 0
      %p59 = por %p57, %p58
      %p60 = scmp.ne.s32.totalorder %s48, %s49
      %p61 = scmp.eq.s32.totalorder %s18, 1
      %p62 = por %p60, %p61
      %p64 = scmp.ne.s32.totalorder %s49, %s63
      %p65 = scmp.eq.s32.totalorder %s18, 0
      %p66 = por %p64, %p65
      %s68 = sadd.s32 %s67, 1
      %p71 = scmp.eq.s32.totalorder %s12, 1
      %p72 = scmp.ne.s32.totalorder %s67, %s69
      %p73 = scmp.eq.s32.totalorder %s12, 0
      %p74 = por %p72, %p73
      %p75 = scmp.ne.s32.totalorder %s67, %s69
      %p76 = scmp.eq.s32.totalorder %s17, 1
      %p77 = por %p75, %p76
      %p78 = scmp.ne.s32.totalorder %s69, %s70
      %p79 = scmp.eq.s32.totalorder %s17, 0
      %p80 = por %p78, %p79
      %p81 = scmp.ne.s32.totalorder %s69, %s70
      %p82 = scmp.eq.s32.totalorder %s18, 1
      %p83 = por %p81, %p82
      %p85 = scmp.ne.s32.totalorder %s70, %s84
      %p86 = scmp.eq.s32.totalorder %s18, 0
      %p87 = por %p85, %p86
      %s88 = ssub.s32 %s12, %s19
      %p89 = scmp.eq.s32.totalorder %s88, 0
      %s91 = sadd.s32 %s90, 1
      %s92 = scalar_select %p89, %s90, %s91
      %p95 = pneg %p89
      %p96 = scmp.eq.s32.totalorder %s12, 1
      %p97 = por %p95, %p96
      %p98 = scmp.ne.s32.totalorder %s90, %s93
      %p99 = scmp.eq.s32.totalorder %s12, 0
      %p100 = por %p98, %p99
      %p101 = scmp.ne.s32.totalorder %s90, %s93
      %p102 = scmp.eq.s32.totalorder %s17, 1
      %p103 = por %p101, %p102
      %p104 = scmp.ne.s32.totalorder %s93, %s94
      %p105 = scmp.eq.s32.totalorder %s17, 0
      %p106 = por %p104, %p105
      %p107 = scmp.ne.s32.totalorder %s93, %s94
      %p108 = scmp.eq.s32.totalorder %s18, 1
      %p109 = por %p107, %p108
      %p111 = scmp.ne.s32.totalorder %s94, %s110
      %p112 = scmp.eq.s32.totalorder %s18, 0
      %p113 = por %p111, %p112
      %s114 = ssub.s32 %s12, %s19
      %p115 = scmp.eq.s32.totalorder %s114, 0
      %s117 = sadd.s32 %s116, 1
      %s118 = scalar_select %p115, %s116, %s117
      %p121 = pneg %p115
      %p122 = scmp.eq.s32.totalorder %s12, 1
      %p123 = por %p121, %p122
      %p124 = scmp.ne.s32.totalorder %s116, %s119
      %p125 = scmp.eq.s32.totalorder %s12, 0
      %p126 = por %p124, %p125
      %p127 = scmp.ne.s32.totalorder %s116, %s119
      %p128 = scmp.eq.s32.totalorder %s17, 1
      %p129 = por %p127, %p128
      %p130 = scmp.ne.s32.totalorder %s119, %s120
      %p131 = scmp.eq.s32.totalorder %s17, 0
      %p132 = por %p130, %p131
      %p133 = scmp.ne.s32.totalorder %s119, %s120
      %p134 = scmp.eq.s32.totalorder %s18, 1
      %p135 = por %p133, %p134
      %p137 = scmp.ne.s32.totalorder %s120, %s136
      %p138 = scmp.eq.s32.totalorder %s18, 0
      %p139 = por %p137, %p138
      %p140 = scmp.le.s32.totalorder 1, %s12
      %p141 = scmp.lt.s32.totalorder %s12, 3
      %p142 = pnand %p140, %p141
      %p143 = pneg %p142
      // Predicated region
      $region9: #{model_forward.5} parent=5 // pred_check
        _
      $region10: #{model_forward.5} parent=5 // pred_check_branch
        %145 = sbr.rel (%p142) target = $region12
      $region11: #{model_forward.5} parent=5 // pred_region
        %s146 = ssub.s32 %s12, 1
        // Predicated region
        $region13: #{model_forward.5} parent=11 // pred_check
          %p147 = pneg %p59
        $region14: #{model_forward.5} parent=11 // pred_check_branch
          %149 = sbr.rel (%p147) target = $region16
        $region15: #{model_forward.5} parent=11 // pred_region
          %s151 = ssub.s32 4096, 4096
          %152 = vsyncadd [#allocation3], %s151
          %s153 = sshll.u32 [#allocation2], 4
          %s154 = int_to_ptr.vmem [resolvable:$true] %s153
          %159 = dma.hbm_to_vmem [thread:$0]  %s1, 4096, %s154, [#allocation3], 128, 128, 8
        $region16: #{model_forward.5} parent=11 // pred_fallthru
          _
        // Predicated region
        $region17: #{model_forward.5} parent=11 // pred_check
          %p160 = pneg %p80
        $region18: #{model_forward.5} parent=11 // pred_check_branch
          %162 = sbr.rel (%p160) target = $region20
        $region19: #{model_forward.5} parent=11 // pred_region
          _
        $region20: #{model_forward.5} parent=11 // pred_fallthru
          _
      $region12: #{model_forward.5} parent=5 // pred_fallthru
        _
      %p163 = scmp.lt.s32.totalorder %s12, 2
      // Predicated region
      $region21: #{model_forward.5} parent=5 // pred_check
        %p164 = pneg %p163
      $region22: #{model_forward.5} parent=5 // pred_check_branch
        %166 = sbr.rel (%p164) target = $region24
      $region23: #{model_forward.5} parent=5 // pred_region
        // Predicated region
        $region25: #{model_forward.5} parent=23 // pred_check
          %p167 = pneg %p32
        $region26: #{model_forward.5} parent=23 // pred_check_branch
          %169 = sbr.rel (%p167) target = $region28
        $region27: #{model_forward.5} parent=23 // pred_region
          %p170 = scmp.lt.s32.totalorder %s12, 1
          %s171 = scalar_select %p170, %s12, 1
          %s172 = smul.addr %s171, 2
          %s173 = smul.addr %s172, 4
          %s174 = scalar_lea.vmem %s0, %s173
        $region28: #{model_forward.5} parent=23 // pred_fallthru
          _
      $region24: #{model_forward.5} parent=5 // pred_fallthru
        _
      %p175 = scmp.le.s32.totalorder 1, %s12
      %p176 = scmp.lt.s32.totalorder %s12, 3
      %p177 = pnand %p175, %p176
      %p178 = pneg %p177
      // Predicated region
      $region29: #{model_forward.5} parent=5 // pred_check
        _
      $region30: #{model_forward.5} parent=5 // pred_check_branch
        %180 = sbr.rel (%p177) target = $region32
      $region31: #{model_forward.5} parent=5 // pred_region
        %s181 = ssub.s32 %s12, 1
        // Predicated region
        $region33: #{model_forward.5} parent=31 // pred_check
          %p182 = pneg %p59
        $region34: #{model_forward.5} parent=31 // pred_check_branch
          %184 = sbr.rel (%p182) target = $region36
        $region35: #{model_forward.5} parent=31 // pred_region
          %185 = dma.done [#allocation3], 4096
        $region36: #{model_forward.5} parent=31 // pred_fallthru
          _
        %p186 = scmp.lt.s32.totalorder %s17, 1
        %s187 = scalar_select %p186, %s17, 1
        %s188 = smul.addr %s187, 2
        %s189 = smul.addr %s188, 4
        %s190 = scalar_lea.vmem %s0, %s189
        %p191 = pneg %p38
        %p192 = pneg %p35
        %p193 = pneg %p59
        %p194 = pneg %p56
        %p195 = pneg %p80
        %p196 = pneg %p77
        %p197 = pneg %p106
        %p198 = pneg %p103
        %p199 = scmp.lt.s32.totalorder %s17, 1
        %s200 = scalar_select %p199, %s17, 1
        %s201 = smul.addr %s200, 2
        %s202 = smul.addr %s201, 4
        %s203 = scalar_lea.vmem %s3, %s202
        %p204 = pneg %p132
        %p205 = pneg %p129
        %p206 = scmp.lt.s32.totalorder %s17, 1
        %s207 = scalar_select %p206, %s17, 1
        %s208 = smul.addr %s207, 4
        %s209 = scalar_lea.vmem %s4, %s208
        %p210 = scmp.lt.s32.totalorder %s17, 1
        %s211 = scalar_select %p210, %s17, 1
        %s212 = smul.addr %s211, 2
        %s213 = smul.addr %s212, 4
        %s214 = scalar_lea.vmem %s0, %s213
        %p215 = scmp.lt.s32.totalorder %s17, 1
        %s216 = scalar_select %p215, %s17, 1
        %s217 = smul.addr %s216, 2
        %s218 = smul.addr %s217, 4
        %s219 = scalar_lea.vmem %s3, %s218
        %p220 = scmp.lt.s32.totalorder %s17, 1
        %s221 = scalar_select %p220, %s17, 1
        %s222 = smul.addr %s221, 4
        %s223 = scalar_lea.vmem %s4, %s222
        %v224 = vld [vmem:[%s214] sm:$0x77]
        %v225 = vld [vmem:[#allocation2] sm:$0xff]
        %v226 = vld [vmem:[#allocation2 + $0x8] sm:$0xff]
        %v227 = vld [vmem:[#allocation2 + $0x10] sm:$0xff]
        %v228 = vld [vmem:[#allocation2 + $0x18] sm:$0xff]
        %v229 = vld [vmem:[#allocation2 + $0x20] sm:$0xff]
        %v230 = vld [vmem:[#allocation2 + $0x28] sm:$0xff]
        %v231 = vld [vmem:[#allocation2 + $0x30] sm:$0xff]
        %v232 = vld [vmem:[#allocation2 + $0x38] sm:$0xff]
        %v233 = vld [vmem:[#allocation2 + $0x40] sm:$0xff]
        %v234 = vld [vmem:[#allocation2 + $0x48] sm:$0xff]
        %v235 = vld [vmem:[#allocation2 + $0x50] sm:$0xff]
        %v236 = vld [vmem:[#allocation2 + $0x58] sm:$0xff]
        %v237 = vld [vmem:[#allocation2 + $0x60] sm:$0xff]
        %v238 = vld [vmem:[#allocation2 + $0x68] sm:$0xff]
        %v239 = vld [vmem:[#allocation2 + $0x70] sm:$0xff]
        %v240 = vld [vmem:[#allocation2 + $0x78] sm:$0xff]
        %v241 = vld [vmem:[#allocation2 + $0x80] sm:$0xff]
        %v242 = vld [vmem:[#allocation2 + $0x88] sm:$0xff]
        %v243 = vld [vmem:[#allocation2 + $0x90] sm:$0xff]
        %v244 = vld [vmem:[#allocation2 + $0x98] sm:$0xff]
        %v245 = vld [vmem:[#allocation2 + $0xa0] sm:$0xff]
        %v246 = vld [vmem:[#allocation2 + $0xa8] sm:$0xff]
        %v247 = vld [vmem:[#allocation2 + $0xb0] sm:$0xff]
        %v248 = vld [vmem:[#allocation2 + $0xb8] sm:$0xff]
        %v249 = vld [vmem:[#allocation2 + $0xc0] sm:$0xff]
        %v250 = vld [vmem:[#allocation2 + $0xc8] sm:$0xff]
        %v251 = vld [vmem:[#allocation2 + $0xd0] sm:$0xff]
        %v252 = vld [vmem:[#allocation2 + $0xd8] sm:$0xff]
        %v253 = vld [vmem:[#allocation2 + $0xe0] sm:$0xff]
        %v254 = vld [vmem:[#allocation2 + $0xe8] sm:$0xff]
        %v255 = vld [vmem:[#allocation2 + $0xf0] sm:$0xff]
        %v256 = vld [vmem:[#allocation2 + $0xf8] sm:$0xff]
        %v258 = vcombine.high %v224, %v224
        %260 = vmatprep.subr.mxu0 0.0
        %261 = vmatpush1.msra.mxu0 %v225
        %262 = vmatprep.subr.mxu0 0.0
        %263 = vmatpush1.msra.mxu0 %v226
        %264 = vmatprep.subr.mxu0 0.0
        %265 = vmatpush1.msra.mxu0 %v227
        %266 = vmatprep.subr.mxu0 0.0
        %267 = vmatpush1.msra.mxu0 %v228
        %268 = vmatprep.subr.mxu0 0.0
        %269 = vmatpush1.msra.mxu0 %v229
        %270 = vmatprep.subr.mxu0 0.0
        %271 = vmatpush1.msra.mxu0 %v230
        %272 = vmatprep.subr.mxu0 0.0
        %273 = vmatpush1.msra.mxu0 %v231
        %274 = vmatprep.subr.mxu0 0.0
        %275 = vmatpush1.msra.mxu0 %v232
        %276 = vmatprep.subr.mxu0 0.0
        %277 = vmatpush1.msra.mxu0 %v233
        %278 = vmatprep.subr.mxu0 0.0
        %279 = vmatpush1.msra.mxu0 %v234
        %280 = vmatprep.subr.mxu0 0.0
        %281 = vmatpush1.msra.mxu0 %v235
        %282 = vmatprep.subr.mxu0 0.0
        %283 = vmatpush1.msra.mxu0 %v236
        %284 = vmatprep.subr.mxu0 0.0
        %285 = vmatpush1.msra.mxu0 %v237
        %286 = vmatprep.subr.mxu0 0.0
        %287 = vmatpush1.msra.mxu0 %v238
        %288 = vmatprep.subr.mxu0 0.0
        %289 = vmatpush1.msra.mxu0 %v239
        %290 = vmatprep.subr.mxu0 0.0
        %291 = vmatpush1.msra.mxu0 %v240
        %292 = vmatprep.subr.mxu0 0.0
        %293 = vmatpush1.msra.mxu0 %v241
        %294 = vmatprep.subr.mxu0 0.0
        %295 = vmatpush1.msra.mxu0 %v242
        %296 = vmatprep.subr.mxu0 0.0
        %297 = vmatpush1.msra.mxu0 %v243
        %298 = vmatprep.subr.mxu0 0.0
        %299 = vmatpush1.msra.mxu0 %v244
        %300 = vmatprep.subr.mxu0 0.0
        %301 = vmatpush1.msra.mxu0 %v245
        %302 = vmatprep.subr.mxu0 0.0
        %303 = vmatpush1.msra.mxu0 %v246
        %304 = vmatprep.subr.mxu0 0.0
        %305 = vmatpush1.msra.mxu0 %v247
        %306 = vmatprep.subr.mxu0 0.0
        %307 = vmatpush1.msra.mxu0 %v248
        %308 = vmatprep.subr.mxu0 0.0
        %309 = vmatpush1.msra.mxu0 %v249
        %310 = vmatprep.subr.mxu0 0.0
        %311 = vmatpush1.msra.mxu0 %v250
        %312 = vmatprep.subr.mxu0 0.0
        %313 = vmatpush1.msra.mxu0 %v251
        %314 = vmatprep.subr.mxu0 0.0
        %315 = vmatpush1.msra.mxu0 %v252
        %316 = vmatprep.subr.mxu0 0.0
        %317 = vmatpush1.msra.mxu0 %v253
        %318 = vmatprep.subr.mxu0 0.0
        %319 = vmatpush1.msra.mxu0 %v254
        %320 = vmatprep.subr.mxu0 0.0
        %321 = vmatpush1.msra.mxu0 %v255
        %322 = vmatprep.subr.mxu0 0.0
        %323 = vmatpush1.msra.mxu0 %v256
        %324 = vmatprep.mubr.f32.mxu0 %v258
        %325 = vmatmul.mubr.f32.gmra.mrb[0].mxu0 %v224
        %v326 = vpop.f32.mrb[0].mxu0
        %v327 = vadd.f32 0.0, %v326
        %v328 = vpop.f32.mrb[0].mxu0
        %329 = vdwg.mxu0
        %v330 = vld [vmem:[%s2] sm:$0xff]
        %v331 = vld [vmem:[%s2 + $0x8] sm:$0xff]
        %v332 = vld [vmem:[%s2 + $0x10] sm:$0xff]
        %v333 = vld [vmem:[%s2 + $0x18] sm:$0xff]
        %v334 = vld [vmem:[%s2 + $0x20] sm:$0xff]
        %v335 = vld [vmem:[%s2 + $0x28] sm:$0xff]
        %v336 = vld [vmem:[%s2 + $0x30] sm:$0xff]
        %v337 = vld [vmem:[%s2 + $0x38] sm:$0xff]
        %v338 = vld [vmem:[%s2 + $0x40] sm:$0xff]
        %v339 = vld [vmem:[%s2 + $0x48] sm:$0xff]
        %v340 = vld [vmem:[%s2 + $0x50] sm:$0xff]
        %v341 = vld [vmem:[%s2 + $0x58] sm:$0xff]
        %v342 = vld [vmem:[%s2 + $0x60] sm:$0xff]
        %v343 = vld [vmem:[%s2 + $0x68] sm:$0xff]
        %v344 = vld [vmem:[%s2 + $0x70] sm:$0xff]
        %v345 = vld [vmem:[%s2 + $0x78] sm:$0xff]
        %vm346 = vcmask 523264
        %v348 = vsel %vm346, %v327, 0
        %350 = vmatprep.subr.mxu0 %v331
        %351 = vmatpush1.msra.mxu0 %v330
        %352 = vmatprep.subr.mxu0 %v333
        %353 = vmatpush1.msra.mxu0 %v332
        %354 = vmatprep.subr.mxu0 %v335
        %355 = vmatpush1.msra.mxu0 %v334
        %356 = vmatprep.subr.mxu0 %v337
        %357 = vmatpush1.msra.mxu0 %v336
        %358 = vmatprep.subr.mxu0 %v339
        %359 = vmatpush1.msra.mxu0 %v338
        %360 = vmatprep.subr.mxu0 %v341
        %361 = vmatpush1.msra.mxu0 %v340
        %362 = vmatprep.subr.mxu0 %v343
        %363 = vmatpush1.msra.mxu0 %v342
        %364 = vmatprep.subr.mxu0 %v345
        %365 = vmatpush1.msra.mxu0 %v344
        %366 = vmatprep.subr.mxu0 0.0
        %367 = vmatpush1.msra.mxu0 0.0
        %368 = vmatprep.subr.mxu0 0.0
        %369 = vmatpush1.msra.mxu0 0.0
        %370 = vmatprep.subr.mxu0 0.0
        %371 = vmatpush1.msra.mxu0 0.0
        %372 = vmatprep.subr.mxu0 0.0
        %373 = vmatpush1.msra.mxu0 0.0
        %374 = vmatprep.subr.mxu0 0.0
        %375 = vmatpush1.msra.mxu0 0.0
        %376 = vmatprep.subr.mxu0 0.0
        %377 = vmatpush1.msra.mxu0 0.0
        %378 = vmatprep.subr.mxu0 0.0
        %379 = vmatpush1.msra.mxu0 0.0
        %380 = vmatprep.subr.mxu0 0.0
        %381 = vmatpush1.msra.mxu0 0.0
        %382 = vmatprep.subr.mxu0 0.0
        %383 = vmatpush1.msra.mxu0 0.0
        %384 = vmatprep.subr.mxu0 0.0
        %385 = vmatpush1.msra.mxu0 0.0
        %386 = vmatprep.subr.mxu0 0.0
        %387 = vmatpush1.msra.mxu0 0.0
        %388 = vmatprep.subr.mxu0 0.0
        %389 = vmatpush1.msra.mxu0 0.0
        %390 = vmatprep.subr.mxu0 0.0
        %391 = vmatpush1.msra.mxu0 0.0
        %392 = vmatprep.subr.mxu0 0.0
        %393 = vmatpush1.msra.mxu0 0.0
        %394 = vmatprep.subr.mxu0 0.0
        %395 = vmatpush1.msra.mxu0 0.0
        %396 = vmatprep.subr.mxu0 0.0
        %397 = vmatpush1.msra.mxu0 0.0
        %398 = vmatprep.subr.mxu0 0.0
        %399 = vmatpush1.msra.mxu0 0.0
        %400 = vmatprep.subr.mxu0 0.0
        %401 = vmatpush1.msra.mxu0 0.0
        %402 = vmatprep.subr.mxu0 0.0
        %403 = vmatpush1.msra.mxu0 0.0
        %404 = vmatprep.subr.mxu0 0.0
        %405 = vmatpush1.msra.mxu0 0.0
        %406 = vmatprep.subr.mxu0 0.0
        %407 = vmatpush1.msra.mxu0 0.0
        %408 = vmatprep.subr.mxu0 0.0
        %409 = vmatpush1.msra.mxu0 0.0
        %410 = vmatprep.subr.mxu0 0.0
        %411 = vmatpush1.msra.mxu0 0.0
        %412 = vmatprep.subr.mxu0 0.0
        %413 = vmatpush1.msra.mxu0 0.0
        %414 = vmatprep.mubr.f32.mxu0 0.0
        %415 = vmatmul.mubr.f32.gmra.mrb[0].mxu0 %v348
        %v416 = vpop.f32.mrb[0].mxu0
        %v417 = vadd.f32 0.0, %v416
        %v418 = vpop.f32.mrb[0].mxu0
        %v419 = vadd.f32 0.0, %v418
        %420 = vdwg.mxu0
        %v423 = vcombine.low %v417, %v419
        %v425 = vsub.f32 %v224, %v423
        %426 = vst [vmem:[%s219] sm:$0x77] %v425
        %vm427 = vcmask 518144
        %428 = vst.msk [vmem:[%s223] sm:$0x7] %vm427, %v327
        %p429 = scmp.lt.s32.totalorder %s17, 1
        %s430 = scalar_select %p429, %s17, 1
        %s431 = smul.addr %s430, 2
        %s432 = smul.addr %s431, 4
        %s433 = scalar_lea.vmem %s3, %s432
        %p434 = scmp.lt.s32.totalorder %s17, 1
        %s435 = scalar_select %p434, %s17, 1
        %s436 = smul.addr %s435, 4
        %s437 = scalar_lea.vmem %s4, %s436
        // Predicated region
        $region37: #{model_forward.5} parent=31 // pred_check
          %p438 = pneg %p103
        $region38: #{model_forward.5} parent=31 // pred_check_branch
          %440 = sbr.rel (%p438) target = $region40
        $region39: #{model_forward.5} parent=31 // pred_region
          _
        $region40: #{model_forward.5} parent=31 // pred_fallthru
          _
        // Predicated region
        $region41: #{model_forward.5} parent=31 // pred_check
          %p441 = pneg %p129
        $region42: #{model_forward.5} parent=31 // pred_check_branch
          %443 = sbr.rel (%p441) target = $region44
        $region43: #{model_forward.5} parent=31 // pred_region
          _
        $region44: #{model_forward.5} parent=31 // pred_fallthru
          _
      $region32: #{model_forward.5} parent=5 // pred_fallthru
        _
      %p444 = scmp.le.s32.totalorder 2, %s12
      // Predicated region
      $region45: #{model_forward.5} parent=5 // pred_check
        %p445 = pneg %p444
      $region46: #{model_forward.5} parent=5 // pred_check_branch
        %447 = sbr.rel (%p445) target = $region48
      $region47: #{model_forward.5} parent=5 // pred_region
        %s448 = ssub.s32 %s12, 2
        // Predicated region
        $region49: #{model_forward.5} parent=47 // pred_check
          %p449 = pneg %p109
        $region50: #{model_forward.5} parent=47 // pred_check_branch
          %451 = sbr.rel (%p449) target = $region52
        $region51: #{model_forward.5} parent=47 // pred_region
          %p452 = scmp.lt.s32.totalorder %s18, 1
          %s453 = scalar_select %p452, %s18, 1
          %s454 = smul.addr %s453, 2
          %s455 = smul.addr %s454, 4
          %s456 = scalar_lea.vmem %s3, %s455
        $region52: #{model_forward.5} parent=47 // pred_fallthru
          _
        // Predicated region
        $region53: #{model_forward.5} parent=47 // pred_check
          %p457 = pneg %p135
        $region54: #{model_forward.5} parent=47 // pred_check_branch
          %459 = sbr.rel (%p457) target = $region56
        $region55: #{model_forward.5} parent=47 // pred_region
          %p460 = scmp.lt.s32.totalorder %s18, 1
          %s461 = scalar_select %p460, %s18, 1
          %s462 = smul.addr %s461, 4
          %s463 = scalar_lea.vmem %s4, %s462
        $region56: #{model_forward.5} parent=47 // pred_fallthru
          _
      $region48: #{model_forward.5} parent=5 // pred_fallthru
        _
    $region6: #{model_forward.5} parent=1 // loop_footer
      %s16 = sadd.s32 1, %s12
    $region7: #{model_forward.5} parent=1 // loop_footer_branch
      %11 = sbr.rel target = $region3
    $region8: #{model_forward.5} parent=1 // loop_exit
      _
    %464 = vsyncpa [#allocation3], 1
    %s465 = scalar_lea.sflag [#allocation3], 1
    %466 = vsyncpa %s465, 1

// kernel: model_forward.9
$region0: #{model_forward.9}
  #allocation0 [shape = 'u32[]', space=smem, size = 0x4, offset = 0x4, fixed_abs, tag = 'smem constant byte address 0x4 - core index']
  #allocation1 [shape = 'u32[144,128]{1,0:T(1,128)}', space=vmem, size = 0x12000, scoped, tag = 'internal scratch']
  #allocation2 [shape = 'f32[3,512]{1,0:T(4,128)}', space=vmem, size = 0x2000, scoped, tag = 'scratch operand']
  %s0 = inlined_call_operand.vmem [shape: f32[2,3,64], index: 0, kind: input, shape index: {}]
  %s1 = inlined_call_operand.vmem [shape: f32[64,256], index: 1, kind: input, shape index: {}]
  %s2 = inlined_call_operand.vmem [shape: f32[2,3,256], index: 2, kind: input, shape index: {}]
  %s3 = inlined_call_operand.vmem [shape: f32[9,3,3], index: 3, kind: input, shape index: {}]
  %s4 = inlined_call_operand.vmem [shape: f32[3,1], index: 4, kind: input, shape index: {}]
  %s5 = inlined_call_operand.vmem [shape: f32[9,1,256], index: 5, kind: input, shape index: {}]
  %s6 = inlined_call_operand.vmem [shape: f32[2,3,256], index: 6, kind: output, shape index: {}]
  %s7 = sld [smem:[#allocation0]]
  $region57: #{model_forward.9} parent=0
    _
  %s9 = ssub.s32 1, %s7
  %s10 = scalar_select 0, %s9, %s7
  loop: start=0, step=1, limit=4
  $region2: #{model_forward.9} parent=0 // loop_pre_header
    _
  $region3: #{model_forward.9} parent=0 // loop_header
    %s12 = sphi 0, %s16
    %p13 = scmp.ge.s32.totalorder %s12, 4
    %s22 = sphi 0, %s24
    %s25 = sphi 0, %s22
    %s26 = sphi 0, %s25
    %s42 = sphi 0, %s26
    %s46 = sphi 0, %s46
    %s48 = sphi 0, %s46
    %s49 = sphi 0, %s48
    %s63 = sphi 0, %s49
    %s69 = sphi 0, %s71
    %s72 = sphi 0, %s69
    %s73 = sphi 0, %s72
    %s89 = sphi 0, %s73
    %s93 = sphi 0, %s93
    %s95 = sphi 0, %s93
    %s96 = sphi 0, %s95
    %s110 = sphi 0, %s96
    %s114 = sphi 0, %s114
    %s116 = sphi 0, %s114
    %s117 = sphi 0, %s116
    %s131 = sphi 0, %s117
    %s135 = sphi 0, %s135
    %s137 = sphi 0, %s135
    %s138 = sphi 0, %s137
    %s152 = sphi 0, %s138
    %s158 = sphi 0, %s160
    %s161 = sphi 0, %s158
    %s162 = sphi 0, %s161
    %s178 = sphi 0, %s162
  $region4: #{model_forward.9} parent=0 // loop_header_branch
    %15 = sbr.rel (%p13) target = $region8
  $region5: #{model_forward.9} parent=0 // loop_body
    %s17 = ssub.s32 %s12, 1
    %s18 = ssub.s32 %s12, 2
    %s19 = sadd.s32 %s12, 1
    %s20 = ssub.s32 %s12, %s19
    %p21 = scmp.eq.s32.totalorder %s20, 0
    %s23 = sadd.s32 %s22, 1
    %s24 = scalar_select %p21, %s22, %s23
    %p27 = pneg %p21
    %p28 = scmp.eq.s32.totalorder %s12, 1
    %p29 = por %p27, %p28
    %p30 = scmp.ne.s32.totalorder %s22, %s25
    %p31 = scmp.eq.s32.totalorder %s12, 0
    %p32 = por %p30, %p31
    %p33 = scmp.ne.s32.totalorder %s22, %s25
    %p34 = scmp.eq.s32.totalorder %s17, 1
    %p35 = por %p33, %p34
    %p36 = scmp.ne.s32.totalorder %s25, %s26
    %p37 = scmp.eq.s32.totalorder %s17, 0
    %p38 = por %p36, %p37
    %p39 = scmp.ne.s32.totalorder %s25, %s26
    %p40 = scmp.eq.s32.totalorder %s18, 1
    %p41 = por %p39, %p40
    %p43 = scmp.ne.s32.totalorder %s26, %s42
    %p44 = scmp.eq.s32.totalorder %s18, 0
    %p45 = por %p43, %p44
    %s47 = sadd.s32 %s46, 1
    %p50 = scmp.eq.s32.totalorder %s12, 1
    %p51 = scmp.ne.s32.totalorder %s46, %s48
    %p52 = scmp.eq.s32.totalorder %s12, 0
    %p53 = por %p51, %p52
    %p54 = scmp.ne.s32.totalorder %s46, %s48
    %p55 = scmp.eq.s32.totalorder %s17, 1
    %p56 = por %p54, %p55
    %p57 = scmp.ne.s32.totalorder %s48, %s49
    %p58 = scmp.eq.s32.totalorder %s17, 0
    %p59 = por %p57, %p58
    %p60 = scmp.ne.s32.totalorder %s48, %s49
    %p61 = scmp.eq.s32.totalorder %s18, 1
    %p62 = por %p60, %p61
    %p64 = scmp.ne.s32.totalorder %s49, %s63
    %p65 = scmp.eq.s32.totalorder %s18, 0
    %p66 = por %p64, %p65
    %s67 = ssub.s32 %s12, %s19
    %p68 = scmp.eq.s32.totalorder %s67, 0
    %s70 = sadd.s32 %s69, 1
    %s71 = scalar_select %p68, %s69, %s70
    %p74 = pneg %p68
    %p75 = scmp.eq.s32.totalorder %s12, 1
    %p76 = por %p74, %p75
    %p77 = scmp.ne.s32.totalorder %s69, %s72
    %p78 = scmp.eq.s32.totalorder %s12, 0
    %p79 = por %p77, %p78
    %p80 = scmp.ne.s32.totalorder %s69, %s72
    %p81 = scmp.eq.s32.totalorder %s17, 1
    %p82 = por %p80, %p81
    %p83 = scmp.ne.s32.totalorder %s72, %s73
    %p84 = scmp.eq.s32.totalorder %s17, 0
    %p85 = por %p83, %p84
    %p86 = scmp.ne.s32.totalorder %s72, %s73
    %p87 = scmp.eq.s32.totalorder %s18, 1
    %p88 = por %p86, %p87
    %p90 = scmp.ne.s32.totalorder %s73, %s89
    %p91 = scmp.eq.s32.totalorder %s18, 0
    %p92 = por %p90, %p91
    %s94 = sadd.s32 %s93, 1
    %p97 = scmp.eq.s32.totalorder %s12, 1
    %p98 = scmp.ne.s32.totalorder %s93, %s95
    %p99 = scmp.eq.s32.totalorder %s12, 0
    %p100 = por %p98, %p99
    %p101 = scmp.ne.s32.totalorder %s93, %s95
    %p102 = scmp.eq.s32.totalorder %s17, 1
    %p103 = por %p101, %p102
    %p104 = scmp.ne.s32.totalorder %s95, %s96
    %p105 = scmp.eq.s32.totalorder %s17, 0
    %p106 = por %p104, %p105
    %p107 = scmp.ne.s32.totalorder %s95, %s96
    %p108 = scmp.eq.s32.totalorder %s18, 1
    %p109 = por %p107, %p108
    %p111 = scmp.ne.s32.totalorder %s96, %s110
    %p112 = scmp.eq.s32.totalorder %s18, 0
    %p113 = por %p111, %p112
    %s115 = sadd.s32 %s114, 1
    %p118 = scmp.eq.s32.totalorder %s12, 1
    %p119 = scmp.ne.s32.totalorder %s114, %s116
    %p120 = scmp.eq.s32.totalorder %s12, 0
    %p121 = por %p119, %p120
    %p122 = scmp.ne.s32.totalorder %s114, %s116
    %p123 = scmp.eq.s32.totalorder %s17, 1
    %p124 = por %p122, %p123
    %p125 = scmp.ne.s32.totalorder %s116, %s117
    %p126 = scmp.eq.s32.totalorder %s17, 0
    %p127 = por %p125, %p126
    %p128 = scmp.ne.s32.totalorder %s116, %s117
    %p129 = scmp.eq.s32.totalorder %s18, 1
    %p130 = por %p128, %p129
    %p132 = scmp.ne.s32.totalorder %s117, %s131
    %p133 = scmp.eq.s32.totalorder %s18, 0
    %p134 = por %p132, %p133
    %s136 = sadd.s32 %s135, 1
    %p139 = scmp.eq.s32.totalorder %s12, 1
    %p140 = scmp.ne.s32.totalorder %s135, %s137
    %p141 = scmp.eq.s32.totalorder %s12, 0
    %p142 = por %p140, %p141
    %p143 = scmp.ne.s32.totalorder %s135, %s137
    %p144 = scmp.eq.s32.totalorder %s17, 1
    %p145 = por %p143, %p144
    %p146 = scmp.ne.s32.totalorder %s137, %s138
    %p147 = scmp.eq.s32.totalorder %s17, 0
    %p148 = por %p146, %p147
    %p149 = scmp.ne.s32.totalorder %s137, %s138
    %p150 = scmp.eq.s32.totalorder %s18, 1
    %p151 = por %p149, %p150
    %p153 = scmp.ne.s32.totalorder %s138, %s152
    %p154 = scmp.eq.s32.totalorder %s18, 0
    %p155 = por %p153, %p154
    %s156 = ssub.s32 %s12, %s19
    %p157 = scmp.eq.s32.totalorder %s156, 0
    %s159 = sadd.s32 %s158, 1
    %s160 = scalar_select %p157, %s158, %s159
    %p163 = pneg %p157
    %p164 = scmp.eq.s32.totalorder %s12, 1
    %p165 = por %p163, %p164
    %p166 = scmp.ne.s32.totalorder %s158, %s161
    %p167 = scmp.eq.s32.totalorder %s12, 0
    %p168 = por %p166, %p167
    %p169 = scmp.ne.s32.totalorder %s158, %s161
    %p170 = scmp.eq.s32.totalorder %s17, 1
    %p171 = por %p169, %p170
    %p172 = scmp.ne.s32.totalorder %s161, %s162
    %p173 = scmp.eq.s32.totalorder %s17, 0
    %p174 = por %p172, %p173
    %p175 = scmp.ne.s32.totalorder %s161, %s162
    %p176 = scmp.eq.s32.totalorder %s18, 1
    %p177 = por %p175, %p176
    %p179 = scmp.ne.s32.totalorder %s162, %s178
    %p180 = scmp.eq.s32.totalorder %s18, 0
    %p181 = por %p179, %p180
    %p182 = scmp.le.s32.totalorder 1, %s12
    %p183 = scmp.lt.s32.totalorder %s12, 3
    %p184 = pnand %p182, %p183
    %p185 = pneg %p184
    // Predicated region
    $region9: #{model_forward.9} parent=5 // pred_check
      _
    $region10: #{model_forward.9} parent=5 // pred_check_branch
      %187 = sbr.rel (%p184) target = $region12
    $region11: #{model_forward.9} parent=5 // pred_region
      %s188 = ssub.s32 %s12, 1
      // Predicated region
      $region13: #{model_forward.9} parent=11 // pred_check
        %p189 = pneg %p59
      $region14: #{model_forward.9} parent=11 // pred_check_branch
        %191 = sbr.rel (%p189) target = $region16
      $region15: #{model_forward.9} parent=11 // pred_region
        _
      $region16: #{model_forward.9} parent=11 // pred_fallthru
        _
      // Predicated region
      $region17: #{model_forward.9} parent=11 // pred_check
        %p192 = pneg %p106
      $region18: #{model_forward.9} parent=11 // pred_check_branch
        %194 = sbr.rel (%p192) target = $region20
      $region19: #{model_forward.9} parent=11 // pred_region
        _
      $region20: #{model_forward.9} parent=11 // pred_fallthru
        _
      // Predicated region
      $region21: #{model_forward.9} parent=11 // pred_check
        %p195 = pneg %p127
      $region22: #{model_forward.9} parent=11 // pred_check_branch
        %197 = sbr.rel (%p195) target = $region24
      $region23: #{model_forward.9} parent=11 // pred_region
        _
      $region24: #{model_forward.9} parent=11 // pred_fallthru
        _
      // Predicated region
      $region25: #{model_forward.9} parent=11 // pred_check
        %p198 = pneg %p148
      $region26: #{model_forward.9} parent=11 // pred_check_branch
        %200 = sbr.rel (%p198) target = $region28
      $region27: #{model_forward.9} parent=11 // pred_region
        _
      $region28: #{model_forward.9} parent=11 // pred_fallthru
        _
    $region12: #{model_forward.9} parent=5 // pred_fallthru
      _
    %p201 = scmp.lt.s32.totalorder %s12, 2
    // Predicated region
    $region29: #{model_forward.9} parent=5 // pred_check
      %p202 = pneg %p201
    $region30: #{model_forward.9} parent=5 // pred_check_branch
      %204 = sbr.rel (%p202) target = $region32
    $region31: #{model_forward.9} parent=5 // pred_region
      // Predicated region
      $region33: #{model_forward.9} parent=31 // pred_check
        %p205 = pneg %p32
      $region34: #{model_forward.9} parent=31 // pred_check_branch
        %207 = sbr.rel (%p205) target = $region36
      $region35: #{model_forward.9} parent=31 // pred_region
        %p208 = scmp.lt.s32.totalorder %s12, 1
        %s209 = scalar_select %p208, %s12, 1
        %s210 = smul.addr %s209, 4
        %s211 = scalar_lea.vmem %s0, %s210
      $region36: #{model_forward.9} parent=31 // pred_fallthru
        _
      // Predicated region
      $region37: #{model_forward.9} parent=31 // pred_check
        %p212 = pneg %p79
      $region38: #{model_forward.9} parent=31 // pred_check_branch
        %214 = sbr.rel (%p212) target = $region40
      $region39: #{model_forward.9} parent=31 // pred_region
        %p215 = scmp.lt.s32.totalorder %s12, 1
        %s216 = scalar_select %p215, %s12, 1
        %s217 = smul.addr %s216, 2
        %s218 = smul.addr %s217, 4
        %s219 = scalar_lea.vmem %s2, %s218
      $region40: #{model_forward.9} parent=31 // pred_fallthru
        _
    $region32: #{model_forward.9} parent=5 // pred_fallthru
      _
    %p220 = scmp.le.s32.totalorder 1, %s12
    %p221 = scmp.lt.s32.totalorder %s12, 3
    %p222 = pnand %p220, %p221
    %p223 = pneg %p222
    // Predicated region
    $region41: #{model_forward.9} parent=5 // pred_check
      _
    $region42: #{model_forward.9} parent=5 // pred_check_branch
      %225 = sbr.rel (%p222) target = $region44
    $region43: #{model_forward.9} parent=5 // pred_region
      %s226 = ssub.s32 %s12, 1
      %p227 = scmp.lt.s32.totalorder %s17, 1
      %s228 = scalar_select %p227, %s17, 1
      %s229 = smul.addr %s228, 4
      %s230 = scalar_lea.vmem %s0, %s229
      %p231 = pneg %p38
      %p232 = pneg %p35
      %p233 = pneg %p59
      %p234 = pneg %p56
      %p235 = scmp.lt.s32.totalorder %s17, 1
      %s236 = scalar_select %p235, %s17, 1
      %s237 = smul.addr %s236, 2
      %s238 = smul.addr %s237, 4
      %s239 = scalar_lea.vmem %s2, %s238
      %p240 = pneg %p85
      %p241 = pneg %p82
      %p242 = pneg %p106
      %p243 = pneg %p103
      %p244 = pneg %p127
      %p245 = pneg %p124
      %p246 = pneg %p148
      %p247 = pneg %p145
      %p248 = pneg %p174
      %p249 = pneg %p171
      %p250 = scmp.lt.s32.totalorder %s17, 1
      %s251 = scalar_select %p250, %s17, 1
      %s252 = smul.addr %s251, 2
      %s253 = smul.addr %s252, 4
      %s254 = scalar_lea.vmem %s6, %s253
      %p255 = scmp.lt.s32.totalorder %s17, 1
      %s256 = scalar_select %p255, %s17, 1
      %s257 = smul.addr %s256, 4
      %s258 = scalar_lea.vmem %s0, %s257
      %p259 = scmp.lt.s32.totalorder %s17, 1
      %s260 = scalar_select %p259, %s17, 1
      %s261 = smul.addr %s260, 2
      %s262 = smul.addr %s261, 4
      %s263 = scalar_lea.vmem %s2, %s262
      %p264 = scmp.lt.s32.totalorder %s17, 1
      %s265 = scalar_select %p264, %s17, 1
      %s266 = smul.addr %s265, 2
      %s267 = smul.addr %s266, 4
      %s268 = scalar_lea.vmem %s6, %s267
      %v269 = vld [vmem:[%s258] sm:$0x7]
      %v270 = vld [vmem:[%s1] sm:$0xff]
      %v271 = vld [vmem:[%s1 + $0x8] sm:$0xff]
      %v272 = vld [vmem:[%s1 + $0x10] sm:$0xff]
      %v273 = vld [vmem:[%s1 + $0x18] sm:$0xff]
      %v274 = vld [vmem:[%s1 + $0x20] sm:$0xff]
      %v275 = vld [vmem:[%s1 + $0x28] sm:$0xff]
      %v276 = vld [vmem:[%s1 + $0x30] sm:$0xff]
      %v277 = vld [vmem:[%s1 + $0x38] sm:$0xff]
      %v278 = vld [vmem:[%s1 + $0x40] sm:$0xff]
      %v279 = vld [vmem:[%s1 + $0x48] sm:$0xff]
      %v280 = vld [vmem:[%s1 + $0x50] sm:$0xff]
      %v281 = vld [vmem:[%s1 + $0x58] sm:$0xff]
      %v282 = vld [vmem:[%s1 + $0x60] sm:$0xff]
      %v283 = vld [vmem:[%s1 + $0x68] sm:$0xff]
      %v284 = vld [vmem:[%s1 + $0x70] sm:$0xff]
      %v285 = vld [vmem:[%s1 + $0x78] sm:$0xff]
      %v286 = vld [vmem:[%s263] sm:$0x77]
      %v288 = vcombine.high %v286, %v286
      %vm290 = vcmask 523264
      %v292 = vsel %vm290, %v269, 0
      %294 = vmatprep.subr.mxu0 %v271
      %295 = vmatpush1.msra.mxu0 %v270
      %296 = vmatprep.subr.mxu0 %v273
      %297 = vmatpush1.msra.mxu0 %v272
      %298 = vmatprep.subr.mxu0 %v275
      %299 = vmatpush1.msra.mxu0 %v274
      %300 = vmatprep.subr.mxu0 %v277
      %301 = vmatpush1.msra.mxu0 %v276
      %302 = vmatprep.subr.mxu0 %v279
      %303 = vmatpush1.msra.mxu0 %v278
      %304 = vmatprep.subr.mxu0 %v281
      %305 = vmatpush1.msra.mxu0 %v280
      %306 = vmatprep.subr.mxu0 %v283
      %307 = vmatpush1.msra.mxu0 %v282
      %308 = vmatprep.subr.mxu0 %v285
      %309 = vmatpush1.msra.mxu0 %v284
      %310 = vmatprep.subr.mxu0 0.0
      %311 = vmatpush1.msra.mxu0 0.0
      %312 = vmatprep.subr.mxu0 0.0
      %313 = vmatpush1.msra.mxu0 0.0
      %314 = vmatprep.subr.mxu0 0.0
      %315 = vmatpush1.msra.mxu0 0.0
      %316 = vmatprep.subr.mxu0 0.0
      %317 = vmatpush1.msra.mxu0 0.0
      %318 = vmatprep.subr.mxu0 0.0
      %319 = vmatpush1.msra.mxu0 0.0
      %320 = vmatprep.subr.mxu0 0.0
      %321 = vmatpush1.msra.mxu0 0.0
      %322 = vmatprep.subr.mxu0 0.0
      %323 = vmatpush1.msra.mxu0 0.0
      %324 = vmatprep.subr.mxu0 0.0
      %325 = vmatpush1.msra.mxu0 0.0
      %326 = vmatprep.subr.mxu0 0.0
      %327 = vmatpush1.msra.mxu0 0.0
      %328 = vmatprep.subr.mxu0 0.0
      %329 = vmatpush1.msra.mxu0 0.0
      %330 = vmatprep.subr.mxu0 0.0
      %331 = vmatpush1.msra.mxu0 0.0
      %332 = vmatprep.subr.mxu0 0.0
      %333 = vmatpush1.msra.mxu0 0.0
      %334 = vmatprep.subr.mxu0 0.0
      %335 = vmatpush1.msra.mxu0 0.0
      %336 = vmatprep.subr.mxu0 0.0
      %337 = vmatpush1.msra.mxu0 0.0
      %338 = vmatprep.subr.mxu0 0.0
      %339 = vmatpush1.msra.mxu0 0.0
      %340 = vmatprep.subr.mxu0 0.0
      %341 = vmatpush1.msra.mxu0 0.0
      %342 = vmatprep.subr.mxu0 0.0
      %343 = vmatpush1.msra.mxu0 0.0
      %344 = vmatprep.subr.mxu0 0.0
      %345 = vmatpush1.msra.mxu0 0.0
      %346 = vmatprep.subr.mxu0 0.0
      %347 = vmatpush1.msra.mxu0 0.0
      %348 = vmatprep.subr.mxu0 0.0
      %349 = vmatpush1.msra.mxu0 0.0
      %350 = vmatprep.subr.mxu0 0.0
      %351 = vmatpush1.msra.mxu0 0.0
      %352 = vmatprep.subr.mxu0 0.0
      %353 = vmatpush1.msra.mxu0 0.0
      %354 = vmatprep.subr.mxu0 0.0
      %355 = vmatpush1.msra.mxu0 0.0
      %356 = vmatprep.subr.mxu0 0.0
      %357 = vmatpush1.msra.mxu0 0.0
      %358 = vmatprep.mubr.f32.mxu0 0.0
      %359 = vmatmul.mubr.f32.gmra.mrb[0].mxu0 %v292
      %v360 = vpop.f32.mrb[0].mxu0
      %v361 = vadd.f32 %v286, %v360
      %v362 = vpop.f32.mrb[0].mxu0
      %v363 = vadd.f32 %v288, %v362
      %364 = vdwg.mxu0
      %365 = vst [vmem:[#allocation2] sm:$0x77] 0.0
      %366 = vst [vmem:[#allocation2 + $0x8] sm:$0x77] 0.0
      %v369 = vcombine.low %v361, %v363
      %371 = vst [vmem:[#allocation2 + $0x4] sm:$0x77] %v369
      %v372 = vld [vmem:[#allocation2] sm:$0x77]
      %v373 = vld [vmem:[#allocation2 + $0x8] sm:$0x7]
      %v374 = vld [vmem:[%s5] sm:$0x3]
      %v376 = vlaneseq
      %v377 = vshrl.u32 %v376, 7
      %v378 = vsub.s32 0, %v377
      %v379 = vrot.slane %v374, %v378
      %v380 = vlaneseq
      %v381 = vshrl.u32 %v380, 7
      %v382 = vsub.s32 1, %v381
      %v383 = vrot.slane %v374, %v382
      %v384 = vcombine.low %v379, %v383
      %385 = vrot.lane.b32.xlu0 %v384, 111
      %v386 = vpop.permute.xlu0 %385
      %v387 = vrot.slane %v386, 4
      %vm388 = vcmask 908288
      %v389 = vsel %vm388, %v387, %v386
      %v392 = vmul.f32 %v372, %v389
      %v393 = vmul.f32 %v373, %v387
      %v394 = vld [vmem:[%s3] sm:$0x7]
      %s395 = scalar_lea.vmem %s5, 2
      %v396 = vld [vmem:[%s395] sm:$0x3]
      %v398 = vlaneseq
      %v399 = vshrl.u32 %v398, 7
      %v400 = vsub.s32 0, %v399
      %v401 = vrot.slane %v396, %v400
      %v402 = vlaneseq
      %v403 = vshrl.u32 %v402, 7
      %v404 = vsub.s32 1, %v403
      %v405 = vrot.slane %v396, %v404
      %v406 = vcombine.low %v401, %v405
      %407 = vrot.lane.b32.xlu0 %v406, 112
      %v408 = vpop.permute.xlu0 %407
      %v409 = vrot.slane %v408, 4
      %vm410 = vcmask 916480
      %v411 = vsel %vm410, %v409, %v408
      %v414 = vmul.f32 %v372, %v411
      %v415 = vmul.f32 %v373, %v409
      %s416 = scalar_lea.vmem %s3, 4
      %v417 = vld [vmem:[%s416] sm:$0x7]
      %v420 = vcombine.high %v414, %v414
      %421 = vrot.lane.b32.xlu0 %v414, 16
      %v422 = vpop.permute.xlu0 %421
      %423 = vrot.lane.b32.xlu0 %v420, 16
      %v424 = vpop.permute.xlu0 %423
      %425 = vrot.lane.b32.xlu0 %v415, 16
      %v426 = vpop.permute.xlu0 %425
      %vm427 = vcmask 130048
      %v428 = vsel %vm427, %v422, %v424
      %v429 = vsel %vm427, %v424, %v426
      %vm430 = vcmask 23552
      %v432 = vsel %vm430, %v417, 0
      %vm434 = vcmask 1042432
      %v435 = vsel %vm434, %v428, 0
      %v437 = vsel %vm434, %v429, 0
      %439 = vmatprep.subr.mxu0 %v437
      %440 = vmatpush1.msra.mxu0 %v435
      %441 = vmatprep.subr.mxu0 0.0
      %442 = vmatpush1.msra.mxu0 0.0
      %443 = vmatprep.subr.mxu0 0.0
      %444 = vmatpush1.msra.mxu0 0.0
      %445 = vmatprep.subr.mxu0 0.0
      %446 = vmatpush1.msra.mxu0 0.0
      %447 = vmatprep.subr.mxu0 0.0
      %448 = vmatpush1.msra.mxu0 0.0
      %449 = vmatprep.subr.mxu0 0.0
      %450 = vmatpush1.msra.mxu0 0.0
      %451 = vmatprep.subr.mxu0 0.0
      %452 = vmatpush1.msra.mxu0 0.0
      %453 = vmatprep.subr.mxu0 0.0
      %454 = vmatpush1.msra.mxu0 0.0
      %455 = vmatprep.subr.mxu0 0.0
      %456 = vmatpush1.msra.mxu0 0.0
      %457 = vmatprep.subr.mxu0 0.0
      %458 = vmatpush1.msra.mxu0 0.0
      %459 = vmatprep.subr.mxu0 0.0
      %460 = vmatpush1.msra.mxu0 0.0
      %461 = vmatprep.subr.mxu0 0.0
      %462 = vmatpush1.msra.mxu0 0.0
      %463 = vmatprep.subr.mxu0 0.0
      %464 = vmatpush1.msra.mxu0 0.0
      %465 = vmatprep.subr.mxu0 0.0
      %466 = vmatpush1.msra.mxu0 0.0
      %467 = vmatprep.subr.mxu0 0.0
      %468 = vmatpush1.msra.mxu0 0.0
      %469 = vmatprep.subr.mxu0 0.0
      %470 = vmatpush1.msra.mxu0 0.0
      %471 = vmatprep.subr.mxu0 0.0
      %472 = vmatpush1.msra.mxu0 0.0
      %473 = vmatprep.subr.mxu0 0.0
      %474 = vmatpush1.msra.mxu0 0.0
      %475 = vmatprep.subr.mxu0 0.0
      %476 = vmatpush1.msra.mxu0 0.0
      %477 = vmatprep.subr.mxu0 0.0
      %478 = vmatpush1.msra.mxu0 0.0
      %479 = vmatprep.subr.mxu0 0.0
      %480 = vmatpush1.msra.mxu0 0.0
      %481 = vmatprep.subr.mxu0 0.0
      %482 = vmatpush1.msra.mxu0 0.0
      %483 = vmatprep.subr.mxu0 0.0
      %484 = vmatpush1.msra.mxu0 0.0
      %485 = vmatprep.subr.mxu0 0.0
      %486 = vmatpush1.msra.mxu0 0.0
      %487 = vmatprep.subr.mxu0 0.0
      %488 = vmatpush1.msra.mxu0 0.0
      %489 = vmatprep.subr.mxu0 0.0
      %490 = vmatpush1.msra.mxu0 0.0
      %491 = vmatprep.subr.mxu0 0.0
      %492 = vmatpush1.msra.mxu0 0.0
      %493 = vmatprep.subr.mxu0 0.0
      %494 = vmatpush1.msra.mxu0 0.0
      %495 = vmatprep.subr.mxu0 0.0
      %496 = vmatpush1.msra.mxu0 0.0
      %497 = vmatprep.subr.mxu0 0.0
      %498 = vmatpush1.msra.mxu0 0.0
      %499 = vmatprep.subr.mxu0 0.0
      %500 = vmatpush1.msra.mxu0 0.0
      %501 = vmatprep.subr.mxu0 0.0
      %502 = vmatpush1.msra.mxu0 0.0
      %503 = vmatprep.mubr.f32.mxu0 0.0
      %504 = vmatmul.mubr.f32.gmra.mrb[0].mxu0 %v432
      %v505 = vpop.f32.mrb[0].mxu0
      %v506 = vadd.f32 0.0, %v505
      %v507 = vpop.f32.mrb[0].mxu0
      %v508 = vadd.f32 0.0, %v507
      %509 = vdwg.mxu0
      %v512 = vcombine.high %v392, %v392
      %513 = vrot.lane.b32.xlu0 %v392, 17
      %v514 = vpop.permute.xlu0 %513
      %515 = vrot.lane.b32.xlu0 %v512, 17
      %v516 = vpop.permute.xlu0 %515
      %517 = vrot.lane.b32.xlu0 %v393, 17
      %v518 = vpop.permute.xlu0 %517
      %vm519 = vcmask 138240
      %v520 = vsel %vm519, %v514, %v516
      %v521 = vsel %vm519, %v516, %v518
      %v523 = vsel %vm430, %v394, 0
      %v525 = vsel %vm434, %v520, 0
      %v527 = vsel %vm434, %v521, 0
      %529 = vmatprep.subr.mxu0 %v527
      %530 = vmatpush1.msra.mxu0 %v525
      %531 = vmatprep.subr.mxu0 0.0
      %532 = vmatpush1.msra.mxu0 0.0
      %533 = vmatprep.subr.mxu0 0.0
      %534 = vmatpush1.msra.mxu0 0.0
      %535 = vmatprep.subr.mxu0 0.0
      %536 = vmatpush1.msra.mxu0 0.0
      %537 = vmatprep.subr.mxu0 0.0
      %538 = vmatpush1.msra.mxu0 0.0
      %539 = vmatprep.subr.mxu0 0.0
      %540 = vmatpush1.msra.mxu0 0.0
      %541 = vmatprep.subr.mxu0 0.0
      %542 = vmatpush1.msra.mxu0 0.0
      %543 = vmatprep.subr.mxu0 0.0
      %544 = vmatpush1.msra.mxu0 0.0
      %545 = vmatprep.subr.mxu0 0.0
      %546 = vmatpush1.msra.mxu0 0.0
      %547 = vmatprep.subr.mxu0 0.0
      %548 = vmatpush1.msra.mxu0 0.0
      %549 = vmatprep.subr.mxu0 0.0
      %550 = vmatpush1.msra.mxu0 0.0
      %551 = vmatprep.subr.mxu0 0.0
      %552 = vmatpush1.msra.mxu0 0.0
      %553 = vmatprep.subr.mxu0 0.0
      %554 = vmatpush1.msra.mxu0 0.0
      %555 = vmatprep.subr.mxu0 0.0
      %556 = vmatpush1.msra.mxu0 0.0
      %557 = vmatprep.subr.mxu0 0.0
      %558 = vmatpush1.msra.mxu0 0.0
      %559 = vmatprep.subr.mxu0 0.0
      %560 = vmatpush1.msra.mxu0 0.0
      %561 = vmatprep.subr.mxu0 0.0
      %562 = vmatpush1.msra.mxu0 0.0
      %563 = vmatprep.subr.mxu0 0.0
      %564 = vmatpush1.msra.mxu0 0.0
      %565 = vmatprep.subr.mxu0 0.0
      %566 = vmatpush1.msra.mxu0 0.0
      %567 = vmatprep.subr.mxu0 0.0
      %568 = vmatpush1.msra.mxu0 0.0
      %569 = vmatprep.subr.mxu0 0.0
      %570 = vmatpush1.msra.mxu0 0.0
      %571 = vmatprep.subr.mxu0 0.0
      %572 = vmatpush1.msra.mxu0 0.0
      %573 = vmatprep.subr.mxu0 0.0
      %574 = vmatpush1.msra.mxu0 0.0
      %575 = vmatprep.subr.mxu0 0.0
      %576 = vmatpush1.msra.mxu0 0.0
      %577 = vmatprep.subr.mxu0 0.0
      %578 = vmatpush1.msra.mxu0 0.0
      %579 = vmatprep.subr.mxu0 0.0
      %580 = vmatpush1.msra.mxu0 0.0
      %581 = vmatprep.subr.mxu0 0.0
      %582 = vmatpush1.msra.mxu0 0.0
      %583 = vmatprep.subr.mxu0 0.0
      %584 = vmatpush1.msra.mxu0 0.0
      %585 = vmatprep.subr.mxu0 0.0
      %586 = vmatpush1.msra.mxu0 0.0
      %587 = vmatprep.subr.mxu0 0.0
      %588 = vmatpush1.msra.mxu0 0.0
      %589 = vmatprep.subr.mxu0 0.0
      %590 = vmatpush1.msra.mxu0 0.0
      %591 = vmatprep.subr.mxu0 0.0
      %592 = vmatpush1.msra.mxu0 0.0
      %593 = vmatprep.mubr.f32.mxu0 0.0
      %594 = vmatmul.mubr.f32.gmra.mrb[0].mxu0 %v523
      %v595 = vpop.f32.mrb[0].mxu0
      %v596 = vadd.f32 %v506, %v595
      %v597 = vpop.f32.mrb[0].mxu0
      %v598 = vadd.f32 %v508, %v597
      %599 = vdwg.mxu0
      %v600 = vld [vmem:[#allocation2] sm:$0x77]
      %v601 = vld [vmem:[#allocation2 + $0x8] sm:$0x7]
      %s602 = scalar_lea.vmem %s5, 4
      %v603 = vld [vmem:[%s602] sm:$0x3]
      %v605 = vlaneseq
      %v606 = vshrl.u32 %v605, 7
      %v607 = vsub.s32 0, %v606
      %v608 = vrot.slane %v603, %v607
      %v609 = vlaneseq
      %v610 = vshrl.u32 %v609, 7
      %v611 = vsub.s32 1, %v610
      %v612 = vrot.slane %v603, %v611
      %v613 = vcombine.low %v608, %v612
      %614 = vrot.lane.b32.xlu0 %v613, 113
      %v615 = vpop.permute.xlu0 %614
      %v616 = vrot.slane %v615, 4
      %vm617 = vcmask 924672
      %v618 = vsel %vm617, %v616, %v615
      %v621 = vmul.f32 %v600, %v618
      %v622 = vmul.f32 %v601, %v616
      %s623 = scalar_lea.vmem %s3, 8
      %v624 = vld [vmem:[%s623] sm:$0x7]
      %v627 = vcombine.high %v621, %v621
      %628 = vrot.lane.b32.xlu0 %v621, 15
      %v629 = vpop.permute.xlu0 %628
      %630 = vrot.lane.b32.xlu0 %v627, 15
      %v631 = vpop.permute.xlu0 %630
      %632 = vrot.lane.b32.xlu0 %v622, 15
      %v633 = vpop.permute.xlu0 %632
      %vm634 = vcmask 121856
      %v635 = vsel %vm634, %v629, %v631
      %v636 = vsel %vm634, %v631, %v633
      %v638 = vsel %vm430, %v624, 0
      %v640 = vsel %vm434, %v635, 0
      %v642 = vsel %vm434, %v636, 0
      %644 = vmatprep.subr.mxu0 %v642
      %645 = vmatpush1.msra.mxu0 %v640
      %646 = vmatprep.subr.mxu0 0.0
      %647 = vmatpush1.msra.mxu0 0.0
      %648 = vmatprep.subr.mxu0 0.0
      %649 = vmatpush1.msra.mxu0 0.0
      %650 = vmatprep.subr.mxu0 0.0
      %651 = vmatpush1.msra.mxu0 0.0
      %652 = vmatprep.subr.mxu0 0.0
      %653 = vmatpush1.msra.mxu0 0.0
      %654 = vmatprep.subr.mxu0 0.0
      %655 = vmatpush1.msra.mxu0 0.0
      %656 = vmatprep.subr.mxu0 0.0
      %657 = vmatpush1.msra.mxu0 0.0
      %658 = vmatprep.subr.mxu0 0.0
      %659 = vmatpush1.msra.mxu0 0.0
      %660 = vmatprep.subr.mxu0 0.0
      %661 = vmatpush1.msra.mxu0 0.0
      %662 = vmatprep.subr.mxu0 0.0
      %663 = vmatpush1.msra.mxu0 0.0
      %664 = vmatprep.subr.mxu0 0.0
      %665 = vmatpush1.msra.mxu0 0.0
      %666 = vmatprep.subr.mxu0 0.0
      %667 = vmatpush1.msra.mxu0 0.0
      %668 = vmatprep.subr.mxu0 0.0
      %669 = vmatpush1.msra.mxu0 0.0
      %670 = vmatprep.subr.mxu0 0.0
      %671 = vmatpush1.msra.mxu0 0.0
      %672 = vmatprep.subr.mxu0 0.0
      %673 = vmatpush1.msra.mxu0 0.0
      %674 = vmatprep.subr.mxu0 0.0
      %675 = vmatpush1.msra.mxu0 0.0
      %676 = vmatprep.subr.mxu0 0.0
      %677 = vmatpush1.msra.mxu0 0.0
      %678 = vmatprep.subr.mxu0 0.0
      %679 = vmatpush1.msra.mxu0 0.0
      %680 = vmatprep.subr.mxu0 0.0
      %681 = vmatpush1.msra.mxu0 0.0
      %682 = vmatprep.subr.mxu0 0.0
      %683 = vmatpush1.msra.mxu0 0.0
      %684 = vmatprep.subr.mxu0 0.0
      %685 = vmatpush1.msra.mxu0 0.0
      %686 = vmatprep.subr.mxu0 0.0
      %687 = vmatpush1.msra.mxu0 0.0
      %688 = vmatprep.subr.mxu0 0.0
      %689 = vmatpush1.msra.mxu0 0.0
      %690 = vmatprep.subr.mxu0 0.0
      %691 = vmatpush1.msra.mxu0 0.0
      %692 = vmatprep.subr.mxu0 0.0
      %693 = vmatpush1.msra.mxu0 0.0
      %694 = vmatprep.subr.mxu0 0.0
      %695 = vmatpush1.msra.mxu0 0.0
      %696 = vmatprep.subr.mxu0 0.0
      %697 = vmatpush1.msra.mxu0 0.0
      %698 = vmatprep.subr.mxu0 0.0
      %699 = vmatpush1.msra.mxu0 0.0
      %700 = vmatprep.subr.mxu0 0.0
      %701 = vmatpush1.msra.mxu0 0.0
      %702 = vmatprep.subr.mxu0 0.0
      %703 = vmatpush1.msra.mxu0 0.0
      %704 = vmatprep.subr.mxu0 0.0
      %705 = vmatpush1.msra.mxu0 0.0
      %706 = vmatprep.subr.mxu0 0.0
      %707 = vmatpush1.msra.mxu0 0.0
      %708 = vmatprep.mubr.f32.mxu0 0.0
      %709 = vmatmul.mubr.f32.gmra.mrb[0].mxu0 %v638
      %v710 = vpop.f32.mrb[0].mxu0
      %v711 = vadd.f32 0.0, %v710
      %v712 = vpop.f32.mrb[0].mxu0
      %v713 = vadd.f32 0.0, %v712
      %714 = vdwg.mxu0
      %v715 = vadd.f32 %v596, %v711
      %v716 = vadd.f32 %v598, %v713
      %v717 = vld [vmem:[#allocation2] sm:$0x77]
      %v718 = vld [vmem:[#allocation2 + $0x8] sm:$0x7]
      %s719 = scalar_lea.vmem %s5, 6
      %v720 = vld [vmem:[%s719] sm:$0x3]
      %v722 = vlaneseq
      %v723 = vshrl.u32 %v722, 7
      %v724 = vsub.s32 0, %v723
      %v725 = vrot.slane %v720, %v724
      %v726 = vlaneseq
      %v727 = vshrl.u32 %v726, 7
      %v728 = vsub.s32 1, %v727
      %v729 = vrot.slane %v720, %v728
      %v730 = vcombine.low %v725, %v729
      %731 = vrot.lane.b32.xlu0 %v730, 127
      %v732 = vpop.permute.xlu0 %731
      %v733 = vrot.slane %v732, 4
      %vm734 = vcmask 1039360
      %v735 = vsel %vm734, %v733, %v732
      %v738 = vmul.f32 %v717, %v735
      %v739 = vmul.f32 %v718, %v733
      %s740 = scalar_lea.vmem %s3, 12
      %v741 = vld [vmem:[%s740] sm:$0x7]
      %v744 = vcombine.high %v738, %v738
      %745 = vrot.lane.b32.xlu0 %v738, 1
      %v746 = vpop.permute.xlu0 %745
      %747 = vrot.lane.b32.xlu0 %v744, 1
      %v748 = vpop.permute.xlu0 %747
      %749 = vrot.lane.b32.xlu0 %v739, 1
      %v750 = vpop.permute.xlu0 %749
      %vm751 = vcmask 7168
      %v752 = vsel %vm751, %v746, %v748
      %v753 = vsel %vm751, %v748, %v750
      %v755 = vsel %vm430, %v741, 0
      %v757 = vsel %vm434, %v752, 0
      %v759 = vsel %vm434, %v753, 0
      %761 = vmatprep.subr.mxu0 %v759
      %762 = vmatpush1.msra.mxu0 %v757
      %763 = vmatprep.subr.mxu0 0.0
      %764 = vmatpush1.msra.mxu0 0.0
      %765 = vmatprep.subr.mxu0 0.0
      %766 = vmatpush1.msra.mxu0 0.0
      %767 = vmatprep.subr.mxu0 0.0
      %768 = vmatpush1.msra.mxu0 0.0
      %769 = vmatprep.subr.mxu0 0.0
      %770 = vmatpush1.msra.mxu0 0.0
      %771 = vmatprep.subr.mxu0 0.0
      %772 = vmatpush1.msra.mxu0 0.0
      %773 = vmatprep.subr.mxu0 0.0
      %774 = vmatpush1.msra.mxu0 0.0
      %775 = vmatprep.subr.mxu0 0.0
      %776 = vmatpush1.msra.mxu0 0.0
      %777 = vmatprep.subr.mxu0 0.0
      %778 = vmatpush1.msra.mxu0 0.0
      %779 = vmatprep.subr.mxu0 0.0
      %780 = vmatpush1.msra.mxu0 0.0
      %781 = vmatprep.subr.mxu0 0.0
      %782 = vmatpush1.msra.mxu0 0.0
      %783 = vmatprep.subr.mxu0 0.0
      %784 = vmatpush1.msra.mxu0 0.0
      %785 = vmatprep.subr.mxu0 0.0
      %786 = vmatpush1.msra.mxu0 0.0
      %787 = vmatprep.subr.mxu0 0.0
      %788 = vmatpush1.msra.mxu0 0.0
      %789 = vmatprep.subr.mxu0 0.0
      %790 = vmatpush1.msra.mxu0 0.0
      %791 = vmatprep.subr.mxu0 0.0
      %792 = vmatpush1.msra.mxu0 0.0
      %793 = vmatprep.subr.mxu0 0.0
      %794 = vmatpush1.msra.mxu0 0.0
      %795 = vmatprep.subr.mxu0 0.0
      %796 = vmatpush1.msra.mxu0 0.0
      %797 = vmatprep.subr.mxu0 0.0
      %798 = vmatpush1.msra.mxu0 0.0
      %799 = vmatprep.subr.mxu0 0.0
      %800 = vmatpush1.msra.mxu0 0.0
      %801 = vmatprep.subr.mxu0 0.0
      %802 = vmatpush1.msra.mxu0 0.0
      %803 = vmatprep.subr.mxu0 0.0
      %804 = vmatpush1.msra.mxu0 0.0
      %805 = vmatprep.subr.mxu0 0.0
      %806 = vmatpush1.msra.mxu0 0.0
      %807 = vmatprep.subr.mxu0 0.0
      %808 = vmatpush1.msra.mxu0 0.0
      %809 = vmatprep.subr.mxu0 0.0
      %810 = vmatpush1.msra.mxu0 0.0
      %811 = vmatprep.subr.mxu0 0.0
      %812 = vmatpush1.msra.mxu0 0.0
      %813 = vmatprep.subr.mxu0 0.0
      %814 = vmatpush1.msra.mxu0 0.0
      %815 = vmatprep.subr.mxu0 0.0
      %816 = vmatpush1.msra.mxu0 0.0
      %817 = vmatprep.subr.mxu0 0.0
      %818 = vmatpush1.msra.mxu0 0.0
      %819 = vmatprep.subr.mxu0 0.0
      %820 = vmatpush1.msra.mxu0 0.0
      %821 = vmatprep.subr.mxu0 0.0
      %822 = vmatpush1.msra.mxu0 0.0
      %823 = vmatprep.subr.mxu0 0.0
      %824 = vmatpush1.msra.mxu0 0.0
      %825 = vmatprep.mubr.f32.mxu0 0.0
      %826 = vmatmul.mubr.f32.gmra.mrb[0].mxu0 %v755
      %v827 = vpop.f32.mrb[0].mxu0
      %v828 = vadd.f32 0.0, %v827
      %v829 = vpop.f32.mrb[0].mxu0
      %v830 = vadd.f32 0.0, %v829
      %831 = vdwg.mxu0
      %v832 = vadd.f32 %v715, %v828
      %v833 = vadd.f32 %v716, %v830
      %s834 = scalar_lea.vmem %s3, 16
      %v835 = vld [vmem:[%s834] sm:$0x7]
      %v837 = vsel %vm430, %v835, 0
      %v839 = vsel %vm434, %v361, 0
      %v841 = vsel %vm434, %v363, 0
      %843 = vmatprep.subr.mxu0 %v841
      %844 = vmatpush1.msra.mxu0 %v839
      %845 = vmatprep.subr.mxu0 0.0
      %846 = vmatpush1.msra.mxu0 0.0
      %847 = vmatprep.subr.mxu0 0.0
      %848 = vmatpush1.msra.mxu0 0.0
      %849 = vmatprep.subr.mxu0 0.0
      %850 = vmatpush1.msra.mxu0 0.0
      %851 = vmatprep.subr.mxu0 0.0
      %852 = vmatpush1.msra.mxu0 0.0
      %853 = vmatprep.subr.mxu0 0.0
      %854 = vmatpush1.msra.mxu0 0.0
      %855 = vmatprep.subr.mxu0 0.0
      %856 = vmatpush1.msra.mxu0 0.0
      %857 = vmatprep.subr.mxu0 0.0
      %858 = vmatpush1.msra.mxu0 0.0
      %859 = vmatprep.subr.mxu0 0.0
      %860 = vmatpush1.msra.mxu0 0.0
      %861 = vmatprep.subr.mxu0 0.0
      %862 = vmatpush1.msra.mxu0 0.0
      %863 = vmatprep.subr.mxu0 0.0
      %864 = vmatpush1.msra.mxu0 0.0
      %865 = vmatprep.subr.mxu0 0.0
      %866 = vmatpush1.msra.mxu0 0.0
      %867 = vmatprep.subr.mxu0 0.0
      %868 = vmatpush1.msra.mxu0 0.0
      %869 = vmatprep.subr.mxu0 0.0
      %870 = vmatpush1.msra.mxu0 0.0
      %871 = vmatprep.subr.mxu0 0.0
      %872 = vmatpush1.msra.mxu0 0.0
      %873 = vmatprep.subr.mxu0 0.0
      %874 = vmatpush1.msra.mxu0 0.0
      %875 = vmatprep.subr.mxu0 0.0
      %876 = vmatpush1.msra.mxu0 0.0
      %877 = vmatprep.subr.mxu0 0.0
      %878 = vmatpush1.msra.mxu0 0.0
      %879 = vmatprep.subr.mxu0 0.0
      %880 = vmatpush1.msra.mxu0 0.0
      %881 = vmatprep.subr.mxu0 0.0
      %882 = vmatpush1.msra.mxu0 0.0
      %883 = vmatprep.subr.mxu0 0.0
      %884 = vmatpush1.msra.mxu0 0.0
      %885 = vmatprep.subr.mxu0 0.0
      %886 = vmatpush1.msra.mxu0 0.0
      %887 = vmatprep.subr.mxu0 0.0
      %888 = vmatpush1.msra.mxu0 0.0
      %889 = vmatprep.subr.mxu0 0.0
      %890 = vmatpush1.msra.mxu0 0.0
      %891 = vmatprep.subr.mxu0 0.0
      %892 = vmatpush1.msra.mxu0 0.0
      %893 = vmatprep.subr.mxu0 0.0
      %894 = vmatpush1.msra.mxu0 0.0
      %895 = vmatprep.subr.mxu0 0.0
      %896 = vmatpush1.msra.mxu0 0.0
      %897 = vmatprep.subr.mxu0 0.0
      %898 = vmatpush1.msra.mxu0 0.0
      %899 = vmatprep.subr.mxu0 0.0
      %900 = vmatpush1.msra.mxu0 0.0
      %901 = vmatprep.subr.mxu0 0.0
      %902 = vmatpush1.msra.mxu0 0.0
      %903 = vmatprep.subr.mxu0 0.0
      %904 = vmatpush1.msra.mxu0 0.0
      %905 = vmatprep.subr.mxu0 0.0
      %906 = vmatpush1.msra.mxu0 0.0
      %907 = vmatprep.mubr.f32.mxu0 0.0
      %908 = vmatmul.mubr.f32.gmra.mrb[0].mxu0 %v837
      %v909 = vpop.f32.mrb[0].mxu0
      %v910 = vadd.f32 0.0, %v909
      %v911 = vpop.f32.mrb[0].mxu0
      %v912 = vadd.f32 0.0, %v911
      %913 = vdwg.mxu0
      %v914 = vadd.f32 %v832, %v910
      %v915 = vadd.f32 %v833, %v912
      %v916 = vld [vmem:[#allocation2 + $0x4] sm:$0x77]
      %v917 = vld [vmem:[#allocation2 + $0xc] sm:$0x7]
      %s918 = scalar_lea.vmem %s5, 10
      %v919 = vld [vmem:[%s918] sm:$0x3]
      %v921 = vlaneseq
      %v922 = vshrl.u32 %v921, 7
      %v923 = vsub.s32 0, %v922
      %v924 = vrot.slane %v919, %v923
      %v925 = vlaneseq
      %v926 = vshrl.u32 %v925, 7
      %v927 = vsub.s32 1, %v926
      %v928 = vrot.slane %v919, %v927
      %v929 = vcombine.low %v924, %v928
      %930 = vrot.lane.b32.xlu0 %v929, 1
      %v931 = vpop.permute.xlu0 %930
      %v932 = vrot.slane %v931, 4
      %v933 = vsel %vm751, %v932, %v931
      %v936 = vmul.f32 %v916, %v933
      %v937 = vmul.f32 %v917, %v932
      %s938 = scalar_lea.vmem %s3, 20
      %v939 = vld [vmem:[%s938] sm:$0x7]
      %v942 = vcombine.high %v936, %v936
      %943 = vrot.lane.b32.xlu0 %v936, 127
      %v944 = vpop.permute.xlu0 %943
      %945 = vrot.lane.b32.xlu0 %v942, 127
      %v946 = vpop.permute.xlu0 %945
      %947 = vrot.lane.b32.xlu0 %v937, 127
      %v948 = vpop.permute.xlu0 %947
      %v949 = vsel %vm734, %v944, %v946
      %v950 = vsel %vm734, %v946, %v948
      %v952 = vsel %vm430, %v939, 0
      %v954 = vsel %vm434, %v949, 0
      %v956 = vsel %vm434, %v950, 0
      %958 = vmatprep.subr.mxu0 %v956
      %959 = vmatpush1.msra.mxu0 %v954
      %960 = vmatprep.subr.mxu0 0.0
      %961 = vmatpush1.msra.mxu0 0.0
      %962 = vmatprep.subr.mxu0 0.0
      %963 = vmatpush1.msra.mxu0 0.0
      %964 = vmatprep.subr.mxu0 0.0
      %965 = vmatpush1.msra.mxu0 0.0
      %966 = vmatprep.subr.mxu0 0.0
      %967 = vmatpush1.msra.mxu0 0.0
      %968 = vmatprep.subr.mxu0 0.0
      %969 = vmatpush1.msra.mxu0 0.0
      %970 = vmatprep.subr.mxu0 0.0
      %971 = vmatpush1.msra.mxu0 0.0
      %972 = vmatprep.subr.mxu0 0.0
      %973 = vmatpush1.msra.mxu0 0.0
      %974 = vmatprep.subr.mxu0 0.0
      %975 = vmatpush1.msra.mxu0 0.0
      %976 = vmatprep.subr.mxu0 0.0
      %977 = vmatpush1.msra.mxu0 0.0
      %978 = vmatprep.subr.mxu0 0.0
      %979 = vmatpush1.msra.mxu0 0.0
      %980 = vmatprep.subr.mxu0 0.0
      %981 = vmatpush1.msra.mxu0 0.0
      %982 = vmatprep.subr.mxu0 0.0
      %983 = vmatpush1.msra.mxu0 0.0
      %984 = vmatprep.subr.mxu0 0.0
      %985 = vmatpush1.msra.mxu0 0.0
      %986 = vmatprep.subr.mxu0 0.0
      %987 = vmatpush1.msra.mxu0 0.0
      %988 = vmatprep.subr.mxu0 0.0
      %989 = vmatpush1.msra.mxu0 0.0
      %990 = vmatprep.subr.mxu0 0.0
      %991 = vmatpush1.msra.mxu0 0.0
      %992 = vmatprep.subr.mxu0 0.0
      %993 = vmatpush1.msra.mxu0 0.0
      %994 = vmatprep.subr.mxu0 0.0
      %995 = vmatpush1.msra.mxu0 0.0
      %996 = vmatprep.subr.mxu0 0.0
      %997 = vmatpush1.msra.mxu0 0.0
      %998 = vmatprep.subr.mxu0 0.0
      %999 = vmatpush1.msra.mxu0 0.0
      %1000 = vmatprep.subr.mxu0 0.0
      %1001 = vmatpush1.msra.mxu0 0.0
      %1002 = vmatprep.subr.mxu0 0.0
      %1003 = vmatpush1.msra.mxu0 0.0
      %1004 = vmatprep.subr.mxu0 0.0
      %1005 = vmatpush1.msra.mxu0 0.0
      %1006 = vmatprep.subr.mxu0 0.0
      %1007 = vmatpush1.msra.mxu0 0.0
      %1008 = vmatprep.subr.mxu0 0.0
      %1009 = vmatpush1.msra.mxu0 0.0
      %1010 = vmatprep.subr.mxu0 0.0
      %1011 = vmatpush1.msra.mxu0 0.0
      %1012 = vmatprep.subr.mxu0 0.0
      %1013 = vmatpush1.msra.mxu0 0.0
      %1014 = vmatprep.subr.mxu0 0.0
      %1015 = vmatpush1.msra.mxu0 0.0
      %1016 = vmatprep.subr.mxu0 0.0
      %1017 = vmatpush1.msra.mxu0 0.0
      %1018 = vmatprep.subr.mxu0 0.0
      %1019 = vmatpush1.msra.mxu0 0.0
      %1020 = vmatprep.subr.mxu0 0.0
      %1021 = vmatpush1.msra.mxu0 0.0
      %1022 = vmatprep.mubr.f32.mxu0 0.0
      %1023 = vmatmul.mubr.f32.gmra.mrb[0].mxu0 %v952
      %v1024 = vpop.f32.mrb[0].mxu0
      %v1025 = vadd.f32 0.0, %v1024
      %v1026 = vpop.f32.mrb[0].mxu0
      %v1027 = vadd.f32 0.0, %v1026
      %1028 = vdwg.mxu0
      %v1029 = vadd.f32 %v914, %v1025
      %v1030 = vadd.f32 %v915, %v1027
      %v1031 = vld [vmem:[#allocation2 + $0x4] sm:$0x77]
      %v1032 = vld [vmem:[#allocation2 + $0xc] sm:$0x7]
      %s1033 = scalar_lea.vmem %s5, 12
      %v1034 = vld [vmem:[%s1033] sm:$0x3]
      %v1036 = vlaneseq
      %v1037 = vshrl.u32 %v1036, 7
      %v1038 = vsub.s32 0, %v1037
      %v1039 = vrot.slane %v1034, %v1038
      %v1040 = vlaneseq
      %v1041 = vshrl.u32 %v1040, 7
      %v1042 = vsub.s32 1, %v1041
      %v1043 = vrot.slane %v1034, %v1042
      %v1044 = vcombine.low %v1039, %v1043
      %1045 = vrot.lane.b32.xlu0 %v1044, 15
      %v1046 = vpop.permute.xlu0 %1045
      %v1047 = vrot.slane %v1046, 4
      %v1048 = vsel %vm634, %v1047, %v1046
      %v1051 = vmul.f32 %v1031, %v1048
      %v1052 = vmul.f32 %v1032, %v1047
      %s1053 = scalar_lea.vmem %s3, 24
      %v1054 = vld [vmem:[%s1053] sm:$0x7]
      %v1057 = vcombine.high %v1051, %v1051
      %1058 = vrot.lane.b32.xlu0 %v1051, 113
      %v1059 = vpop.permute.xlu0 %1058
      %1060 = vrot.lane.b32.xlu0 %v1057, 113
      %v1061 = vpop.permute.xlu0 %1060
      %1062 = vrot.lane.b32.xlu0 %v1052, 113
      %v1063 = vpop.permute.xlu0 %1062
      %v1064 = vsel %vm617, %v1059, %v1061
      %v1065 = vsel %vm617, %v1061, %v1063
      %v1067 = vsel %vm430, %v1054, 0
      %v1069 = vsel %vm434, %v1064, 0
      %v1071 = vsel %vm434, %v1065, 0
      %1073 = vmatprep.subr.mxu0 %v1071
      %1074 = vmatpush1.msra.mxu0 %v1069
      %1075 = vmatprep.subr.mxu0 0.0
      %1076 = vmatpush1.msra.mxu0 0.0
      %1077 = vmatprep.subr.mxu0 0.0
      %1078 = vmatpush1.msra.mxu0 0.0
      %1079 = vmatprep.subr.mxu0 0.0
      %1080 = vmatpush1.msra.mxu0 0.0
      %1081 = vmatprep.subr.mxu0 0.0
      %1082 = vmatpush1.msra.mxu0 0.0
      %1083 = vmatprep.subr.mxu0 0.0
      %1084 = vmatpush1.msra.mxu0 0.0
      %1085 = vmatprep.subr.mxu0 0.0
      %1086 = vmatpush1.msra.mxu0 0.0
      %1087 = vmatprep.subr.mxu0 0.0
      %1088 = vmatpush1.msra.mxu0 0.0
      %1089 = vmatprep.subr.mxu0 0.0
      %1090 = vmatpush1.msra.mxu0 0.0
      %1091 = vmatprep.subr.mxu0 0.0
      %1092 = vmatpush1.msra.mxu0 0.0
      %1093 = vmatprep.subr.mxu0 0.0
      %1094 = vmatpush1.msra.mxu0 0.0
      %1095 = vmatprep.subr.mxu0 0.0
      %1096 = vmatpush1.msra.mxu0 0.0
      %1097 = vmatprep.subr.mxu0 0.0
      %1098 = vmatpush1.msra.mxu0 0.0
      %1099 = vmatprep.subr.mxu0 0.0
      %1100 = vmatpush1.msra.mxu0 0.0
      %1101 = vmatprep.subr.mxu0 0.0
      %1102 = vmatpush1.msra.mxu0 0.0
      %1103 = vmatprep.subr.mxu0 0.0
      %1104 = vmatpush1.msra.mxu0 0.0
      %1105 = vmatprep.subr.mxu0 0.0
      %1106 = vmatpush1.msra.mxu0 0.0
      %1107 = vmatprep.subr.mxu0 0.0
      %1108 = vmatpush1.msra.mxu0 0.0
      %1109 = vmatprep.subr.mxu0 0.0
      %1110 = vmatpush1.msra.mxu0 0.0
      %1111 = vmatprep.subr.mxu0 0.0
      %1112 = vmatpush1.msra.mxu0 0.0
      %1113 = vmatprep.subr.mxu0 0.0
      %1114 = vmatpush1.msra.mxu0 0.0
      %1115 = vmatprep.subr.mxu0 0.0
      %1116 = vmatpush1.msra.mxu0 0.0
      %1117 = vmatprep.subr.mxu0 0.0
      %1118 = vmatpush1.msra.mxu0 0.0
      %1119 = vmatprep.subr.mxu0 0.0
      %1120 = vmatpush1.msra.mxu0 0.0
      %1121 = vmatprep.subr.mxu0 0.0
      %1122 = vmatpush1.msra.mxu0 0.0
      %1123 = vmatprep.subr.mxu0 0.0
      %1124 = vmatpush1.msra.mxu0 0.0
      %1125 = vmatprep.subr.mxu0 0.0
      %1126 = vmatpush1.msra.mxu0 0.0
      %1127 = vmatprep.subr.mxu0 0.0
      %1128 = vmatpush1.msra.mxu0 0.0
      %1129 = vmatprep.subr.mxu0 0.0
      %1130 = vmatpush1.msra.mxu0 0.0
      %1131 = vmatprep.subr.mxu0 0.0
      %1132 = vmatpush1.msra.mxu0 0.0
      %1133 = vmatprep.subr.mxu0 0.0
      %1134 = vmatpush1.msra.mxu0 0.0
      %1135 = vmatprep.subr.mxu0 0.0
      %1136 = vmatpush1.msra.mxu0 0.0
      %1137 = vmatprep.mubr.f32.mxu0 0.0
      %1138 = vmatmul.mubr.f32.gmra.mrb[0].mxu0 %v1067
      %v1139 = vpop.f32.mrb[0].mxu0
      %v1140 = vadd.f32 0.0, %v1139
      %v1141 = vpop.f32.mrb[0].mxu0
      %v1142 = vadd.f32 0.0, %v1141
      %1143 = vdwg.mxu0
      %v1144 = vadd.f32 %v1029, %v1140
      %v1145 = vadd.f32 %v1030, %v1142
      %v1146 = vld [vmem:[#allocation2 + $0x4] sm:$0x77]
      %v1147 = vld [vmem:[#allocation2 + $0xc] sm:$0x7]
      %s1148 = scalar_lea.vmem %s5, 14
      %v1149 = vld [vmem:[%s1148] sm:$0x3]
      %v1151 = vlaneseq
      %v1152 = vshrl.u32 %v1151, 7
      %v1153 = vsub.s32 0, %v1152
      %v1154 = vrot.slane %v1149, %v1153
      %v1155 = vlaneseq
      %v1156 = vshrl.u32 %v1155, 7
      %v1157 = vsub.s32 1, %v1156
      %v1158 = vrot.slane %v1149, %v1157
      %v1159 = vcombine.low %v1154, %v1158
      %1160 = vrot.lane.b32.xlu0 %v1159, 16
      %v1161 = vpop.permute.xlu0 %1160
      %v1162 = vrot.slane %v1161, 4
      %v1163 = vsel %vm427, %v1162, %v1161
      %v1166 = vmul.f32 %v1146, %v1163
      %v1167 = vmul.f32 %v1147, %v1162
      %s1168 = scalar_lea.vmem %s3, 28
      %v1169 = vld [vmem:[%s1168] sm:$0x7]
      %v1172 = vcombine.high %v1166, %v1166
      %1173 = vrot.lane.b32.xlu0 %v1166, 112
      %v1174 = vpop.permute.xlu0 %1173
      %1175 = vrot.lane.b32.xlu0 %v1172, 112
      %v1176 = vpop.permute.xlu0 %1175
      %1177 = vrot.lane.b32.xlu0 %v1167, 112
      %v1178 = vpop.permute.xlu0 %1177
      %v1179 = vsel %vm410, %v1174, %v1176
      %v1180 = vsel %vm410, %v1176, %v1178
      %v1182 = vsel %vm430, %v1169, 0
      %v1184 = vsel %vm434, %v1179, 0
      %v1186 = vsel %vm434, %v1180, 0
      %1188 = vmatprep.subr.mxu0 %v1186
      %1189 = vmatpush1.msra.mxu0 %v1184
      %1190 = vmatprep.subr.mxu0 0.0
      %1191 = vmatpush1.msra.mxu0 0.0
      %1192 = vmatprep.subr.mxu0 0.0
      %1193 = vmatpush1.msra.mxu0 0.0
      %1194 = vmatprep.subr.mxu0 0.0
      %1195 = vmatpush1.msra.mxu0 0.0
      %1196 = vmatprep.subr.mxu0 0.0
      %1197 = vmatpush1.msra.mxu0 0.0
      %1198 = vmatprep.subr.mxu0 0.0
      %1199 = vmatpush1.msra.mxu0 0.0
      %1200 = vmatprep.subr.mxu0 0.0
      %1201 = vmatpush1.msra.mxu0 0.0
      %1202 = vmatprep.subr.mxu0 0.0
      %1203 = vmatpush1.msra.mxu0 0.0
      %1204 = vmatprep.subr.mxu0 0.0
      %1205 = vmatpush1.msra.mxu0 0.0
      %1206 = vmatprep.subr.mxu0 0.0
      %1207 = vmatpush1.msra.mxu0 0.0
      %1208 = vmatprep.subr.mxu0 0.0
      %1209 = vmatpush1.msra.mxu0 0.0
      %1210 = vmatprep.subr.mxu0 0.0
      %1211 = vmatpush1.msra.mxu0 0.0
      %1212 = vmatprep.subr.mxu0 0.0
      %1213 = vmatpush1.msra.mxu0 0.0
      %1214 = vmatprep.subr.mxu0 0.0
      %1215 = vmatpush1.msra.mxu0 0.0
      %1216 = vmatprep.subr.mxu0 0.0
      %1217 = vmatpush1.msra.mxu0 0.0
      %1218 = vmatprep.subr.mxu0 0.0
      %1219 = vmatpush1.msra.mxu0 0.0
      %1220 = vmatprep.subr.mxu0 0.0
      %1221 = vmatpush1.msra.mxu0 0.0
      %1222 = vmatprep.subr.mxu0 0.0
      %1223 = vmatpush1.msra.mxu0 0.0
      %1224 = vmatprep.subr.mxu0 0.0
      %1225 = vmatpush1.msra.mxu0 0.0
      %1226 = vmatprep.subr.mxu0 0.0
      %1227 = vmatpush1.msra.mxu0 0.0
      %1228 = vmatprep.subr.mxu0 0.0
      %1229 = vmatpush1.msra.mxu0 0.0
      %1230 = vmatprep.subr.mxu0 0.0
      %1231 = vmatpush1.msra.mxu0 0.0
      %1232 = vmatprep.subr.mxu0 0.0
      %1233 = vmatpush1.msra.mxu0 0.0
      %1234 = vmatprep.subr.mxu0 0.0
      %1235 = vmatpush1.msra.mxu0 0.0
      %1236 = vmatprep.subr.mxu0 0.0
      %1237 = vmatpush1.msra.mxu0 0.0
      %1238 = vmatprep.subr.mxu0 0.0
      %1239 = vmatpush1.msra.mxu0 0.0
      %1240 = vmatprep.subr.mxu0 0.0
      %1241 = vmatpush1.msra.mxu0 0.0
      %1242 = vmatprep.subr.mxu0 0.0
      %1243 = vmatpush1.msra.mxu0 0.0
      %1244 = vmatprep.subr.mxu0 0.0
      %1245 = vmatpush1.msra.mxu0 0.0
      %1246 = vmatprep.subr.mxu0 0.0
      %1247 = vmatpush1.msra.mxu0 0.0
      %1248 = vmatprep.subr.mxu0 0.0
      %1249 = vmatpush1.msra.mxu0 0.0
      %1250 = vmatprep.subr.mxu0 0.0
      %1251 = vmatpush1.msra.mxu0 0.0
      %1252 = vmatprep.mubr.f32.mxu0 0.0
      %1253 = vmatmul.mubr.f32.gmra.mrb[0].mxu0 %v1182
      %v1254 = vpop.f32.mrb[0].mxu0
      %v1255 = vadd.f32 0.0, %v1254
      %v1256 = vpop.f32.mrb[0].mxu0
      %v1257 = vadd.f32 0.0, %v1256
      %1258 = vdwg.mxu0
      %v1259 = vadd.f32 %v1144, %v1255
      %v1260 = vadd.f32 %v1145, %v1257
      %v1261 = vld [vmem:[#allocation2 + $0x4] sm:$0x77]
      %v1262 = vld [vmem:[#allocation2 + $0xc] sm:$0x7]
      %s1263 = scalar_lea.vmem %s5, 16
      %v1264 = vld [vmem:[%s1263] sm:$0x3]
      %v1266 = vlaneseq
      %v1267 = vshrl.u32 %v1266, 7
      %v1268 = vsub.s32 0, %v1267
      %v1269 = vrot.slane %v1264, %v1268
      %v1270 = vlaneseq
      %v1271 = vshrl.u32 %v1270, 7
      %v1272 = vsub.s32 1, %v1271
      %v1273 = vrot.slane %v1264, %v1272
      %v1274 = vcombine.low %v1269, %v1273
      %1275 = vrot.lane.b32.xlu0 %v1274, 17
      %v1276 = vpop.permute.xlu0 %1275
      %v1277 = vrot.slane %v1276, 4
      %v1278 = vsel %vm519, %v1277, %v1276
      %v1281 = vmul.f32 %v1261, %v1278
      %v1282 = vmul.f32 %v1262, %v1277
      %s1283 = scalar_lea.vmem %s3, 32
      %v1284 = vld [vmem:[%s1283] sm:$0x7]
      %v1287 = vcombine.high %v1281, %v1281
      %1288 = vrot.lane.b32.xlu0 %v1281, 111
      %v1289 = vpop.permute.xlu0 %1288
      %1290 = vrot.lane.b32.xlu0 %v1287, 111
      %v1291 = vpop.permute.xlu0 %1290
      %1292 = vrot.lane.b32.xlu0 %v1282, 111
      %v1293 = vpop.permute.xlu0 %1292
      %v1294 = vsel %vm388, %v1289, %v1291
      %v1295 = vsel %vm388, %v1291, %v1293
      %v1297 = vsel %vm430, %v1284, 0
      %v1299 = vsel %vm434, %v1294, 0
      %v1301 = vsel %vm434, %v1295, 0
      %1303 = vmatprep.subr.mxu0 %v1301
      %1304 = vmatpush1.msra.mxu0 %v1299
      %1305 = vmatprep.subr.mxu0 0.0
      %1306 = vmatpush1.msra.mxu0 0.0
      %1307 = vmatprep.subr.mxu0 0.0
      %1308 = vmatpush1.msra.mxu0 0.0
      %1309 = vmatprep.subr.mxu0 0.0
      %1310 = vmatpush1.msra.mxu0 0.0
      %1311 = vmatprep.subr.mxu0 0.0
      %1312 = vmatpush1.msra.mxu0 0.0
      %1313 = vmatprep.subr.mxu0 0.0
      %1314 = vmatpush1.msra.mxu0 0.0
      %1315 = vmatprep.subr.mxu0 0.0
      %1316 = vmatpush1.msra.mxu0 0.0
      %1317 = vmatprep.subr.mxu0 0.0
      %1318 = vmatpush1.msra.mxu0 0.0
      %1319 = vmatprep.subr.mxu0 0.0
      %1320 = vmatpush1.msra.mxu0 0.0
      %1321 = vmatprep.subr.mxu0 0.0
      %1322 = vmatpush1.msra.mxu0 0.0
      %1323 = vmatprep.subr.mxu0 0.0
      %1324 = vmatpush1.msra.mxu0 0.0
      %1325 = vmatprep.subr.mxu0 0.0
      %1326 = vmatpush1.msra.mxu0 0.0
      %1327 = vmatprep.subr.mxu0 0.0
      %1328 = vmatpush1.msra.mxu0 0.0
      %1329 = vmatprep.subr.mxu0 0.0
      %1330 = vmatpush1.msra.mxu0 0.0
      %1331 = vmatprep.subr.mxu0 0.0
      %1332 = vmatpush1.msra.mxu0 0.0
      %1333 = vmatprep.subr.mxu0 0.0
      %1334 = vmatpush1.msra.mxu0 0.0
      %1335 = vmatprep.subr.mxu0 0.0
      %1336 = vmatpush1.msra.mxu0 0.0
      %1337 = vmatprep.subr.mxu0 0.0
      %1338 = vmatpush1.msra.mxu0 0.0
      %1339 = vmatprep.subr.mxu0 0.0
      %1340 = vmatpush1.msra.mxu0 0.0
      %1341 = vmatprep.subr.mxu0 0.0
      %1342 = vmatpush1.msra.mxu0 0.0
      %1343 = vmatprep.subr.mxu0 0.0
      %1344 = vmatpush1.msra.mxu0 0.0
      %1345 = vmatprep.subr.mxu0 0.0
      %1346 = vmatpush1.msra.mxu0 0.0
      %1347 = vmatprep.subr.mxu0 0.0
      %1348 = vmatpush1.msra.mxu0 0.0
      %1349 = vmatprep.subr.mxu0 0.0
      %1350 = vmatpush1.msra.mxu0 0.0
      %1351 = vmatprep.subr.mxu0 0.0
      %1352 = vmatpush1.msra.mxu0 0.0
      %1353 = vmatprep.subr.mxu0 0.0
      %1354 = vmatpush1.msra.mxu0 0.0
      %1355 = vmatprep.subr.mxu0 0.0
      %1356 = vmatpush1.msra.mxu0 0.0
      %1357 = vmatprep.subr.mxu0 0.0
      %1358 = vmatpush1.msra.mxu0 0.0
      %1359 = vmatprep.subr.mxu0 0.0
      %1360 = vmatpush1.msra.mxu0 0.0
      %1361 = vmatprep.subr.mxu0 0.0
      %1362 = vmatpush1.msra.mxu0 0.0
      %1363 = vmatprep.subr.mxu0 0.0
      %1364 = vmatpush1.msra.mxu0 0.0
      %1365 = vmatprep.subr.mxu0 0.0
      %1366 = vmatpush1.msra.mxu0 0.0
      %1367 = vmatprep.mubr.f32.mxu0 0.0
      %1368 = vmatmul.mubr.f32.gmra.mrb[0].mxu0 %v1297
      %v1369 = vpop.f32.mrb[0].mxu0
      %v1370 = vadd.f32 0.0, %v1369
      %v1371 = vpop.f32.mrb[0].mxu0
      %v1372 = vadd.f32 0.0, %v1371
      %1373 = vdwg.mxu0
      %v1374 = vadd.f32 %v1259, %v1370
      %v1375 = vadd.f32 %v1260, %v1372
      %v1376 = vld [vmem:[%s4] sm:$0x7]
      %1378 = vset.pattern.permute.xlu0 0
      %1379 = vperm.xlu0 %1378, %v1376
      %v1380 = vpop.permute.xlu0 %1379
      %v1382 = vadd.f32 %v1374, %v1380
      %v1383 = vadd.f32 %v1375, %v1380
      %v1384 = vmax.f32 %v1382, 0.0
      %v1385 = vmax.f32 %v1383, 0.0
      %v1386 = vadd.f32 %v1384, %v361
      %v1387 = vadd.f32 %v1385, %v363
      %v1390 = vcombine.low %v1386, %v1387
      %1392 = vst [vmem:[%s268] sm:$0x77] %v1390
      %p1393 = scmp.lt.s32.totalorder %s17, 1
      %s1394 = scalar_select %p1393, %s17, 1
      %s1395 = smul.addr %s1394, 2
      %s1396 = smul.addr %s1395, 4
      %s1397 = scalar_lea.vmem %s6, %s1396
      // Predicated region
      $region45: #{model_forward.9} parent=43 // pred_check
        %p1398 = pneg %p171
      $region46: #{model_forward.9} parent=43 // pred_check_branch
        %1400 = sbr.rel (%p1398) target = $region48
      $region47: #{model_forward.9} parent=43 // pred_region
        _
      $region48: #{model_forward.9} parent=43 // pred_fallthru
        _
    $region44: #{model_forward.9} parent=5 // pred_fallthru
      _
    %p1401 = scmp.le.s32.totalorder 2, %s12
    // Predicated region
    $region49: #{model_forward.9} parent=5 // pred_check
      %p1402 = pneg %p1401
    $region50: #{model_forward.9} parent=5 // pred_check_branch
      %1404 = sbr.rel (%p1402) target = $region52
    $region51: #{model_forward.9} parent=5 // pred_region
      %s1405 = ssub.s32 %s12, 2
      // Predicated region
      $region53: #{model_forward.9} parent=51 // pred_check
        %p1406 = pneg %p177
      $region54: #{model_forward.9} parent=51 // pred_check_branch
        %1408 = sbr.rel (%p1406) target = $region56
      $region55: #{model_forward.9} parent=51 // pred_region
        %p1409 = scmp.lt.s32.totalorder %s18, 1
        %s1410 = scalar_select %p1409, %s18, 1
        %s1411 = smul.addr %s1410, 2
        %s1412 = smul.addr %s1411, 4
        %s1413 = scalar_lea.vmem %s6, %s1412
      $region56: #{model_forward.9} parent=51 // pred_fallthru
        _
    $region52: #{model_forward.9} parent=5 // pred_fallthru
      _
  $region6: #{model_forward.9} parent=0 // loop_footer
    %s16 = sadd.s32 1, %s12
  $region7: #{model_forward.9} parent=0 // loop_footer_branch
    %11 = sbr.rel target = $region3
  $region8: #{model_forward.9} parent=0 // loop_exit
    _

</llo_original>
